<compile_context>
chip_gen: v7x
topology: tpu7x:2x2x1
jax: 0.10.0
libtpu: 0.0.40
codegen_flags: <defaults>
</compile_context>

<pallas_src>
import functools

import jax
import jax.numpy as jnp
from jax.experimental import pallas as pl
from jax.experimental.pallas import tpu as pltpu

GROWTH_RATE = 24
DROPOUT_RATE = 0.2
BN_EPS = 1e-5
_LANE = 128


def _round_up(x, m):
    return (x + m - 1) // m * m


def _pick_hw_tile(hw):
    """Largest lane-dense (multiple of 128) spatial tile dividing HW, capped at 2048.
    Falls back to the full image if HW has no such divisor (still legal: full dims)."""
    for t in (2048, 1024, 512, 256, 128):
        if hw % t == 0:
            return t
    return hw


def _vmem_limit_bytes():
    # Generation-aware scoped-VMEM cap (v5e/v6e: 128 MiB, v7x: 64 MiB physical).
    try:
        return int(pltpu.get_tpu_info().vmem_capacity_bytes) * 3 // 4
    except Exception:  # interpret mode / non-TPU backend / unknown chip
        return 48 * 1024 * 1024


_VMEM_LIMIT = _vmem_limit_bytes()


def _cparams(dimension_semantics):
    return pltpu.CompilerParams(dimension_semantics=dimension_semantics,
                                vmem_limit_bytes=_VMEM_LIMIT)


# ---------------------------------------------------------------------------
# kernel 1: 1x1 conv (channel matmul on the MXU) + ReLU + BN1 partial sums
#           computed channel-major (y1t = w1^T @ x) so no NCHW->NHWC pass is needed
# ---------------------------------------------------------------------------
def _conv1_relu_kernel(x_ref, w1t_ref, y1_ref, s1_ref):
    xq = x_ref[0].astype(w1t_ref.dtype)                                  # (C_in, THW)
    y = jnp.dot(w1t_ref[...], xq, preferred_element_type=jnp.float32)    # (CI, THW) f32
    y = jnp.maximum(y, 0.0)                                              # ReLU
    y1_ref[0] = y.astype(y1_ref.dtype)                                   # bf16 HBM store
    # per-tile partial sums (lane reduction -> column vectors) for global BN1 stats
    s1_ref[0, 0, :, 0:1] = jnp.sum(y, axis=1, keepdims=True)
    s1_ref[0, 0, :, 1:2] = jnp.sum(y * y, axis=1, keepdims=True)


# ---------------------------------------------------------------------------
# kernel 2: BN1 affine + 3x3 conv (3 wide-K MXU matmuls) + ReLU + BN2 partials
# ---------------------------------------------------------------------------
def _conv2_relu_kernel(y1_ref, scale1_ref, shift1_ref, w2_ref, y2_ref, s2_ref,
                       *, H, W, growth):
    HW = H * W
    L = (H + 2) * W
    CI = y1_ref.shape[1]
    cdt = w2_ref.dtype
    # BN1 with global batch stats baked into a per-channel scale/shift; transpose the
    # channel-major (CI, HW) tile to MXU row layout (HW, CI), math in f32, quantize once.
    a = jnp.transpose(y1_ref[0].astype(jnp.float32))                     # (HW, CI)
    a = (a * scale1_ref[...] + shift1_ref[...]).astype(cdt)
    # Row padding (conv padding=1): dy taps become sublane-aligned slices when W % 8 == 0.
    zrow = jnp.zeros((W, CI), cdt)
    a_c = jnp.concatenate([zrow, a, zrow], axis=0)                       # (L, CI)
    # Column-shifted copies (dx = -1 / +1) with a cheap (L, 1) border mask broadcast
    # across lanes (no full (L, C) iota).
    zer1 = jnp.zeros((1, CI), cdt)
    zero = jnp.zeros((), cdt)
    col = jax.lax.broadcasted_iota(jnp.int32, (L, 1), 0) % W
    a_l = jnp.where(col > 0, jnp.concatenate([zer1, a_c[:-1]], axis=0), zero)     # kw=0
    a_r = jnp.where(col < W - 1, jnp.concatenate([a_c[1:], zer1], axis=0), zero)  # kw=2
    # Lane-aligned wide operand: 3x3 conv = 3 deep-K (K = 3*CI) MXU matmuls.
    taps = jnp.concatenate([a_l, a_c, a_r], axis=1)                      # (L, 3*CI)
    acc = jnp.zeros((HW, w2_ref.shape[-1]), jnp.float32)
    for kh in range(3):
        acc = acc + jnp.dot(taps[kh * W:kh * W + HW, :], w2_ref[kh],
                            preferred_element_type=jnp.float32)
    y2 = jnp.maximum(acc, 0.0)                                           # (HW, CO); padded lanes == 0
    # per-image partial sums for global BN2 stats (real channels only)
    s2_ref[0, 0:1, :] = jnp.sum(y2, axis=0, keepdims=True)[:, :growth]
    s2_ref[0, 1:2, :] = jnp.sum(y2 * y2, axis=0, keepdims=True)[:, :growth]
    # channel-major, narrow store: only the `growth` real channels reach HBM
    y2_ref[0] = jnp.transpose(y2)[:growth, :].astype(y2_ref.dtype)


# ---------------------------------------------------------------------------
# kernel 3: BN2 affine (global batch stats, dropout 1/(1-p) folded in) + dropout mask
# ---------------------------------------------------------------------------
def _bn2_dropout_kernel(y2_ref, scale2_ref, shift2_ref, *rest, keep_threshold):
    if keep_threshold > 0:
        bits_ref, out_ref = rest
    else:
        (out_ref,) = rest
    z = y2_ref[0].astype(jnp.float32) * scale2_ref[...] + shift2_ref[...]   # (G, THW)
    if keep_threshold > 0:
        # Inverted dropout: 1/(1-p) is already folded into scale2/shift2, only the 0/1
        # keep mask is applied here (single uint32 compare).
        # TODO(synk): on real TPUs pltpu.prng_seed/prng_random_bits would avoid streaming
        # the random bits from HBM, but those primitives have no interpret/CPU lowering,
        # so the bits are generated with jax.random in the wrapper and passed in.
        keep = bits_ref[0] >= jnp.uint32(keep_threshold)
        z = jnp.where(keep, z, 0.0)
    out_ref[0] = z


# ---------------------------------------------------------------------------
# wrapper glue
# ---------------------------------------------------------------------------
def _bn_scale_shift(s_sum, s_sqsum, gamma, beta, count, extra_scale=1.0):
    """Turn global (sum, sumsq) into a per-channel BN scale/shift (tiny XLA op)."""
    mean = s_sum / count
    var = jnp.maximum(s_sqsum / count - mean * mean, 0.0)     # E[x^2] - E[x]^2, clamped
    inv = jax.lax.rsqrt(var + BN_EPS)
    scale = gamma * inv * extra_scale
    shift = (beta - mean * gamma * inv) * extra_scale
    return scale.astype(jnp.float32), shift.astype(jnp.float32)


def bottleneck_block(x_nchw, params, dropout_key=None, *,
                     dropout_rate=DROPOUT_RATE, compute_dtype=jnp.bfloat16):
    """Forward pass of BottleneckBlock (training mode).  x_nchw: (N, C_in, H, W) f32.
    Returns (N, C_in + growth, H, W) f32, i.e. torch.cat([x, out], 1)."""
    N, C_in, H, W = x_nchw.shape
    inter = params["w1"].shape[1]
    growth = params["gamma2"].shape[0]
    HW, M = H * W, N * H * W
    CI = _round_up(inter, _LANE)      # lane-dense intermediate width (zero-padded)
    CO = _round_up(growth, _LANE)     # lane-dense conv2 output width for the MXU
    THW = _pick_hw_tile(HW)
    T = HW // THW
    cdt = compute_dtype

    # Weights / affine params, padded & cast once (tiny XLA ops).  Padded channels carry
    # zero weight and zero gamma/beta, so they stay exactly zero through the pipeline.
    w1t = jnp.pad(params["w1"], ((0, 0), (0, CI - inter))).T.astype(cdt)       # (CI, C_in)
    w2p = jnp.pad(params["w2"],
                  ((0, 0), (0, 0), (0, CI - inter), (0, CO - growth)))         # (3,3,CI,CO)
    w2p = w2p.reshape(3, 3 * CI, CO).astype(cdt)                               # kw-major rows
    g1p = jnp.pad(params["gamma1"], (0, CI - inter))
    b1p = jnp.pad(params["beta1"], (0, CI - inter))

    x_cm = x_nchw.reshape(N, C_in, HW)       # free reshape; no NCHW->NHWC transpose pass

    # ---- kernel 1: conv1 (1x1) + ReLU, channel-major, tiled over (image, HW tile) ---
    y1, s1 = pl.pallas_call(
        _conv1_relu_kernel,
        grid=(N, T),
        in_specs=[pl.BlockSpec((1, C_in, THW), lambda n, t: (n, 0, t)),
                  pl.BlockSpec((CI, C_in), lambda n, t: (0, 0))],
        out_specs=[pl.BlockSpec((1, CI, THW), lambda n, t: (n, 0, t)),
                   pl.BlockSpec((1, 1, CI, 2), lambda n, t: (n, t, 0, 0))],
        out_shape=[jax.ShapeDtypeStruct((N, CI, HW), cdt),
                   jax.ShapeDtypeStruct((N, T, CI, 2), jnp.float32)],
        compiler_params=_cparams(("parallel", "parallel")),
    )(x_cm, w1t)

    r1 = jnp.sum(s1, axis=(0, 1))                                 # (CI, 2)
    scale1, shift1 = _bn_scale_shift(r1[:, 0], r1[:, 1], g1p, b1p, M)
    scale1, shift1 = scale1[None, :], shift1[None, :]             # (1, CI) row vectors

    # ---- kernel 2: BN1 + conv2 (3x3, in-VMEM taps) + ReLU, one image per step -------
    # TODO(synk): for very large H*W the per-image working set (~HW*CI temporaries)
    # should be banded over rows with a 1-row halo to bound VMEM on v7x (64 MiB).
    y2, s2 = pl.pallas_call(
        functools.partial(_conv2_relu_kernel, H=H, W=W, growth=growth),
        grid=(N,),
        in_specs=[pl.BlockSpec((1, CI, HW), lambda n: (n, 0, 0)),
                  pl.BlockSpec((1, CI), lambda n: (0, 0)),
                  pl.BlockSpec((1, CI), lambda n: (0, 0)),
                  pl.BlockSpec((3, 3 * CI, CO), lambda n: (0, 0, 0))],
        out_specs=[pl.BlockSpec((1, growth, HW), lambda n: (n, 0, 0)),
                   pl.BlockSpec((1, 2, growth), lambda n: (n, 0, 0))],
        out_shape=[jax.ShapeDtypeStruct((N, growth, HW), cdt),
                   jax.ShapeDtypeStruct((N, 2, growth), jnp.float32)],
        compiler_params=_cparams(("parallel",)),
    )(y1, scale1, shift1, w2p)

    keep_scale = 1.0 / (1.0 - dropout_rate) if dropout_rate > 0.0 else 1.0
    r2 = jnp.sum(s2, axis=0)                                      # (2, growth)
    scale2, shift2 = _bn_scale_shift(r2[0], r2[1], params["gamma2"], params["beta2"],
                                     M, extra_scale=keep_scale)
    scale2, shift2 = scale2[:, None], shift2[:, None]             # (growth, 1) columns

    # ---- kernel 3: BN2 affine + dropout, narrow channel-major, tiled over (N, T) ----
    thr = min(int(round(float(dropout_rate) * (2.0 ** 32))), 2 ** 32 - 1)
    operands = [y2, scale2, shift2]
    in_specs = [pl.BlockSpec((1, growth, THW), lambda n, t: (n, 0, t)),
                pl.BlockSpec((growth, 1), lambda n, t: (0, 0)),
                pl.BlockSpec((growth, 1), lambda n, t: (0, 0))]
    if thr > 0:
        if dropout_key is None:
            raise ValueError("dropout_key is required when dropout_rate > 0")
        # TODO(synk): distributionally equivalent to torch's dropout, not RNG-bit-identical.
        bits = jax.random.bits(dropout_key, (N, growth, HW), dtype=jnp.uint32)
        operands.append(bits)
        in_specs.append(pl.BlockSpec((1, growth, THW), lambda n, t: (n, 0, t)))
    out_cm = pl.pallas_call(
        functools.partial(_bn2_dropout_kernel, keep_threshold=thr),
        grid=(N, T),
        in_specs=in_specs,
        out_specs=pl.BlockSpec((1, growth, THW), lambda n, t: (n, 0, t)),
        out_shape=jax.ShapeDtypeStruct((N, growth, HW), jnp.float32),
        compiler_params=_cparams(("parallel", "parallel")),
    )(*operands)

    out = out_cm.reshape(N, growth, H, W)     # already NCHW-ordered: no transpose pass
    # TODO(synk): the concat re-copies x through HBM; callers that can consume the two
    # halves separately (DenseNet feature lists) should skip it.
    return jnp.concatenate([x_nchw, out], axis=1)


# ---------------------------------------------------------------------------
# params / reference / self-test
# ---------------------------------------------------------------------------
def init_params(key, input_size, growth_rate=GROWTH_RATE):
    """Deterministic synthetic parameters matching the torch module's shapes."""
    inter = 4 * growth_rate
    k1, k2, k3, k4, k5, k6 = jax.random.split(key, 6)
    # conv1.weight: torch (inter, C_in, 1, 1) -> stored transposed as (C_in, inter)
    w1 = 0.05 * jax.random.normal(k1, (input_size, inter), jnp.float32)
    # conv2.weight: torch (growth, inter, 3, 3) -> stored as (kh, kw, C_in, C_out)
    w2 = 0.05 * jax.random.normal(k2, (3, 3, inter, growth_rate), jnp.float32)
    gamma1 = 1.0 + 0.1 * jax.random.normal(k3, (inter,), jnp.float32)
    beta1 = 0.1 * jax.random.normal(k4, (inter,), jnp.float32)
    gamma2 = 1.0 + 0.1 * jax.random.normal(k5, (growth_rate,), jnp.float32)
    beta2 = 0.1 * jax.random.normal(k6, (growth_rate,), jnp.float32)
    return dict(w1=w1, w2=w2, gamma1=gamma1, beta1=beta1,
                gamma2=gamma2, beta2=beta2)


def reference_forward(x_nchw, params):
    """Pure-JAX f32 reference of the module forward with dropout disabled."""
    x = jnp.transpose(x_nchw, (0, 2, 3, 1))
    y1 = jnp.maximum(jnp.einsum("nhwc,cd->nhwd", x, params["w1"]), 0.0)
    m1, v1 = jnp.mean(y1, axis=(0, 1, 2)), jnp.var(y1, axis=(0, 1, 2))
    z1 = (y1 - m1) * jax.lax.rsqrt(v1 + BN_EPS) * params["gamma1"] + params["beta1"]
    z1p = jnp.pad(z1, ((0, 0), (1, 1), (1, 1), (0, 0)))
    N, H, W, _ = x.shape
    y2 = 0.0
    for kh in range(3):
        for kw in range(3):
            y2 = y2 + jnp.einsum("nhwc,cd->nhwd",
                                 z1p[:, kh:kh + H, kw:kw + W, :],
                                 params["w2"][kh, kw])
    y2 = jnp.maximum(y2, 0.0)
    m2, v2 = jnp.mean(y2, axis=(0, 1, 2)), jnp.var(y2, axis=(0, 1, 2))
    z2 = (y2 - m2) * jax.lax.rsqrt(v2 + BN_EPS) * params["gamma2"] + params["beta2"]
    return jnp.concatenate([x_nchw, jnp.transpose(z2, (0, 3, 1, 2))], axis=1)


if __name__ == "__main__":
    key = jax.random.PRNGKey(0)
    kx, kp, kd = jax.random.split(key, 3)

    N, C_in, H, W = 2, 8, 16, 16
    x = jax.random.normal(kx, (N, C_in, H, W), jnp.float32)
    params = init_params(kp, C_in)
    ref = reference_forward(x, params)

    # 1) tight numerics check: f32 compute path, dropout disabled
    fwd_f32 = jax.jit(functools.partial(bottleneck_block,
                                        dropout_rate=0.0, compute_dtype=jnp.float32))
    out32 = jax.block_until_ready(fwd_f32(x, params))
    assert out32.shape == (N, C_in + GROWTH_RATE, H, W), out32.shape
    err32 = float(jnp.max(jnp.abs(out32 - ref)))
    assert err32 < 3e-3, f"f32 path mismatch vs reference: {err32}"

    # 2) fast path check: bf16 MXU operands / intermediates (looser tolerance)
    fwd_bf16 = jax.jit(functools.partial(bottleneck_block,
                                         dropout_rate=0.0, compute_dtype=jnp.bfloat16))
    out16 = jax.block_until_ready(fwd_bf16(x, params))
    d = jnp.abs(out16[:, C_in:] - ref[:, C_in:])
    maxe, meane = float(jnp.max(d)), float(jnp.mean(d))
    assert maxe < 0.15 and meane < 0.02, f"bf16 path mismatch: max={maxe} mean={meane}"
    assert bool(jnp.all(out16[:, :C_in] == x))

    # 3) training-mode run: bf16 + dropout p=0.2 (random bits generated in the wrapper)
    fwd_train = jax.jit(functools.partial(bottleneck_block,
                                          dropout_rate=DROPOUT_RATE,
                                          compute_dtype=jnp.bfloat16))
    out = jax.block_until_ready(fwd_train(x, params, kd))
    assert out.shape == (N, C_in + GROWTH_RATE, H, W), out.shape
    assert out.dtype == jnp.float32
    # residual half of the concat must be exactly the input
    assert bool(jnp.all(out[:, :C_in] == x))
    frac_dropped = float(jnp.mean((out[:, C_in:] == 0.0).astype(jnp.float32)))
    assert 0.10 < frac_dropped < 0.30, frac_dropped
    print("KERNEL_OK")
</pallas_src>

<mosaic_0001>
module attributes {stable_mosaic.version = 11 : i64} {
  func.func @_conv1_relu_kernel(%arg0: i32, %arg1: i32, %arg2: memref<1x8x256xf32, #tpu.memory_space<vmem>>, %arg3: memref<128x8xf32, #tpu.memory_space<vmem>>, %arg4: memref<1x128x256xf32, #tpu.memory_space<vmem>>, %arg5: memref<1x1x128x2xf32, #tpu.memory_space<vmem>>) attributes {dimension_semantics = [#tpu.dimension_semantics<parallel>, #tpu.dimension_semantics<parallel>], iteration_bounds = array<i64: 2, 1>, scalar_prefetch = 0 : i64, scratch_operands = 0 : i64, tpu.core_type = #tpu.core_type<tc>, window_params = [{transform_indices = @transform_0, window_bounds = array<i64: 1, 8, 256>}, {pipeline_mode = #tpu.pipeline_mode<synchronous>, transform_indices = @transform_1, window_bounds = array<i64: 128, 8>}, {transform_indices = @transform_2, window_bounds = array<i64: 1, 128, 256>}, {transform_indices = @transform_3, window_bounds = array<i64: 1, 1, 128, 2>}]} {
    %c0 = arith.constant 0 : index
    %c0_0 = arith.constant 0 : index
    %c0_1 = arith.constant 0 : index
    %0 = vector.load %arg2[%c0, %c0_0, %c0_1] : memref<1x8x256xf32, #tpu.memory_space<vmem>>, vector<1x8x256xf32>
    %1 = vector.shape_cast %0 : vector<1x8x256xf32> to vector<8x256xf32>
    %c0_2 = arith.constant 0 : index
    %c0_3 = arith.constant 0 : index
    %2 = vector.load %arg3[%c0_2, %c0_3] : memref<128x8xf32, #tpu.memory_space<vmem>>, vector<128x8xf32>
    %cst = arith.constant dense<0.000000e+00> : vector<128x256xf32>
    %3 = tpu.matmul %2, %1, %cst {dimension_numbers = #tpu.dot_dimension_numbers<[1], [0], [0], [1], [0, 0, 1, 1], [], []>} : vector<128x8xf32>, vector<8x256xf32>, vector<128x256xf32> -> vector<128x256xf32>
    %cst_4 = arith.constant 0.000000e+00 : f32
    %4 = vector.broadcast %cst_4 : f32 to vector<128x256xf32>
    %5 = arith.maximumf %3, %4 : vector<128x256xf32>
    %c0_5 = arith.constant 0 : index
    %c0_6 = arith.constant 0 : index
    %c0_7 = arith.constant 0 : index
    %6 = vector.load %arg4[%c0_5, %c0_6, %c0_7] : memref<1x128x256xf32, #tpu.memory_space<vmem>>, vector<1x128x256xf32>
    %7 = vector.shape_cast %6 : vector<1x128x256xf32> to vector<128x256xf32>
    %8 = vector.shape_cast %5 : vector<128x256xf32> to vector<1x128x256xf32>
    tpu.vector_store %arg4[%c0_5, %c0_6, %c0_7], %8 {strides = array<i32>} : memref<1x128x256xf32, #tpu.memory_space<vmem>>, vector<1x128x256xf32>,
    %cst_8 = arith.constant dense<0.000000e+00> : vector<128xf32>
    %9 = vector.multi_reduction <add>, %5, %cst_8 [1] : vector<128x256xf32> to vector<128xf32>
    %10 = vector.shape_cast %9 : vector<128xf32> to vector<128x1xf32>
    %c0_9 = arith.constant 0 : index
    %c0_10 = arith.constant 0 : index
    %c0_11 = arith.constant 0 : index
    %c0_12 = arith.constant 0 : index
    %11 = vector.load %arg5[%c0_9, %c0_10, %c0_11, %c0_12] : memref<1x1x128x2xf32, #tpu.memory_space<vmem>>, vector<1x1x128x1xf32>
    %12 = vector.shape_cast %11 : vector<1x1x128x1xf32> to vector<128x1xf32>
    %13 = vector.shape_cast %10 : vector<128x1xf32> to vector<1x1x128x1xf32>
    tpu.vector_store %arg5[%c0_9, %c0_10, %c0_11, %c0_12], %13 {strides = array<i32>} : memref<1x1x128x2xf32, #tpu.memory_space<vmem>>, vector<1x1x128x1xf32>,
    %14 = arith.mulf %5, %5 : vector<128x256xf32>
    %cst_13 = arith.constant dense<0.000000e+00> : vector<128xf32>
    %15 = vector.multi_reduction <add>, %14, %cst_13 [1] : vector<128x256xf32> to vector<128xf32>
    %16 = vector.shape_cast %15 : vector<128xf32> to vector<128x1xf32>
    %c0_14 = arith.constant 0 : index
    %c0_15 = arith.constant 0 : index
    %c0_16 = arith.constant 0 : index
    %c1 = arith.constant 1 : index
    %17 = vector.load %arg5[%c0_14, %c0_15, %c0_16, %c1] : memref<1x1x128x2xf32, #tpu.memory_space<vmem>>, vector<1x1x128x1xf32>
    %18 = vector.shape_cast %17 : vector<1x1x128x1xf32> to vector<128x1xf32>
    %19 = vector.shape_cast %16 : vector<128x1xf32> to vector<1x1x128x1xf32>
    tpu.vector_store %arg5[%c0_14, %c0_15, %c0_16, %c1], %19 {strides = array<i32>} : memref<1x1x128x2xf32, #tpu.memory_space<vmem>>, vector<1x1x128x1xf32>,
    return
  }
  func.func @transform_0(%arg0: i32, %arg1: i32) -> (i32, i32, i32) {
    %c0_i32 = arith.constant 0 : i32
    %c0_i32_0 = arith.constant 0 : i32
    return %arg0, %c0_i32, %arg1 : i32, i32, i32
  }
  func.func @transform_1(%arg0: i32, %arg1: i32) -> (i32, i32) {
    %c0_i32 = arith.constant 0 : i32
    %c0_i32_0 = arith.constant 0 : i32
    %c0_i32_1 = arith.constant 0 : i32
    return %c0_i32, %c0_i32_0 : i32, i32
  }
  func.func @transform_2(%arg0: i32, %arg1: i32) -> (i32, i32, i32) {
    %c0_i32 = arith.constant 0 : i32
    %c0_i32_0 = arith.constant 0 : i32
    return %arg0, %c0_i32, %arg1 : i32, i32, i32
  }
  func.func @transform_3(%arg0: i32, %arg1: i32) -> (i32, i32, i32, i32) {
    %c0_i32 = arith.constant 0 : i32
    %c0_i32_0 = arith.constant 0 : i32
    %c0_i32_1 = arith.constant 0 : i32
    return %arg0, %arg1, %c0_i32, %c0_i32_0 : i32, i32, i32, i32
  }
}

module attributes {stable_mosaic.version = 11 : i64} {
  func.func @_conv2_relu_kernel(%arg0: i32, %arg1: memref<1x128x256xf32, #tpu.memory_space<vmem>>, %arg2: memref<1x128xf32, #tpu.memory_space<vmem>>, %arg3: memref<1x128xf32, #tpu.memory_space<vmem>>, %arg4: memref<3x384x128xf32, #tpu.memory_space<vmem>>, %arg5: memref<1x24x256xf32, #tpu.memory_space<vmem>>, %arg6: memref<1x2x24xf32, #tpu.memory_space<vmem>>) attributes {dimension_semantics = [#tpu.dimension_semantics<parallel>], iteration_bounds = array<i64: 2>, scalar_prefetch = 0 : i64, scratch_operands = 0 : i64, tpu.core_type = #tpu.core_type<tc>, window_params = [{transform_indices = @transform_0, window_bounds = array<i64: 1, 128, 256>}, {pipeline_mode = #tpu.pipeline_mode<synchronous>, transform_indices = @transform_1, window_bounds = array<i64: 1, 128>}, {pipeline_mode = #tpu.pipeline_mode<synchronous>, transform_indices = @transform_2, window_bounds = array<i64: 1, 128>}, {pipeline_mode = #tpu.pipeline_mode<synchronous>, transform_indices = @transform_3, window_bounds = array<i64: 3, 384, 128>}, {transform_indices = @transform_4, window_bounds = array<i64: 1, 24, 256>}, {transform_indices = @transform_5, window_bounds = array<i64: 1, 2, 24>}]} {
    %c0 = arith.constant 0 : index
    %c0_0 = arith.constant 0 : index
    %c0_1 = arith.constant 0 : index
    %0 = vector.load %arg1[%c0, %c0_0, %c0_1] : memref<1x128x256xf32, #tpu.memory_space<vmem>>, vector<1x128x256xf32>
    %1 = vector.shape_cast %0 : vector<1x128x256xf32> to vector<128x256xf32>
    %2 = tpu.transpose %1, [1, 0] : vector<128x256xf32> -> vector<256x128xf32>
    %c0_2 = arith.constant 0 : index
    %c0_3 = arith.constant 0 : index
    %3 = vector.load %arg2[%c0_2, %c0_3] : memref<1x128xf32, #tpu.memory_space<vmem>>, vector<1x128xf32>
    %4 = vector.broadcast %3 : vector<1x128xf32> to vector<256x128xf32>
    %5 = arith.mulf %2, %4 : vector<256x128xf32>
    %c0_4 = arith.constant 0 : index
    %c0_5 = arith.constant 0 : index
    %6 = vector.load %arg3[%c0_4, %c0_5] : memref<1x128xf32, #tpu.memory_space<vmem>>, vector<1x128xf32>
    %7 = vector.broadcast %6 : vector<1x128xf32> to vector<256x128xf32>
    %8 = arith.addf %5, %7 : vector<256x128xf32>
    %cst = arith.constant 0.000000e+00 : f32
    %9 = vector.broadcast %cst : f32 to vector<16x128xf32>
    %10 = tpu.concatenate %9, %8, %9 in 0 : vector<16x128xf32>, vector<256x128xf32>, vector<16x128xf32> -> vector<288x128xf32>
    %cst_6 = arith.constant 0.000000e+00 : f32
    %11 = vector.broadcast %cst_6 : f32 to vector<1x128xf32>
    %12 = tpu.iota {dimensions = array<i32: 0>} : vector<288x1xi32>
    %c16_i32 = arith.constant 16 : i32
    %c0_i32 = arith.constant 0 : i32
    %13 = arith.cmpi eq, %c16_i32, %c0_i32 : i32
    %c1_i32 = arith.constant 1 : i32
    %14 = arith.select %13, %c1_i32, %c16_i32 : i32
    %15 = vector.broadcast %14 : i32 to vector<288x1xi32>
    %16 = arith.remsi %12, %15 : vector<288x1xi32>
    %c0_i32_7 = arith.constant 0 : i32
    %17 = vector.broadcast %c0_i32_7 : i32 to vector<288x1xi32>
    %18 = arith.cmpi ne, %16, %17 : vector<288x1xi32>
    %c0_i32_8 = arith.constant 0 : i32
    %19 = vector.broadcast %c0_i32_8 : i32 to vector<288x1xi32>
    %20 = arith.cmpi slt, %16, %19 : vector<288x1xi32>
    %c0_i32_9 = arith.constant 0 : i32
    %21 = arith.cmpi slt, %14, %c0_i32_9 : i32
    %22 = vector.broadcast %21 : i1 to vector<288x1xi1>
    %23 = vector.broadcast %22 : vector<288x1xi1> to vector<288x1xi1>
    %24 = arith.xori %20, %23 : vector<288x1xi1>
    %25 = arith.andi %24, %18 : vector<288x1xi1>
    %26 = vector.broadcast %14 : i32 to vector<288x1xi32>
    %27 = arith.addi %16, %26 : vector<288x1xi32>
    %28 = arith.select %25, %27, %16 : vector<288x1xi1>, vector<288x1xi32>
    %c0_i32_10 = arith.constant 0 : i32
    %29 = vector.broadcast %c0_i32_10 : i32 to vector<288x1xi32>
    %30 = arith.cmpi sgt, %28, %29 : vector<288x1xi32>
    %31 = vector.extract_strided_slice %10 {offsets = [0, 0], sizes = [287, 128], strides = [1, 1]} : vector<288x128xf32> to vector<287x128xf32>
    %32 = tpu.concatenate %11, %31 in 0 : vector<1x128xf32>, vector<287x128xf32> -> vector<288x128xf32>
    %cst_11 = arith.constant 0.000000e+00 : f32
    %33 = vector.shape_cast %30 : vector<288x1xi1> to vector<288x1xi1>
    %34 = vector.broadcast %33 : vector<288x1xi1> to vector<288x128xi1>
    %35 = vector.broadcast %cst_11 : f32 to vector<288x128xf32>
    %36 = arith.select %34, %32, %35 : vector<288x128xi1>, vector<288x128xf32>
    %c15_i32 = arith.constant 15 : i32
    %37 = vector.broadcast %c15_i32 : i32 to vector<288x1xi32>
    %38 = arith.cmpi slt, %28, %37 : vector<288x1xi32>
    %39 = vector.extract_strided_slice %10 {offsets = [1, 0], sizes = [287, 128], strides = [1, 1]} : vector<288x128xf32> to vector<287x128xf32>
    %40 = tpu.concatenate %39, %11 in 0 : vector<287x128xf32>, vector<1x128xf32> -> vector<288x128xf32>
    %cst_12 = arith.constant 0.000000e+00 : f32
    %41 = vector.shape_cast %38 : vector<288x1xi1> to vector<288x1xi1>
    %42 = vector.broadcast %41 : vector<288x1xi1> to vector<288x128xi1>
    %43 = vector.broadcast %cst_12 : f32 to vector<288x128xf32>
    %44 = arith.select %42, %40, %43 : vector<288x128xi1>, vector<288x128xf32>
    %45 = tpu.concatenate %36, %10, %44 in 1 : vector<288x128xf32>, vector<288x128xf32>, vector<288x128xf32> -> vector<288x384xf32>
    %cst_13 = arith.constant 0.000000e+00 : f32
    %46 = vector.broadcast %cst_13 : f32 to vector<256x128xf32>
    %47 = vector.extract_strided_slice %45 {offsets = [0, 0], sizes = [256, 384], strides = [1, 1]} : vector<288x384xf32> to vector<256x384xf32>
    %c0_14 = arith.constant 0 : index
    %c0_15 = arith.constant 0 : index
    %c0_16 = arith.constant 0 : index
    %48 = vector.load %arg4[%c0_14, %c0_15, %c0_16] : memref<3x384x128xf32, #tpu.memory_space<vmem>>, vector<1x384x128xf32>
    %49 = vector.shape_cast %48 : vector<1x384x128xf32> to vector<384x128xf32>
    %cst_17 = arith.constant dense<0.000000e+00> : vector<256x128xf32>
    %50 = tpu.matmul %47, %49, %cst_17 {dimension_numbers = #tpu.dot_dimension_numbers<[1], [0], [0], [1], [0, 0, 1, 1], [], []>} : vector<256x384xf32>, vector<384x128xf32>, vector<256x128xf32> -> vector<256x128xf32>
    %51 = arith.addf %46, %50 : vector<256x128xf32>
    %52 = vector.extract_strided_slice %45 {offsets = [16, 0], sizes = [256, 384], strides = [1, 1]} : vector<288x384xf32> to vector<256x384xf32>
    %c1 = arith.constant 1 : index
    %c0_18 = arith.constant 0 : index
    %c0_19 = arith.constant 0 : index
    %53 = vector.load %arg4[%c1, %c0_18, %c0_19] : memref<3x384x128xf32, #tpu.memory_space<vmem>>, vector<1x384x128xf32>
    %54 = vector.shape_cast %53 : vector<1x384x128xf32> to vector<384x128xf32>
    %cst_20 = arith.constant dense<0.000000e+00> : vector<256x128xf32>
    %55 = tpu.matmul %52, %54, %cst_20 {dimension_numbers = #tpu.dot_dimension_numbers<[1], [0], [0], [1], [0, 0, 1, 1], [], []>} : vector<256x384xf32>, vector<384x128xf32>, vector<256x128xf32> -> vector<256x128xf32>
    %56 = arith.addf %51, %55 : vector<256x128xf32>
    %57 = vector.extract_strided_slice %45 {offsets = [32, 0], sizes = [256, 384], strides = [1, 1]} : vector<288x384xf32> to vector<256x384xf32>
    %c2 = arith.constant 2 : index
    %c0_21 = arith.constant 0 : index
    %c0_22 = arith.constant 0 : index
    %58 = vector.load %arg4[%c2, %c0_21, %c0_22] : memref<3x384x128xf32, #tpu.memory_space<vmem>>, vector<1x384x128xf32>
    %59 = vector.shape_cast %58 : vector<1x384x128xf32> to vector<384x128xf32>
    %cst_23 = arith.constant dense<0.000000e+00> : vector<256x128xf32>
    %60 = tpu.matmul %57, %59, %cst_23 {dimension_numbers = #tpu.dot_dimension_numbers<[1], [0], [0], [1], [0, 0, 1, 1], [], []>} : vector<256x384xf32>, vector<384x128xf32>, vector<256x128xf32> -> vector<256x128xf32>
    %61 = arith.addf %56, %60 : vector<256x128xf32>
    %cst_24 = arith.constant 0.000000e+00 : f32
    %62 = vector.broadcast %cst_24 : f32 to vector<256x128xf32>
    %63 = arith.maximumf %61, %62 : vector<256x128xf32>
    %cst_25 = arith.constant dense<0.000000e+00> : vector<128xf32>
    %64 = vector.multi_reduction <add>, %63, %cst_25 [0] : vector<256x128xf32> to vector<128xf32>
    %65 = vector.shape_cast %64 : vector<128xf32> to vector<1x128xf32>
    %66 = vector.extract_strided_slice %65 {offsets = [0, 0], sizes = [1, 24], strides = [1, 1]} : vector<1x128xf32> to vector<1x24xf32>
    %c0_26 = arith.constant 0 : index
    %c0_27 = arith.constant 0 : index
    %c0_28 = arith.constant 0 : index
    %67 = vector.load %arg6[%c0_26, %c0_27, %c0_28] : memref<1x2x24xf32, #tpu.memory_space<vmem>>, vector<1x1x24xf32>
    %68 = vector.shape_cast %67 : vector<1x1x24xf32> to vector<1x24xf32>
    %69 = vector.shape_cast %66 : vector<1x24xf32> to vector<1x1x24xf32>
    tpu.vector_store %arg6[%c0_26, %c0_27, %c0_28], %69 {strides = array<i32>} : memref<1x2x24xf32, #tpu.memory_space<vmem>>, vector<1x1x24xf32>,
    %70 = arith.mulf %63, %63 : vector<256x128xf32>
    %cst_29 = arith.constant dense<0.000000e+00> : vector<128xf32>
    %71 = vector.multi_reduction <add>, %70, %cst_29 [0] : vector<256x128xf32> to vector<128xf32>
    %72 = vector.shape_cast %71 : vector<128xf32> to vector<1x128xf32>
    %73 = vector.extract_strided_slice %72 {offsets = [0, 0], sizes = [1, 24], strides = [1, 1]} : vector<1x128xf32> to vector<1x24xf32>
    %c0_30 = arith.constant 0 : index
    %c1_31 = arith.constant 1 : index
    %c0_32 = arith.constant 0 : index
    %74 = vector.load %arg6[%c0_30, %c1_31, %c0_32] : memref<1x2x24xf32, #tpu.memory_space<vmem>>, vector<1x1x24xf32>
    %75 = vector.shape_cast %74 : vector<1x1x24xf32> to vector<1x24xf32>
    %76 = vector.shape_cast %73 : vector<1x24xf32> to vector<1x1x24xf32>
    tpu.vector_store %arg6[%c0_30, %c1_31, %c0_32], %76 {strides = array<i32>} : memref<1x2x24xf32, #tpu.memory_space<vmem>>, vector<1x1x24xf32>,
    %77 = tpu.transpose %63, [1, 0] : vector<256x128xf32> -> vector<128x256xf32>
    %78 = vector.extract_strided_slice %77 {offsets = [0, 0], sizes = [24, 256], strides = [1, 1]} : vector<128x256xf32> to vector<24x256xf32>
    %c0_33 = arith.constant 0 : index
    %c0_34 = arith.constant 0 : index
    %c0_35 = arith.constant 0 : index
    %79 = vector.load %arg5[%c0_33, %c0_34, %c0_35] : memref<1x24x256xf32, #tpu.memory_space<vmem>>, vector<1x24x256xf32>
    %80 = vector.shape_cast %79 : vector<1x24x256xf32> to vector<24x256xf32>
    %81 = vector.shape_cast %78 : vector<24x256xf32> to vector<1x24x256xf32>
    tpu.vector_store %arg5[%c0_33, %c0_34, %c0_35], %81 {strides = array<i32>} : memref<1x24x256xf32, #tpu.memory_space<vmem>>, vector<1x24x256xf32>,
    return
  }
  func.func @transform_0(%arg0: i32) -> (i32, i32, i32) {
    %c0_i32 = arith.constant 0 : i32
    %c0_i32_0 = arith.constant 0 : i32
    %c0_i32_1 = arith.constant 0 : i32
    return %arg0, %c0_i32, %c0_i32_0 : i32, i32, i32
  }
  func.func @transform_1(%arg0: i32) -> (i32, i32) {
    %c0_i32 = arith.constant 0 : i32
    %c0_i32_0 = arith.constant 0 : i32
    %c0_i32_1 = arith.constant 0 : i32
    return %c0_i32, %c0_i32_0 : i32, i32
  }
  func.func @transform_2(%arg0: i32) -> (i32, i32) {
    %c0_i32 = arith.constant 0 : i32
    %c0_i32_0 = arith.constant 0 : i32
    %c0_i32_1 = arith.constant 0 : i32
    return %c0_i32, %c0_i32_0 : i32, i32
  }
  func.func @transform_3(%arg0: i32) -> (i32, i32, i32) {
    %c0_i32 = arith.constant 0 : i32
    %c0_i32_0 = arith.constant 0 : i32
    %c0_i32_1 = arith.constant 0 : i32
    %c0_i32_2 = arith.constant 0 : i32
    return %c0_i32, %c0_i32_0, %c0_i32_1 : i32, i32, i32
  }
  func.func @transform_4(%arg0: i32) -> (i32, i32, i32) {
    %c0_i32 = arith.constant 0 : i32
    %c0_i32_0 = arith.constant 0 : i32
    %c0_i32_1 = arith.constant 0 : i32
    return %arg0, %c0_i32, %c0_i32_0 : i32, i32, i32
  }
  func.func @transform_5(%arg0: i32) -> (i32, i32, i32) {
    %c0_i32 = arith.constant 0 : i32
    %c0_i32_0 = arith.constant 0 : i32
    %c0_i32_1 = arith.constant 0 : i32
    return %arg0, %c0_i32, %c0_i32_0 : i32, i32, i32
  }
}

module attributes {stable_mosaic.version = 11 : i64} {
  func.func @_bn2_dropout_kernel(%arg0: i32, %arg1: i32, %arg2: memref<1x24x256xf32, #tpu.memory_space<vmem>>, %arg3: memref<24x1xf32, #tpu.memory_space<vmem>>, %arg4: memref<24x1xf32, #tpu.memory_space<vmem>>, %arg5: memref<1x24x256xf32, #tpu.memory_space<vmem>>) attributes {dimension_semantics = [#tpu.dimension_semantics<parallel>, #tpu.dimension_semantics<parallel>], iteration_bounds = array<i64: 2, 1>, scalar_prefetch = 0 : i64, scratch_operands = 0 : i64, tpu.core_type = #tpu.core_type<tc>, window_params = [{transform_indices = @transform_0, window_bounds = array<i64: 1, 24, 256>}, {pipeline_mode = #tpu.pipeline_mode<synchronous>, transform_indices = @transform_1, window_bounds = array<i64: 24, 1>}, {pipeline_mode = #tpu.pipeline_mode<synchronous>, transform_indices = @transform_2, window_bounds = array<i64: 24, 1>}, {transform_indices = @transform_3, window_bounds = array<i64: 1, 24, 256>}]} {
    %c0 = arith.constant 0 : index
    %c0_0 = arith.constant 0 : index
    %c0_1 = arith.constant 0 : index
    %0 = vector.load %arg2[%c0, %c0_0, %c0_1] : memref<1x24x256xf32, #tpu.memory_space<vmem>>, vector<1x24x256xf32>
    %1 = vector.shape_cast %0 : vector<1x24x256xf32> to vector<24x256xf32>
    %c0_2 = arith.constant 0 : index
    %c0_3 = arith.constant 0 : index
    %2 = vector.load %arg3[%c0_2, %c0_3] : memref<24x1xf32, #tpu.memory_space<vmem>>, vector<24x1xf32>
    %3 = vector.broadcast %2 : vector<24x1xf32> to vector<24x256xf32>
    %4 = arith.mulf %1, %3 : vector<24x256xf32>
    %c0_4 = arith.constant 0 : index
    %c0_5 = arith.constant 0 : index
    %5 = vector.load %arg4[%c0_4, %c0_5] : memref<24x1xf32, #tpu.memory_space<vmem>>, vector<24x1xf32>
    %6 = vector.broadcast %5 : vector<24x1xf32> to vector<24x256xf32>
    %7 = arith.addf %4, %6 : vector<24x256xf32>
    %c0_6 = arith.constant 0 : index
    %c0_7 = arith.constant 0 : index
    %c0_8 = arith.constant 0 : index
    %8 = vector.load %arg5[%c0_6, %c0_7, %c0_8] : memref<1x24x256xf32, #tpu.memory_space<vmem>>, vector<1x24x256xf32>
    %9 = vector.shape_cast %8 : vector<1x24x256xf32> to vector<24x256xf32>
    %10 = vector.shape_cast %7 : vector<24x256xf32> to vector<1x24x256xf32>
    tpu.vector_store %arg5[%c0_6, %c0_7, %c0_8], %10 {strides = array<i32>} : memref<1x24x256xf32, #tpu.memory_space<vmem>>, vector<1x24x256xf32>,
    return
  }
  func.func @transform_0(%arg0: i32, %arg1: i32) -> (i32, i32, i32) {
    %c0_i32 = arith.constant 0 : i32
    %c0_i32_0 = arith.constant 0 : i32
    return %arg0, %c0_i32, %arg1 : i32, i32, i32
  }
  func.func @transform_1(%arg0: i32, %arg1: i32) -> (i32, i32) {
    %c0_i32 = arith.constant 0 : i32
    %c0_i32_0 = arith.constant 0 : i32
    %c0_i32_1 = arith.constant 0 : i32
    return %c0_i32, %c0_i32_0 : i32, i32
  }
  func.func @transform_2(%arg0: i32, %arg1: i32) -> (i32, i32) {
    %c0_i32 = arith.constant 0 : i32
    %c0_i32_0 = arith.constant 0 : i32
    %c0_i32_1 = arith.constant 0 : i32
    return %c0_i32, %c0_i32_0 : i32, i32
  }
  func.func @transform_3(%arg0: i32, %arg1: i32) -> (i32, i32, i32) {
    %c0_i32 = arith.constant 0 : i32
    %c0_i32_0 = arith.constant 0 : i32
    return %arg0, %c0_i32, %arg1 : i32, i32, i32
  }
}

</mosaic_0001>

<llo_original>
// kernel: bottleneck_block.3
$region0: #{bottleneck_block.3}
  #allocation0 [shape = 'u32[]', space=smem, size = 0x4, offset = 0x4, fixed_abs, tag = 'smem constant byte address 0x4 - core index']
  #allocation1 [shape = 'u32[144,128]{1,0:T(1,128)}', space=vmem, size = 0x12000, scoped, tag = 'internal scratch']
  %s0 = inlined_call_operand.vmem [shape: f32[2,8,256], index: 0, kind: input, shape index: {}]
  %s1 = inlined_call_operand.vmem [shape: f32[128,8], index: 1, kind: input, shape index: {}]
  %s2 = inlined_call_operand.vmem [shape: f32[2,128,256], index: 2, kind: output, shape index: {0}]
  %s3 = inlined_call_operand.vmem [shape: f32[2,1,128,2], index: 3, kind: output, shape index: {1}]
  %4 = xla_tuple %s2, %s3
  %s5 = sld [smem:[#allocation0]]
  $region49: #{bottleneck_block.3} parent=0
    _
  %s7 = ssub.s32 1, %s5
  %s8 = scalar_select 0, %s7, %s5
  loop: start=0, step=1, limit=4
  $region2: #{bottleneck_block.3} parent=0 // loop_pre_header
    _
  $region3: #{bottleneck_block.3} parent=0 // loop_header
    %s10 = sphi 0, %s14
    %p11 = scmp.ge.s32.totalorder %s10, 4
    %s17 = sphi 0, %s29
    %s18 = sphi 0, %s25
    %s19 = sphi 0, %s17
    %s20 = sphi 0, %s18
    %s21 = sphi 0, %s19
    %s22 = sphi 0, %s20
    %s34 = sphi 0, %s36
    %s37 = sphi 0, %s34
    %s38 = sphi 0, %s37
    %s54 = sphi 0, %s38
    %s58 = sphi 0, %s58
    %s60 = sphi 0, %s58
    %s61 = sphi 0, %s60
    %s75 = sphi 0, %s61
    %s83 = sphi 0, %s85
    %s86 = sphi 0, %s83
    %s87 = sphi 0, %s86
    %s103 = sphi 0, %s87
    %s111 = sphi 0, %s113
    %s114 = sphi 0, %s111
    %s115 = sphi 0, %s114
    %s131 = sphi 0, %s115
  $region4: #{bottleneck_block.3} parent=0 // loop_header_branch
    %13 = sbr.rel (%p11) target = $region8
  $region5: #{bottleneck_block.3} parent=0 // loop_body
    %s15 = ssub.s32 %s10, 1
    %s16 = ssub.s32 %s10, 2
    %s23 = sadd.s32 1, %s18
    %p24 = scmp.ge.s32.totalorder %s23, 1
    %s25 = scalar_select %p24, 0, %s23
    %s26 = sadd.s32 1, %s17
    %s27 = scalar_select %p24, %s26, %s17
    %p28 = scmp.ge.s32.totalorder %s27, 2
    %s29 = scalar_select %p28, 0, %s27
    %s30 = ssub.s32 %s17, %s29
    %s31 = ssub.s32 %s18, %s25
    %s32 = sor.u32 %s30, %s31
    %p33 = scmp.eq.s32.totalorder %s32, 0
    %s35 = sadd.s32 %s34, 1
    %s36 = scalar_select %p33, %s34, %s35
    %p39 = pneg %p33
    %p40 = scmp.eq.s32.totalorder %s10, 1
    %p41 = por %p39, %p40
    %p42 = scmp.ne.s32.totalorder %s34, %s37
    %p43 = scmp.eq.s32.totalorder %s10, 0
    %p44 = por %p42, %p43
    %p45 = scmp.ne.s32.totalorder %s34, %s37
    %p46 = scmp.eq.s32.totalorder %s15, 1
    %p47 = por %p45, %p46
    %p48 = scmp.ne.s32.totalorder %s37, %s38
    %p49 = scmp.eq.s32.totalorder %s15, 0
    %p50 = por %p48, %p49
    %p51 = scmp.ne.s32.totalorder %s37, %s38
    %p52 = scmp.eq.s32.totalorder %s16, 1
    %p53 = por %p51, %p52
    %p55 = scmp.ne.s32.totalorder %s38, %s54
    %p56 = scmp.eq.s32.totalorder %s16, 0
    %p57 = por %p55, %p56
    %s59 = sadd.s32 %s58, 1
    %p62 = scmp.eq.s32.totalorder %s10, 1
    %p63 = scmp.ne.s32.totalorder %s58, %s60
    %p64 = scmp.eq.s32.totalorder %s10, 0
    %p65 = por %p63, %p64
    %p66 = scmp.ne.s32.totalorder %s58, %s60
    %p67 = scmp.eq.s32.totalorder %s15, 1
    %p68 = por %p66, %p67
    %p69 = scmp.ne.s32.totalorder %s60, %s61
    %p70 = scmp.eq.s32.totalorder %s15, 0
    %p71 = por %p69, %p70
    %p72 = scmp.ne.s32.totalorder %s60, %s61
    %p73 = scmp.eq.s32.totalorder %s16, 1
    %p74 = por %p72, %p73
    %p76 = scmp.ne.s32.totalorder %s61, %s75
    %p77 = scmp.eq.s32.totalorder %s16, 0
    %p78 = por %p76, %p77
    %s79 = ssub.s32 %s17, %s29
    %s80 = ssub.s32 %s18, %s25
    %s81 = sor.u32 %s79, %s80
    %p82 = scmp.eq.s32.totalorder %s81, 0
    %s84 = sadd.s32 %s83, 1
    %s85 = scalar_select %p82, %s83, %s84
    %p88 = pneg %p82
    %p89 = scmp.eq.s32.totalorder %s10, 1
    %p90 = por %p88, %p89
    %p91 = scmp.ne.s32.totalorder %s83, %s86
    %p92 = scmp.eq.s32.totalorder %s10, 0
    %p93 = por %p91, %p92
    %p94 = scmp.ne.s32.totalorder %s83, %s86
    %p95 = scmp.eq.s32.totalorder %s15, 1
    %p96 = por %p94, %p95
    %p97 = scmp.ne.s32.totalorder %s86, %s87
    %p98 = scmp.eq.s32.totalorder %s15, 0
    %p99 = por %p97, %p98
    %p100 = scmp.ne.s32.totalorder %s86, %s87
    %p101 = scmp.eq.s32.totalorder %s16, 1
    %p102 = por %p100, %p101
    %p104 = scmp.ne.s32.totalorder %s87, %s103
    %p105 = scmp.eq.s32.totalorder %s16, 0
    %p106 = por %p104, %p105
    %s107 = ssub.s32 %s17, %s29
    %s108 = ssub.s32 %s18, %s25
    %s109 = sor.u32 %s107, %s108
    %p110 = scmp.eq.s32.totalorder %s109, 0
    %s112 = sadd.s32 %s111, 1
    %s113 = scalar_select %p110, %s111, %s112
    %p116 = pneg %p110
    %p117 = scmp.eq.s32.totalorder %s10, 1
    %p118 = por %p116, %p117
    %p119 = scmp.ne.s32.totalorder %s111, %s114
    %p120 = scmp.eq.s32.totalorder %s10, 0
    %p121 = por %p119, %p120
    %p122 = scmp.ne.s32.totalorder %s111, %s114
    %p123 = scmp.eq.s32.totalorder %s15, 1
    %p124 = por %p122, %p123
    %p125 = scmp.ne.s32.totalorder %s114, %s115
    %p126 = scmp.eq.s32.totalorder %s15, 0
    %p127 = por %p125, %p126
    %p128 = scmp.ne.s32.totalorder %s114, %s115
    %p129 = scmp.eq.s32.totalorder %s16, 1
    %p130 = por %p128, %p129
    %p132 = scmp.ne.s32.totalorder %s115, %s131
    %p133 = scmp.eq.s32.totalorder %s16, 0
    %p134 = por %p132, %p133
    %p135 = scmp.le.s32.totalorder 1, %s10
    %p136 = scmp.lt.s32.totalorder %s10, 3
    %p137 = pnand %p135, %p136
    %p138 = pneg %p137
    // Predicated region
    $region9: #{bottleneck_block.3} parent=5 // pred_check
      _
    $region10: #{bottleneck_block.3} parent=5 // pred_check_branch
      %140 = sbr.rel (%p137) target = $region12
    $region11: #{bottleneck_block.3} parent=5 // pred_region
      %s141 = ssub.s32 %s10, 1
      // Predicated region
      $region13: #{bottleneck_block.3} parent=11 // pred_check
        %p142 = pneg %p71
      $region14: #{bottleneck_block.3} parent=11 // pred_check_branch
        %144 = sbr.rel (%p142) target = $region16
      $region15: #{bottleneck_block.3} parent=11 // pred_region
        _
      $region16: #{bottleneck_block.3} parent=11 // pred_fallthru
        _
    $region12: #{bottleneck_block.3} parent=5 // pred_fallthru
      _
    %p145 = scmp.lt.s32.totalorder %s10, 2
    // Predicated region
    $region17: #{bottleneck_block.3} parent=5 // pred_check
      %p146 = pneg %p145
    $region18: #{bottleneck_block.3} parent=5 // pred_check_branch
      %148 = sbr.rel (%p146) target = $region20
    $region19: #{bottleneck_block.3} parent=5 // pred_region
      // Predicated region
      $region21: #{bottleneck_block.3} parent=19 // pred_check
        %p149 = pneg %p44
      $region22: #{bottleneck_block.3} parent=19 // pred_check_branch
        %151 = sbr.rel (%p149) target = $region24
      $region23: #{bottleneck_block.3} parent=19 // pred_region
        %s152 = smul.u32 2, %s18
        %p153 = scmp.lt.s32.totalorder %s17, 1
        %s154 = scalar_select %p153, %s17, 1
        %p155 = scmp.lt.s32.totalorder %s152, 1
        %s156 = scalar_select %p155, %s152, 1
        %s157 = smul.addr %s154, 2
        %s158 = sadd.s32 %s156, %s157
        %s159 = smul.addr %s158, 8
        %s160 = scalar_lea.vmem %s0, %s159
        %s161 = smul.u32 2, %s18
      $region24: #{bottleneck_block.3} parent=19 // pred_fallthru
        _
    $region20: #{bottleneck_block.3} parent=5 // pred_fallthru
      _
    %p162 = scmp.le.s32.totalorder 1, %s10
    %p163 = scmp.lt.s32.totalorder %s10, 3
    %p164 = pnand %p162, %p163
    %p165 = pneg %p164
    // Predicated region
    $region25: #{bottleneck_block.3} parent=5 // pred_check
      _
    $region26: #{bottleneck_block.3} parent=5 // pred_check_branch
      %167 = sbr.rel (%p164) target = $region28
    $region27: #{bottleneck_block.3} parent=5 // pred_region
      %s168 = ssub.s32 %s10, 1
      %s169 = smul.u32 2, %s20
      %p170 = scmp.lt.s32.totalorder %s19, 1
      %s171 = scalar_select %p170, %s19, 1
      %p172 = scmp.lt.s32.totalorder %s169, 1
      %s173 = scalar_select %p172, %s169, 1
      %s174 = smul.addr %s171, 2
      %s175 = sadd.s32 %s173, %s174
      %s176 = smul.addr %s175, 8
      %s177 = scalar_lea.vmem %s0, %s176
      %p178 = pneg %p50
      %p179 = pneg %p47
      %p180 = pneg %p71
      %p181 = pneg %p68
      %p182 = pneg %p99
      %p183 = pneg %p96
      %s184 = smul.u32 2, %s20
      %p185 = scmp.lt.s32.totalorder %s19, 1
      %s186 = scalar_select %p185, %s19, 1
      %p187 = scmp.lt.s32.totalorder %s184, 1
      %s188 = scalar_select %p187, %s184, 1
      %s189 = smul.addr %s186, 32
      %s190 = sadd.s32 %s188, %s189
      %s191 = smul.addr %s190, 8
      %s192 = scalar_lea.vmem %s2, %s191
      %p193 = pneg %p127
      %p194 = pneg %p124
      %p195 = scmp.lt.s32.totalorder %s19, 1
      %s196 = scalar_select %p195, %s19, 1
      %p197 = scmp.lt.s32.totalorder %s20, 0
      %s198 = scalar_select %p197, %s20, 0
      %s199 = smul.addr %s198, 16
      %s200 = smul.addr %s196, 16
      %s201 = sadd.s32 %s199, %s200
      %s202 = smul.addr %s201, 8
      %s203 = scalar_lea.vmem %s3, %s202
      %s204 = smul.u32 2, %s20
      %p205 = scmp.lt.s32.totalorder %s19, 1
      %s206 = scalar_select %p205, %s19, 1
      %p207 = scmp.lt.s32.totalorder %s204, 1
      %s208 = scalar_select %p207, %s204, 1
      %s209 = smul.addr %s206, 2
      %s210 = sadd.s32 %s208, %s209
      %s211 = smul.addr %s210, 8
      %s212 = scalar_lea.vmem %s0, %s211
      %s213 = smul.u32 2, %s20
      %s214 = smul.u32 2, %s20
      %p215 = scmp.lt.s32.totalorder %s19, 1
      %s216 = scalar_select %p215, %s19, 1
      %p217 = scmp.lt.s32.totalorder %s214, 1
      %s218 = scalar_select %p217, %s214, 1
      %s219 = smul.addr %s216, 32
      %s220 = sadd.s32 %s218, %s219
      %s221 = smul.addr %s220, 8
      %s222 = scalar_lea.vmem %s2, %s221
      %s223 = smul.u32 2, %s20
      %p224 = scmp.lt.s32.totalorder %s19, 1
      %s225 = scalar_select %p224, %s19, 1
      %p226 = scmp.lt.s32.totalorder %s20, 0
      %s227 = scalar_select %p226, %s20, 0
      %s228 = smul.addr %s227, 16
      %s229 = smul.addr %s225, 16
      %s230 = sadd.s32 %s228, %s229
      %s231 = smul.addr %s230, 8
      %s232 = scalar_lea.vmem %s3, %s231
      %v233 = vld [vmem:[%s212] sm:$0xff]
      %v234 = vld [vmem:[%s212 + $0x8] sm:$0xff]
      %v235 = vld [vmem:[%s1] sm:$0xff]
      %v236 = vld [vmem:[%s1 + $0x8] sm:$0xff]
      %v237 = vld [vmem:[%s1 + $0x10] sm:$0xff]
      %v238 = vld [vmem:[%s1 + $0x18] sm:$0xff]
      %v239 = vld [vmem:[%s1 + $0x20] sm:$0xff]
      %v240 = vld [vmem:[%s1 + $0x28] sm:$0xff]
      %v241 = vld [vmem:[%s1 + $0x30] sm:$0xff]
      %v242 = vld [vmem:[%s1 + $0x38] sm:$0xff]
      %v243 = vld [vmem:[%s1 + $0x40] sm:$0xff]
      %v244 = vld [vmem:[%s1 + $0x48] sm:$0xff]
      %v245 = vld [vmem:[%s1 + $0x50] sm:$0xff]
      %v246 = vld [vmem:[%s1 + $0x58] sm:$0xff]
      %v247 = vld [vmem:[%s1 + $0x60] sm:$0xff]
      %v248 = vld [vmem:[%s1 + $0x68] sm:$0xff]
      %v249 = vld [vmem:[%s1 + $0x70] sm:$0xff]
      %v250 = vld [vmem:[%s1 + $0x78] sm:$0xff]
      %vm251 = vcmask 64512
      %v253 = vsel %vm251, %v235, 0
      %v256 = vsel %vm251, %v236, 0
      %v259 = vsel %vm251, %v237, 0
      %v262 = vsel %vm251, %v238, 0
      %v265 = vsel %vm251, %v239, 0
      %v268 = vsel %vm251, %v240, 0
      %v271 = vsel %vm251, %v241, 0
      %v274 = vsel %vm251, %v242, 0
      %v277 = vsel %vm251, %v243, 0
      %v280 = vsel %vm251, %v244, 0
      %v283 = vsel %vm251, %v245, 0
      %v286 = vsel %vm251, %v246, 0
      %v289 = vsel %vm251, %v247, 0
      %v292 = vsel %vm251, %v248, 0
      %v295 = vsel %vm251, %v249, 0
      %v298 = vsel %vm251, %v250, 0
      %300 = vmatprep.subr.mxu0 %v234
      %301 = vmatpush1.msra.mxu0 %v233
      %302 = vmatprep.subr.mxu0 0.0
      %303 = vmatpush1.msra.mxu0 0.0
      %304 = vmatprep.subr.mxu0 0.0
      %305 = vmatpush1.msra.mxu0 0.0
      %306 = vmatprep.subr.mxu0 0.0
      %307 = vmatpush1.msra.mxu0 0.0
      %308 = vmatprep.subr.mxu0 0.0
      %309 = vmatpush1.msra.mxu0 0.0
      %310 = vmatprep.subr.mxu0 0.0
      %311 = vmatpush1.msra.mxu0 0.0
      %312 = vmatprep.subr.mxu0 0.0
      %313 = vmatpush1.msra.mxu0 0.0
      %314 = vmatprep.subr.mxu0 0.0
      %315 = vmatpush1.msra.mxu0 0.0
      %316 = vmatprep.subr.mxu0 0.0
      %317 = vmatpush1.msra.mxu0 0.0
      %318 = vmatprep.subr.mxu0 0.0
      %319 = vmatpush1.msra.mxu0 0.0
      %320 = vmatprep.subr.mxu0 0.0
      %321 = vmatpush1.msra.mxu0 0.0
      %322 = vmatprep.subr.mxu0 0.0
      %323 = vmatpush1.msra.mxu0 0.0
      %324 = vmatprep.subr.mxu0 0.0
      %325 = vmatpush1.msra.mxu0 0.0
      %326 = vmatprep.subr.mxu0 0.0
      %327 = vmatpush1.msra.mxu0 0.0
      %328 = vmatprep.subr.mxu0 0.0
      %329 = vmatpush1.msra.mxu0 0.0
      %330 = vmatprep.subr.mxu0 0.0
      %331 = vmatpush1.msra.mxu0 0.0
      %332 = vmatprep.subr.mxu0 0.0
      %333 = vmatpush1.msra.mxu0 0.0
      %334 = vmatprep.subr.mxu0 0.0
      %335 = vmatpush1.msra.mxu0 0.0
      %336 = vmatprep.subr.mxu0 0.0
      %337 = vmatpush1.msra.mxu0 0.0
      %338 = vmatprep.subr.mxu0 0.0
      %339 = vmatpush1.msra.mxu0 0.0
      %340 = vmatprep.subr.mxu0 0.0
      %341 = vmatpush1.msra.mxu0 0.0
      %342 = vmatprep.subr.mxu0 0.0
      %343 = vmatpush1.msra.mxu0 0.0
      %344 = vmatprep.subr.mxu0 0.0
      %345 = vmatpush1.msra.mxu0 0.0
      %346 = vmatprep.subr.mxu0 0.0
      %347 = vmatpush1.msra.mxu0 0.0
      %348 = vmatprep.subr.mxu0 0.0
      %349 = vmatpush1.msra.mxu0 0.0
      %350 = vmatprep.subr.mxu0 0.0
      %351 = vmatpush1.msra.mxu0 0.0
      %352 = vmatprep.subr.mxu0 0.0
      %353 = vmatpush1.msra.mxu0 0.0
      %354 = vmatprep.subr.mxu0 0.0
      %355 = vmatpush1.msra.mxu0 0.0
      %356 = vmatprep.subr.mxu0 0.0
      %357 = vmatpush1.msra.mxu0 0.0
      %358 = vmatprep.subr.mxu0 0.0
      %359 = vmatpush1.msra.mxu0 0.0
      %360 = vmatprep.subr.mxu0 0.0
      %361 = vmatpush1.msra.mxu0 0.0
      %362 = vmatprep.subr.mxu0 0.0
      %363 = vmatpush1.msra.mxu0 0.0
      %364 = vmatprep.mubr.f32.mxu0 0.0
      %365 = vmatmul.mubr.f32.gmra.mrb[0].mxu0 %v253
      %v366 = vpop.f32.mrb[0].mxu0
      %v367 = vadd.f32 0.0, %v366
      %v368 = vpop.f32.mrb[0].mxu0
      %v369 = vadd.f32 0.0, %v368
      %370 = vmatprep.mubr.f32.mxu0 0.0
      %371 = vmatmul.mubr.f32.gmra.mrb[0].mxu0 %v256
      %v372 = vpop.f32.mrb[0].mxu0
      %v373 = vadd.f32 0.0, %v372
      %v374 = vpop.f32.mrb[0].mxu0
      %v375 = vadd.f32 0.0, %v374
      %376 = vmatprep.mubr.f32.mxu0 0.0
      %377 = vmatmul.mubr.f32.gmra.mrb[0].mxu0 %v259
      %v378 = vpop.f32.mrb[0].mxu0
      %v379 = vadd.f32 0.0, %v378
      %v380 = vpop.f32.mrb[0].mxu0
      %v381 = vadd.f32 0.0, %v380
      %382 = vmatprep.mubr.f32.mxu0 0.0
      %383 = vmatmul.mubr.f32.gmra.mrb[0].mxu0 %v262
      %v384 = vpop.f32.mrb[0].mxu0
      %v385 = vadd.f32 0.0, %v384
      %v386 = vpop.f32.mrb[0].mxu0
      %v387 = vadd.f32 0.0, %v386
      %388 = vmatprep.mubr.f32.mxu0 0.0
      %389 = vmatmul.mubr.f32.gmra.mrb[0].mxu0 %v265
      %v390 = vpop.f32.mrb[0].mxu0
      %v391 = vadd.f32 0.0, %v390
      %v392 = vpop.f32.mrb[0].mxu0
      %v393 = vadd.f32 0.0, %v392
      %394 = vmatprep.mubr.f32.mxu0 0.0
      %395 = vmatmul.mubr.f32.gmra.mrb[0].mxu0 %v268
      %v396 = vpop.f32.mrb[0].mxu0
      %v397 = vadd.f32 0.0, %v396
      %v398 = vpop.f32.mrb[0].mxu0
      %v399 = vadd.f32 0.0, %v398
      %400 = vmatprep.mubr.f32.mxu0 0.0
      %401 = vmatmul.mubr.f32.gmra.mrb[0].mxu0 %v271
      %v402 = vpop.f32.mrb[0].mxu0
      %v403 = vadd.f32 0.0, %v402
      %v404 = vpop.f32.mrb[0].mxu0
      %v405 = vadd.f32 0.0, %v404
      %406 = vmatprep.mubr.f32.mxu0 0.0
      %407 = vmatmul.mubr.f32.gmra.mrb[0].mxu0 %v274
      %v408 = vpop.f32.mrb[0].mxu0
      %v409 = vadd.f32 0.0, %v408
      %v410 = vpop.f32.mrb[0].mxu0
      %v411 = vadd.f32 0.0, %v410
      %412 = vmatprep.mubr.f32.mxu0 0.0
      %413 = vmatmul.mubr.f32.gmra.mrb[0].mxu0 %v277
      %v414 = vpop.f32.mrb[0].mxu0
      %v415 = vadd.f32 0.0, %v414
      %v416 = vpop.f32.mrb[0].mxu0
      %v417 = vadd.f32 0.0, %v416
      %418 = vmatprep.mubr.f32.mxu0 0.0
      %419 = vmatmul.mubr.f32.gmra.mrb[0].mxu0 %v280
      %v420 = vpop.f32.mrb[0].mxu0
      %v421 = vadd.f32 0.0, %v420
      %v422 = vpop.f32.mrb[0].mxu0
      %v423 = vadd.f32 0.0, %v422
      %424 = vmatprep.mubr.f32.mxu0 0.0
      %425 = vmatmul.mubr.f32.gmra.mrb[0].mxu0 %v283
      %v426 = vpop.f32.mrb[0].mxu0
      %v427 = vadd.f32 0.0, %v426
      %v428 = vpop.f32.mrb[0].mxu0
      %v429 = vadd.f32 0.0, %v428
      %430 = vmatprep.mubr.f32.mxu0 0.0
      %431 = vmatmul.mubr.f32.gmra.mrb[0].mxu0 %v286
      %v432 = vpop.f32.mrb[0].mxu0
      %v433 = vadd.f32 0.0, %v432
      %v434 = vpop.f32.mrb[0].mxu0
      %v435 = vadd.f32 0.0, %v434
      %436 = vmatprep.mubr.f32.mxu0 0.0
      %437 = vmatmul.mubr.f32.gmra.mrb[0].mxu0 %v289
      %v438 = vpop.f32.mrb[0].mxu0
      %v439 = vadd.f32 0.0, %v438
      %v440 = vpop.f32.mrb[0].mxu0
      %v441 = vadd.f32 0.0, %v440
      %442 = vmatprep.mubr.f32.mxu0 0.0
      %443 = vmatmul.mubr.f32.gmra.mrb[0].mxu0 %v292
      %v444 = vpop.f32.mrb[0].mxu0
      %v445 = vadd.f32 0.0, %v444
      %v446 = vpop.f32.mrb[0].mxu0
      %v447 = vadd.f32 0.0, %v446
      %448 = vmatprep.mubr.f32.mxu0 0.0
      %449 = vmatmul.mubr.f32.gmra.mrb[0].mxu0 %v295
      %v450 = vpop.f32.mrb[0].mxu0
      %v451 = vadd.f32 0.0, %v450
      %v452 = vpop.f32.mrb[0].mxu0
      %v453 = vadd.f32 0.0, %v452
      %454 = vmatprep.mubr.f32.mxu0 0.0
      %455 = vmatmul.mubr.f32.gmra.mrb[0].mxu0 %v298
      %v456 = vpop.f32.mrb[0].mxu0
      %v457 = vadd.f32 0.0, %v456
      %v458 = vpop.f32.mrb[0].mxu0
      %v459 = vadd.f32 0.0, %v458
      %460 = vdwg.mxu0
      %v461 = vmax.f32 %v367, 0.0
      %v462 = vmax.f32 %v369, 0.0
      %v463 = vmax.f32 %v373, 0.0
      %v464 = vmax.f32 %v375, 0.0
      %v465 = vmax.f32 %v379, 0.0
      %v466 = vmax.f32 %v381, 0.0
      %v467 = vmax.f32 %v385, 0.0
      %v468 = vmax.f32 %v387, 0.0
      %v469 = vmax.f32 %v391, 0.0
      %v470 = vmax.f32 %v393, 0.0
      %v471 = vmax.f32 %v397, 0.0
      %v472 = vmax.f32 %v399, 0.0
      %v473 = vmax.f32 %v403, 0.0
      %v474 = vmax.f32 %v405, 0.0
      %v475 = vmax.f32 %v409, 0.0
      %v476 = vmax.f32 %v411, 0.0
      %v477 = vmax.f32 %v415, 0.0
      %v478 = vmax.f32 %v417, 0.0
      %v479 = vmax.f32 %v421, 0.0
      %v480 = vmax.f32 %v423, 0.0
      %v481 = vmax.f32 %v427, 0.0
      %v482 = vmax.f32 %v429, 0.0
      %v483 = vmax.f32 %v433, 0.0
      %v484 = vmax.f32 %v435, 0.0
      %v485 = vmax.f32 %v439, 0.0
      %v486 = vmax.f32 %v441, 0.0
      %v487 = vmax.f32 %v445, 0.0
      %v488 = vmax.f32 %v447, 0.0
      %v489 = vmax.f32 %v451, 0.0
      %v490 = vmax.f32 %v453, 0.0
      %v491 = vmax.f32 %v457, 0.0
      %v492 = vmax.f32 %v459, 0.0
      %493 = vst [vmem:[%s222] sm:$0xff] %v461
      %494 = vst [vmem:[%s222 + $0x8] sm:$0xff] %v462
      %495 = vst [vmem:[%s222 + $0x10] sm:$0xff] %v463
      %496 = vst [vmem:[%s222 + $0x18] sm:$0xff] %v464
      %497 = vst [vmem:[%s222 + $0x20] sm:$0xff] %v465
      %498 = vst [vmem:[%s222 + $0x28] sm:$0xff] %v466
      %499 = vst [vmem:[%s222 + $0x30] sm:$0xff] %v467
      %500 = vst [vmem:[%s222 + $0x38] sm:$0xff] %v468
      %501 = vst [vmem:[%s222 + $0x40] sm:$0xff] %v469
      %502 = vst [vmem:[%s222 + $0x48] sm:$0xff] %v470
      %503 = vst [vmem:[%s222 + $0x50] sm:$0xff] %v471
      %504 = vst [vmem:[%s222 + $0x58] sm:$0xff] %v472
      %505 = vst [vmem:[%s222 + $0x60] sm:$0xff] %v473
      %506 = vst [vmem:[%s222 + $0x68] sm:$0xff] %v474
      %507 = vst [vmem:[%s222 + $0x70] sm:$0xff] %v475
      %508 = vst [vmem:[%s222 + $0x78] sm:$0xff] %v476
      %509 = vst [vmem:[%s222 + $0x80] sm:$0xff] %v477
      %510 = vst [vmem:[%s222 + $0x88] sm:$0xff] %v478
      %511 = vst [vmem:[%s222 + $0x90] sm:$0xff] %v479
      %512 = vst [vmem:[%s222 + $0x98] sm:$0xff] %v480
      %513 = vst [vmem:[%s222 + $0xa0] sm:$0xff] %v481
      %514 = vst [vmem:[%s222 + $0xa8] sm:$0xff] %v482
      %515 = vst [vmem:[%s222 + $0xb0] sm:$0xff] %v483
      %516 = vst [vmem:[%s222 + $0xb8] sm:$0xff] %v484
      %517 = vst [vmem:[%s222 + $0xc0] sm:$0xff] %v485
      %518 = vst [vmem:[%s222 + $0xc8] sm:$0xff] %v486
      %519 = vst [vmem:[%s222 + $0xd0] sm:$0xff] %v487
      %520 = vst [vmem:[%s222 + $0xd8] sm:$0xff] %v488
      %521 = vst [vmem:[%s222 + $0xe0] sm:$0xff] %v489
      %522 = vst [vmem:[%s222 + $0xe8] sm:$0xff] %v490
      %523 = vst [vmem:[%s222 + $0xf0] sm:$0xff] %v491
      %524 = vst [vmem:[%s222 + $0xf8] sm:$0xff] %v492
      %v525 = vadd.f32 %v461, %v462
      %526 = vadd.xlane.f32.xlu0 %v525
      %v527 = vpop.xlane.xlu0 %526
      %v528 = vadd.f32 %v463, %v464
      %529 = vadd.xlane.f32.xlu0 %v528
      %v530 = vpop.xlane.xlu0 %529
      %v531 = vadd.f32 %v465, %v466
      %532 = vadd.xlane.f32.xlu0 %v531
      %v533 = vpop.xlane.xlu0 %532
      %v534 = vadd.f32 %v467, %v468
      %535 = vadd.xlane.f32.xlu0 %v534
      %v536 = vpop.xlane.xlu0 %535
      %v537 = vadd.f32 %v469, %v470
      %538 = vadd.xlane.f32.xlu0 %v537
      %v539 = vpop.xlane.xlu0 %538
      %v540 = vadd.f32 %v471, %v472
      %541 = vadd.xlane.f32.xlu0 %v540
      %v542 = vpop.xlane.xlu0 %541
      %v543 = vadd.f32 %v473, %v474
      %544 = vadd.xlane.f32.xlu0 %v543
      %v545 = vpop.xlane.xlu0 %544
      %v546 = vadd.f32 %v475, %v476
      %547 = vadd.xlane.f32.xlu0 %v546
      %v548 = vpop.xlane.xlu0 %547
      %v549 = vadd.f32 %v477, %v478
      %550 = vadd.xlane.f32.xlu0 %v549
      %v551 = vpop.xlane.xlu0 %550
      %v552 = vadd.f32 %v479, %v480
      %553 = vadd.xlane.f32.xlu0 %v552
      %v554 = vpop.xlane.xlu0 %553
      %v555 = vadd.f32 %v481, %v482
      %556 = vadd.xlane.f32.xlu0 %v555
      %v557 = vpop.xlane.xlu0 %556
      %v558 = vadd.f32 %v483, %v484
      %559 = vadd.xlane.f32.xlu0 %v558
      %v560 = vpop.xlane.xlu0 %559
      %v561 = vadd.f32 %v485, %v486
      %562 = vadd.xlane.f32.xlu0 %v561
      %v563 = vpop.xlane.xlu0 %562
      %v564 = vadd.f32 %v487, %v488
      %565 = vadd.xlane.f32.xlu0 %v564
      %v566 = vpop.xlane.xlu0 %565
      %v567 = vadd.f32 %v489, %v490
      %568 = vadd.xlane.f32.xlu0 %v567
      %v569 = vpop.xlane.xlu0 %568
      %v570 = vadd.f32 %v491, %v492
      %571 = vadd.xlane.f32.xlu0 %v570
      %v572 = vpop.xlane.xlu0 %571
      %vm573 = vcmask 7168
      %574 = vst.msk [vmem:[%s232] sm:$0xff] %vm573, %v527
      %575 = vst.msk [vmem:[%s232 + $0x8] sm:$0xff] %vm573, %v530
      %576 = vst.msk [vmem:[%s232 + $0x10] sm:$0xff] %vm573, %v533
      %577 = vst.msk [vmem:[%s232 + $0x18] sm:$0xff] %vm573, %v536
      %578 = vst.msk [vmem:[%s232 + $0x20] sm:$0xff] %vm573, %v539
      %579 = vst.msk [vmem:[%s232 + $0x28] sm:$0xff] %vm573, %v542
      %580 = vst.msk [vmem:[%s232 + $0x30] sm:$0xff] %vm573, %v545
      %581 = vst.msk [vmem:[%s232 + $0x38] sm:$0xff] %vm573, %v548
      %582 = vst.msk [vmem:[%s232 + $0x40] sm:$0xff] %vm573, %v551
      %583 = vst.msk [vmem:[%s232 + $0x48] sm:$0xff] %vm573, %v554
      %584 = vst.msk [vmem:[%s232 + $0x50] sm:$0xff] %vm573, %v557
      %585 = vst.msk [vmem:[%s232 + $0x58] sm:$0xff] %vm573, %v560
      %586 = vst.msk [vmem:[%s232 + $0x60] sm:$0xff] %vm573, %v563
      %587 = vst.msk [vmem:[%s232 + $0x68] sm:$0xff] %vm573, %v566
      %588 = vst.msk [vmem:[%s232 + $0x70] sm:$0xff] %vm573, %v569
      %589 = vst.msk [vmem:[%s232 + $0x78] sm:$0xff] %vm573, %v572
      %v590 = vmul.f32 %v461, %v461
      %v591 = vmul.f32 %v462, %v462
      %v592 = vmul.f32 %v463, %v463
      %v593 = vmul.f32 %v464, %v464
      %v594 = vmul.f32 %v465, %v465
      %v595 = vmul.f32 %v466, %v466
      %v596 = vmul.f32 %v467, %v467
      %v597 = vmul.f32 %v468, %v468
      %v598 = vmul.f32 %v469, %v469
      %v599 = vmul.f32 %v470, %v470
      %v600 = vmul.f32 %v471, %v471
      %v601 = vmul.f32 %v472, %v472
      %v602 = vmul.f32 %v473, %v473
      %v603 = vmul.f32 %v474, %v474
      %v604 = vmul.f32 %v475, %v475
      %v605 = vmul.f32 %v476, %v476
      %v606 = vmul.f32 %v477, %v477
      %v607 = vmul.f32 %v478, %v478
      %v608 = vmul.f32 %v479, %v479
      %v609 = vmul.f32 %v480, %v480
      %v610 = vmul.f32 %v481, %v481
      %v611 = vmul.f32 %v482, %v482
      %v612 = vmul.f32 %v483, %v483
      %v613 = vmul.f32 %v484, %v484
      %v614 = vmul.f32 %v485, %v485
      %v615 = vmul.f32 %v486, %v486
      %v616 = vmul.f32 %v487, %v487
      %v617 = vmul.f32 %v488, %v488
      %v618 = vmul.f32 %v489, %v489
      %v619 = vmul.f32 %v490, %v490
      %v620 = vmul.f32 %v491, %v491
      %v621 = vmul.f32 %v492, %v492
      %v622 = vadd.f32 %v590, %v591
      %623 = vadd.xlane.f32.xlu0 %v622
      %v624 = vpop.xlane.xlu0 %623
      %v625 = vadd.f32 %v592, %v593
      %626 = vadd.xlane.f32.xlu0 %v625
      %v627 = vpop.xlane.xlu0 %626
      %v628 = vadd.f32 %v594, %v595
      %629 = vadd.xlane.f32.xlu0 %v628
      %v630 = vpop.xlane.xlu0 %629
      %v631 = vadd.f32 %v596, %v597
      %632 = vadd.xlane.f32.xlu0 %v631
      %v633 = vpop.xlane.xlu0 %632
      %v634 = vadd.f32 %v598, %v599
      %635 = vadd.xlane.f32.xlu0 %v634
      %v636 = vpop.xlane.xlu0 %635
      %v637 = vadd.f32 %v600, %v601
      %638 = vadd.xlane.f32.xlu0 %v637
      %v639 = vpop.xlane.xlu0 %638
      %v640 = vadd.f32 %v602, %v603
      %641 = vadd.xlane.f32.xlu0 %v640
      %v642 = vpop.xlane.xlu0 %641
      %v643 = vadd.f32 %v604, %v605
      %644 = vadd.xlane.f32.xlu0 %v643
      %v645 = vpop.xlane.xlu0 %644
      %v646 = vadd.f32 %v606, %v607
      %647 = vadd.xlane.f32.xlu0 %v646
      %v648 = vpop.xlane.xlu0 %647
      %v649 = vadd.f32 %v608, %v609
      %650 = vadd.xlane.f32.xlu0 %v649
      %v651 = vpop.xlane.xlu0 %650
      %v652 = vadd.f32 %v610, %v611
      %653 = vadd.xlane.f32.xlu0 %v652
      %v654 = vpop.xlane.xlu0 %653
      %v655 = vadd.f32 %v612, %v613
      %656 = vadd.xlane.f32.xlu0 %v655
      %v657 = vpop.xlane.xlu0 %656
      %v658 = vadd.f32 %v614, %v615
      %659 = vadd.xlane.f32.xlu0 %v658
      %v660 = vpop.xlane.xlu0 %659
      %v661 = vadd.f32 %v616, %v617
      %662 = vadd.xlane.f32.xlu0 %v661
      %v663 = vpop.xlane.xlu0 %662
      %v664 = vadd.f32 %v618, %v619
      %665 = vadd.xlane.f32.xlu0 %v664
      %v666 = vpop.xlane.xlu0 %665
      %v667 = vadd.f32 %v620, %v621
      %668 = vadd.xlane.f32.xlu0 %v667
      %v669 = vpop.xlane.xlu0 %668
      %vm670 = vcmask 15368
      %671 = vst.msk [vmem:[%s232] sm:$0xff] %vm670, %v624
      %672 = vst.msk [vmem:[%s232 + $0x8] sm:$0xff] %vm670, %v627
      %673 = vst.msk [vmem:[%s232 + $0x10] sm:$0xff] %vm670, %v630
      %674 = vst.msk [vmem:[%s232 + $0x18] sm:$0xff] %vm670, %v633
      %675 = vst.msk [vmem:[%s232 + $0x20] sm:$0xff] %vm670, %v636
      %676 = vst.msk [vmem:[%s232 + $0x28] sm:$0xff] %vm670, %v639
      %677 = vst.msk [vmem:[%s232 + $0x30] sm:$0xff] %vm670, %v642
      %678 = vst.msk [vmem:[%s232 + $0x38] sm:$0xff] %vm670, %v645
      %679 = vst.msk [vmem:[%s232 + $0x40] sm:$0xff] %vm670, %v648
      %680 = vst.msk [vmem:[%s232 + $0x48] sm:$0xff] %vm670, %v651
      %681 = vst.msk [vmem:[%s232 + $0x50] sm:$0xff] %vm670, %v654
      %682 = vst.msk [vmem:[%s232 + $0x58] sm:$0xff] %vm670, %v657
      %683 = vst.msk [vmem:[%s232 + $0x60] sm:$0xff] %vm670, %v660
      %684 = vst.msk [vmem:[%s232 + $0x68] sm:$0xff] %vm670, %v663
      %685 = vst.msk [vmem:[%s232 + $0x70] sm:$0xff] %vm670, %v666
      %686 = vst.msk [vmem:[%s232 + $0x78] sm:$0xff] %vm670, %v669
      %s687 = smul.u32 2, %s20
      %p688 = scmp.lt.s32.totalorder %s19, 1
      %s689 = scalar_select %p688, %s19, 1
      %p690 = scmp.lt.s32.totalorder %s687, 1
      %s691 = scalar_select %p690, %s687, 1
      %s692 = smul.addr %s689, 32
      %s693 = sadd.s32 %s691, %s692
      %s694 = smul.addr %s693, 8
      %s695 = scalar_lea.vmem %s2, %s694
      %p696 = scmp.lt.s32.totalorder %s19, 1
      %s697 = scalar_select %p696, %s19, 1
      %p698 = scmp.lt.s32.totalorder %s20, 0
      %s699 = scalar_select %p698, %s20, 0
      %s700 = smul.addr %s699, 16
      %s701 = smul.addr %s697, 16
      %s702 = sadd.s32 %s700, %s701
      %s703 = smul.addr %s702, 8
      %s704 = scalar_lea.vmem %s3, %s703
      // Predicated region
      $region29: #{bottleneck_block.3} parent=27 // pred_check
        %p705 = pneg %p96
      $region30: #{bottleneck_block.3} parent=27 // pred_check_branch
        %707 = sbr.rel (%p705) target = $region32
      $region31: #{bottleneck_block.3} parent=27 // pred_region
        %s708 = smul.u32 2, %s20
      $region32: #{bottleneck_block.3} parent=27 // pred_fallthru
        _
      // Predicated region
      $region33: #{bottleneck_block.3} parent=27 // pred_check
        %p709 = pneg %p124
      $region34: #{bottleneck_block.3} parent=27 // pred_check_branch
        %711 = sbr.rel (%p709) target = $region36
      $region35: #{bottleneck_block.3} parent=27 // pred_region
        _
      $region36: #{bottleneck_block.3} parent=27 // pred_fallthru
        _
    $region28: #{bottleneck_block.3} parent=5 // pred_fallthru
      _
    %p712 = scmp.le.s32.totalorder 2, %s10
    // Predicated region
    $region37: #{bottleneck_block.3} parent=5 // pred_check
      %p713 = pneg %p712
    $region38: #{bottleneck_block.3} parent=5 // pred_check_branch
      %715 = sbr.rel (%p713) target = $region40
    $region39: #{bottleneck_block.3} parent=5 // pred_region
      %s716 = ssub.s32 %s10, 2
      // Predicated region
      $region41: #{bottleneck_block.3} parent=39 // pred_check
        %p717 = pneg %p102
      $region42: #{bottleneck_block.3} parent=39 // pred_check_branch
        %719 = sbr.rel (%p717) target = $region44
      $region43: #{bottleneck_block.3} parent=39 // pred_region
        %s720 = smul.u32 2, %s22
        %p721 = scmp.lt.s32.totalorder %s21, 1
        %s722 = scalar_select %p721, %s21, 1
        %p723 = scmp.lt.s32.totalorder %s720, 1
        %s724 = scalar_select %p723, %s720, 1
        %s725 = smul.addr %s722, 32
        %s726 = sadd.s32 %s724, %s725
        %s727 = smul.addr %s726, 8
        %s728 = scalar_lea.vmem %s2, %s727
      $region44: #{bottleneck_block.3} parent=39 // pred_fallthru
        _
      // Predicated region
      $region45: #{bottleneck_block.3} parent=39 // pred_check
        %p729 = pneg %p130
      $region46: #{bottleneck_block.3} parent=39 // pred_check_branch
        %731 = sbr.rel (%p729) target = $region48
      $region47: #{bottleneck_block.3} parent=39 // pred_region
        %p732 = scmp.lt.s32.totalorder %s21, 1
        %s733 = scalar_select %p732, %s21, 1
        %p734 = scmp.lt.s32.totalorder %s22, 0
        %s735 = scalar_select %p734, %s22, 0
        %s736 = smul.addr %s735, 16
        %s737 = smul.addr %s733, 16
        %s738 = sadd.s32 %s736, %s737
        %s739 = smul.addr %s738, 8
        %s740 = scalar_lea.vmem %s3, %s739
      $region48: #{bottleneck_block.3} parent=39 // pred_fallthru
        _
    $region40: #{bottleneck_block.3} parent=5 // pred_fallthru
      _
  $region6: #{bottleneck_block.3} parent=0 // loop_footer
    %s14 = sadd.s32 1, %s10
  $region7: #{bottleneck_block.3} parent=0 // loop_footer_branch
    %9 = sbr.rel target = $region3
  $region8: #{bottleneck_block.3} parent=0 // loop_exit
    _

// kernel: bottleneck_block.5
$region0: #{bottleneck_block.5}
  #allocation0 [shape = 'u32[]', space=smem, size = 0x4, offset = 0x4, fixed_abs, tag = 'smem constant byte address 0x4 - core index']
  #allocation1 [shape = 'u32[144,128]{1,0:T(1,128)}', space=vmem, size = 0x12000, scoped, tag = 'internal scratch']
  %s0 = inlined_call_operand.vmem [shape: f32[2,24,256], index: 0, kind: input, shape index: {}]
  %s1 = inlined_call_operand.vmem [shape: f32[24,1], index: 1, kind: input, shape index: {}]
  %s2 = inlined_call_operand.vmem [shape: f32[24,1], index: 2, kind: input, shape index: {}]
  %s3 = inlined_call_operand.vmem [shape: f32[2,24,256], index: 3, kind: output, shape index: {}]
  %s4 = sld [smem:[#allocation0]]
  $region45: #{bottleneck_block.5} parent=0
    _
  %s6 = ssub.s32 1, %s4
  %s7 = scalar_select 0, %s6, %s4
  loop: start=0, step=1, limit=4
  $region2: #{bottleneck_block.5} parent=0 // loop_pre_header
    _
  $region3: #{bottleneck_block.5} parent=0 // loop_header
    %s9 = sphi 0, %s13
    %p10 = scmp.ge.s32.totalorder %s9, 4
    %s16 = sphi 0, %s28
    %s17 = sphi 0, %s24
    %s18 = sphi 0, %s16
    %s19 = sphi 0, %s17
    %s20 = sphi 0, %s18
    %s21 = sphi 0, %s19
    %s33 = sphi 0, %s35
    %s36 = sphi 0, %s33
    %s37 = sphi 0, %s36
    %s53 = sphi 0, %s37
    %s57 = sphi 0, %s57
    %s59 = sphi 0, %s57
    %s60 = sphi 0, %s59
    %s74 = sphi 0, %s60
    %s78 = sphi 0, %s78
    %s80 = sphi 0, %s78
    %s81 = sphi 0, %s80
    %s95 = sphi 0, %s81
    %s103 = sphi 0, %s105
    %s106 = sphi 0, %s103
    %s107 = sphi 0, %s106
    %s123 = sphi 0, %s107
  $region4: #{bottleneck_block.5} parent=0 // loop_header_branch
    %12 = sbr.rel (%p10) target = $region8
  $region5: #{bottleneck_block.5} parent=0 // loop_body
    %s14 = ssub.s32 %s9, 1
    %s15 = ssub.s32 %s9, 2
    %s22 = sadd.s32 1, %s17
    %p23 = scmp.ge.s32.totalorder %s22, 1
    %s24 = scalar_select %p23, 0, %s22
    %s25 = sadd.s32 1, %s16
    %s26 = scalar_select %p23, %s25, %s16
    %p27 = scmp.ge.s32.totalorder %s26, 2
    %s28 = scalar_select %p27, 0, %s26
    %s29 = ssub.s32 %s16, %s28
    %s30 = ssub.s32 %s17, %s24
    %s31 = sor.u32 %s29, %s30
    %p32 = scmp.eq.s32.totalorder %s31, 0
    %s34 = sadd.s32 %s33, 1
    %s35 = scalar_select %p32, %s33, %s34
    %p38 = pneg %p32
    %p39 = scmp.eq.s32.totalorder %s9, 1
    %p40 = por %p38, %p39
    %p41 = scmp.ne.s32.totalorder %s33, %s36
    %p42 = scmp.eq.s32.totalorder %s9, 0
    %p43 = por %p41, %p42
    %p44 = scmp.ne.s32.totalorder %s33, %s36
    %p45 = scmp.eq.s32.totalorder %s14, 1
    %p46 = por %p44, %p45
    %p47 = scmp.ne.s32.totalorder %s36, %s37
    %p48 = scmp.eq.s32.totalorder %s14, 0
    %p49 = por %p47, %p48
    %p50 = scmp.ne.s32.totalorder %s36, %s37
    %p51 = scmp.eq.s32.totalorder %s15, 1
    %p52 = por %p50, %p51
    %p54 = scmp.ne.s32.totalorder %s37, %s53
    %p55 = scmp.eq.s32.totalorder %s15, 0
    %p56 = por %p54, %p55
    %s58 = sadd.s32 %s57, 1
    %p61 = scmp.eq.s32.totalorder %s9, 1
    %p62 = scmp.ne.s32.totalorder %s57, %s59
    %p63 = scmp.eq.s32.totalorder %s9, 0
    %p64 = por %p62, %p63
    %p65 = scmp.ne.s32.totalorder %s57, %s59
    %p66 = scmp.eq.s32.totalorder %s14, 1
    %p67 = por %p65, %p66
    %p68 = scmp.ne.s32.totalorder %s59, %s60
    %p69 = scmp.eq.s32.totalorder %s14, 0
    %p70 = por %p68, %p69
    %p71 = scmp.ne.s32.totalorder %s59, %s60
    %p72 = scmp.eq.s32.totalorder %s15, 1
    %p73 = por %p71, %p72
    %p75 = scmp.ne.s32.totalorder %s60, %s74
    %p76 = scmp.eq.s32.totalorder %s15, 0
    %p77 = por %p75, %p76
    %s79 = sadd.s32 %s78, 1
    %p82 = scmp.eq.s32.totalorder %s9, 1
    %p83 = scmp.ne.s32.totalorder %s78, %s80
    %p84 = scmp.eq.s32.totalorder %s9, 0
    %p85 = por %p83, %p84
    %p86 = scmp.ne.s32.totalorder %s78, %s80
    %p87 = scmp.eq.s32.totalorder %s14, 1
    %p88 = por %p86, %p87
    %p89 = scmp.ne.s32.totalorder %s80, %s81
    %p90 = scmp.eq.s32.totalorder %s14, 0
    %p91 = por %p89, %p90
    %p92 = scmp.ne.s32.totalorder %s80, %s81
    %p93 = scmp.eq.s32.totalorder %s15, 1
    %p94 = por %p92, %p93
    %p96 = scmp.ne.s32.totalorder %s81, %s95
    %p97 = scmp.eq.s32.totalorder %s15, 0
    %p98 = por %p96, %p97
    %s99 = ssub.s32 %s16, %s28
    %s100 = ssub.s32 %s17, %s24
    %s101 = sor.u32 %s99, %s100
    %p102 = scmp.eq.s32.totalorder %s101, 0
    %s104 = sadd.s32 %s103, 1
    %s105 = scalar_select %p102, %s103, %s104
    %p108 = pneg %p102
    %p109 = scmp.eq.s32.totalorder %s9, 1
    %p110 = por %p108, %p109
    %p111 = scmp.ne.s32.totalorder %s103, %s106
    %p112 = scmp.eq.s32.totalorder %s9, 0
    %p113 = por %p111, %p112
    %p114 = scmp.ne.s32.totalorder %s103, %s106
    %p115 = scmp.eq.s32.totalorder %s14, 1
    %p116 = por %p114, %p115
    %p117 = scmp.ne.s32.totalorder %s106, %s107
    %p118 = scmp.eq.s32.totalorder %s14, 0
    %p119 = por %p117, %p118
    %p120 = scmp.ne.s32.totalorder %s106, %s107
    %p121 = scmp.eq.s32.totalorder %s15, 1
    %p122 = por %p120, %p121
    %p124 = scmp.ne.s32.totalorder %s107, %s123
    %p125 = scmp.eq.s32.totalorder %s15, 0
    %p126 = por %p124, %p125
    %p127 = scmp.le.s32.totalorder 1, %s9
    %p128 = scmp.lt.s32.totalorder %s9, 3
    %p129 = pnand %p127, %p128
    %p130 = pneg %p129
    // Predicated region
    $region9: #{bottleneck_block.5} parent=5 // pred_check
      _
    $region10: #{bottleneck_block.5} parent=5 // pred_check_branch
      %132 = sbr.rel (%p129) target = $region12
    $region11: #{bottleneck_block.5} parent=5 // pred_region
      %s133 = ssub.s32 %s9, 1
      // Predicated region
      $region13: #{bottleneck_block.5} parent=11 // pred_check
        %p134 = pneg %p70
      $region14: #{bottleneck_block.5} parent=11 // pred_check_branch
        %136 = sbr.rel (%p134) target = $region16
      $region15: #{bottleneck_block.5} parent=11 // pred_region
        _
      $region16: #{bottleneck_block.5} parent=11 // pred_fallthru
        _
      // Predicated region
      $region17: #{bottleneck_block.5} parent=11 // pred_check
        %p137 = pneg %p91
      $region18: #{bottleneck_block.5} parent=11 // pred_check_branch
        %139 = sbr.rel (%p137) target = $region20
      $region19: #{bottleneck_block.5} parent=11 // pred_region
        _
      $region20: #{bottleneck_block.5} parent=11 // pred_fallthru
        _
    $region12: #{bottleneck_block.5} parent=5 // pred_fallthru
      _
    %p140 = scmp.lt.s32.totalorder %s9, 2
    // Predicated region
    $region21: #{bottleneck_block.5} parent=5 // pred_check
      %p141 = pneg %p140
    $region22: #{bottleneck_block.5} parent=5 // pred_check_branch
      %143 = sbr.rel (%p141) target = $region24
    $region23: #{bottleneck_block.5} parent=5 // pred_region
      // Predicated region
      $region25: #{bottleneck_block.5} parent=23 // pred_check
        %p144 = pneg %p43
      $region26: #{bottleneck_block.5} parent=23 // pred_check_branch
        %146 = sbr.rel (%p144) target = $region28
      $region27: #{bottleneck_block.5} parent=23 // pred_region
        %s147 = smul.u32 2, %s17
        %p148 = scmp.lt.s32.totalorder %s16, 1
        %s149 = scalar_select %p148, %s16, 1
        %p150 = scmp.lt.s32.totalorder %s147, 1
        %s151 = scalar_select %p150, %s147, 1
        %s152 = smul.addr %s149, 6
        %s153 = sadd.s32 %s151, %s152
        %s154 = smul.addr %s153, 8
        %s155 = scalar_lea.vmem %s0, %s154
        %s156 = smul.u32 2, %s17
      $region28: #{bottleneck_block.5} parent=23 // pred_fallthru
        _
    $region24: #{bottleneck_block.5} parent=5 // pred_fallthru
      _
    %p157 = scmp.le.s32.totalorder 1, %s9
    %p158 = scmp.lt.s32.totalorder %s9, 3
    %p159 = pnand %p157, %p158
    %p160 = pneg %p159
    // Predicated region
    $region29: #{bottleneck_block.5} parent=5 // pred_check
      _
    $region30: #{bottleneck_block.5} parent=5 // pred_check_branch
      %162 = sbr.rel (%p159) target = $region32
    $region31: #{bottleneck_block.5} parent=5 // pred_region
      %s163 = ssub.s32 %s9, 1
      %s164 = smul.u32 2, %s19
      %p165 = scmp.lt.s32.totalorder %s18, 1
      %s166 = scalar_select %p165, %s18, 1
      %p167 = scmp.lt.s32.totalorder %s164, 1
      %s168 = scalar_select %p167, %s164, 1
      %s169 = smul.addr %s166, 6
      %s170 = sadd.s32 %s168, %s169
      %s171 = smul.addr %s170, 8
      %s172 = scalar_lea.vmem %s0, %s171
      %p173 = pneg %p49
      %p174 = pneg %p46
      %p175 = pneg %p70
      %p176 = pneg %p67
      %p177 = pneg %p91
      %p178 = pneg %p88
      %p179 = pneg %p119
      %p180 = pneg %p116
      %s181 = smul.u32 2, %s19
      %p182 = scmp.lt.s32.totalorder %s18, 1
      %s183 = scalar_select %p182, %s18, 1
      %p184 = scmp.lt.s32.totalorder %s181, 1
      %s185 = scalar_select %p184, %s181, 1
      %s186 = smul.addr %s183, 6
      %s187 = sadd.s32 %s185, %s186
      %s188 = smul.addr %s187, 8
      %s189 = scalar_lea.vmem %s3, %s188
      %s190 = smul.u32 2, %s19
      %p191 = scmp.lt.s32.totalorder %s18, 1
      %s192 = scalar_select %p191, %s18, 1
      %p193 = scmp.lt.s32.totalorder %s190, 1
      %s194 = scalar_select %p193, %s190, 1
      %s195 = smul.addr %s192, 6
      %s196 = sadd.s32 %s194, %s195
      %s197 = smul.addr %s196, 8
      %s198 = scalar_lea.vmem %s0, %s197
      %s199 = smul.u32 2, %s19
      %s200 = smul.u32 2, %s19
      %p201 = scmp.lt.s32.totalorder %s18, 1
      %s202 = scalar_select %p201, %s18, 1
      %p203 = scmp.lt.s32.totalorder %s200, 1
      %s204 = scalar_select %p203, %s200, 1
      %s205 = smul.addr %s202, 6
      %s206 = sadd.s32 %s204, %s205
      %s207 = smul.addr %s206, 8
      %s208 = scalar_lea.vmem %s3, %s207
      %s209 = smul.u32 2, %s19
      %v210 = vld [vmem:[%s198] sm:$0xff]
      %v211 = vld [vmem:[%s198 + $0x8] sm:$0xff]
      %v212 = vld [vmem:[%s198 + $0x10] sm:$0xff]
      %v213 = vld [vmem:[%s198 + $0x18] sm:$0xff]
      %v214 = vld [vmem:[%s198 + $0x20] sm:$0xff]
      %v215 = vld [vmem:[%s198 + $0x28] sm:$0xff]
      %v216 = vld [vmem:[%s1] sm:$0xff]
      %v217 = vld [vmem:[%s1 + $0x8] sm:$0xff]
      %v218 = vld [vmem:[%s1 + $0x10] sm:$0xff]
      %220 = vset.pattern.permute.xlu0 0
      %221 = vperm.xlu0 %220, %v216
      %v222 = vpop.permute.xlu0 %221
      %225 = vset.pattern.permute.xlu0 0
      %226 = vperm.xlu0 %225, %v217
      %v227 = vpop.permute.xlu0 %226
      %230 = vset.pattern.permute.xlu0 0
      %231 = vperm.xlu0 %230, %v218
      %v232 = vpop.permute.xlu0 %231
      %v234 = vmul.f32 %v210, %v222
      %v235 = vmul.f32 %v211, %v222
      %v236 = vmul.f32 %v212, %v227
      %v237 = vmul.f32 %v213, %v227
      %v238 = vmul.f32 %v214, %v232
      %v239 = vmul.f32 %v215, %v232
      %v240 = vld [vmem:[%s2] sm:$0xff]
      %v241 = vld [vmem:[%s2 + $0x8] sm:$0xff]
      %v242 = vld [vmem:[%s2 + $0x10] sm:$0xff]
      %244 = vset.pattern.permute.xlu0 0
      %245 = vperm.xlu0 %244, %v240
      %v246 = vpop.permute.xlu0 %245
      %249 = vset.pattern.permute.xlu0 0
      %250 = vperm.xlu0 %249, %v241
      %v251 = vpop.permute.xlu0 %250
      %254 = vset.pattern.permute.xlu0 0
      %255 = vperm.xlu0 %254, %v242
      %v256 = vpop.permute.xlu0 %255
      %v258 = vadd.f32 %v234, %v246
      %v259 = vadd.f32 %v235, %v246
      %v260 = vadd.f32 %v236, %v251
      %v261 = vadd.f32 %v237, %v251
      %v262 = vadd.f32 %v238, %v256
      %v263 = vadd.f32 %v239, %v256
      %264 = vst [vmem:[%s208] sm:$0xff] %v258
      %265 = vst [vmem:[%s208 + $0x8] sm:$0xff] %v259
      %266 = vst [vmem:[%s208 + $0x10] sm:$0xff] %v260
      %267 = vst [vmem:[%s208 + $0x18] sm:$0xff] %v261
      %268 = vst [vmem:[%s208 + $0x20] sm:$0xff] %v262
      %269 = vst [vmem:[%s208 + $0x28] sm:$0xff] %v263
      %s270 = smul.u32 2, %s19
      %p271 = scmp.lt.s32.totalorder %s18, 1
      %s272 = scalar_select %p271, %s18, 1
      %p273 = scmp.lt.s32.totalorder %s270, 1
      %s274 = scalar_select %p273, %s270, 1
      %s275 = smul.addr %s272, 6
      %s276 = sadd.s32 %s274, %s275
      %s277 = smul.addr %s276, 8
      %s278 = scalar_lea.vmem %s3, %s277
      // Predicated region
      $region33: #{bottleneck_block.5} parent=31 // pred_check
        %p279 = pneg %p116
      $region34: #{bottleneck_block.5} parent=31 // pred_check_branch
        %281 = sbr.rel (%p279) target = $region36
      $region35: #{bottleneck_block.5} parent=31 // pred_region
        %s282 = smul.u32 2, %s19
      $region36: #{bottleneck_block.5} parent=31 // pred_fallthru
        _
    $region32: #{bottleneck_block.5} parent=5 // pred_fallthru
      _
    %p283 = scmp.le.s32.totalorder 2, %s9
    // Predicated region
    $region37: #{bottleneck_block.5} parent=5 // pred_check
      %p284 = pneg %p283
    $region38: #{bottleneck_block.5} parent=5 // pred_check_branch
      %286 = sbr.rel (%p284) target = $region40
    $region39: #{bottleneck_block.5} parent=5 // pred_region
      %s287 = ssub.s32 %s9, 2
      // Predicated region
      $region41: #{bottleneck_block.5} parent=39 // pred_check
        %p288 = pneg %p122
      $region42: #{bottleneck_block.5} parent=39 // pred_check_branch
        %290 = sbr.rel (%p288) target = $region44
      $region43: #{bottleneck_block.5} parent=39 // pred_region
        %s291 = smul.u32 2, %s21
        %p292 = scmp.lt.s32.totalorder %s20, 1
        %s293 = scalar_select %p292, %s20, 1
        %p294 = scmp.lt.s32.totalorder %s291, 1
        %s295 = scalar_select %p294, %s291, 1
        %s296 = smul.addr %s293, 6
        %s297 = sadd.s32 %s295, %s296
        %s298 = smul.addr %s297, 8
        %s299 = scalar_lea.vmem %s3, %s298
      $region44: #{bottleneck_block.5} parent=39 // pred_fallthru
        _
    $region40: #{bottleneck_block.5} parent=5 // pred_fallthru
      _
  $region6: #{bottleneck_block.5} parent=0 // loop_footer
    %s13 = sadd.s32 1, %s9
  $region7: #{bottleneck_block.5} parent=0 // loop_footer_branch
    %8 = sbr.rel target = $region3
  $region8: #{bottleneck_block.5} parent=0 // loop_exit
    _

// kernel: bottleneck_block.4
$region0: #{bottleneck_block.4}
  #allocation0 [shape = 'u32[]', space=smem, size = 0x4, offset = 0x4, fixed_abs, tag = 'smem constant byte address 0x4 - core index']
  #allocation1 [shape = 'u32[144,128]{1,0:T(1,128)}', space=vmem, size = 0x12000, scoped, tag = 'internal scratch']
  %s0 = inlined_call_operand.vmem [shape: f32[2,128,256], index: 0, kind: input, shape index: {}]
  %s1 = inlined_call_operand.vmem [shape: f32[1,128], index: 1, kind: input, shape index: {}]
  %s2 = inlined_call_operand.vmem [shape: f32[1,128], index: 2, kind: input, shape index: {}]
  %s3 = inlined_call_operand.vmem [shape: f32[3,384,128], index: 3, kind: input, shape index: {}]
  %s4 = inlined_call_operand.vmem [shape: f32[2,24,256], index: 4, kind: output, shape index: {0}]
  %s5 = inlined_call_operand.vmem [shape: f32[2,2,24], index: 5, kind: output, shape index: {1}]
  %6 = xla_tuple %s4, %s5
  %s7 = sld [smem:[#allocation0]]
  $region57: #{bottleneck_block.4} parent=0
    _
  %s9 = ssub.s32 1, %s7
  %s10 = scalar_select 0, %s9, %s7
  loop: start=0, step=1, limit=4
  $region2: #{bottleneck_block.4} parent=0 // loop_pre_header
    _
  $region3: #{bottleneck_block.4} parent=0 // loop_header
    %s12 = sphi 0, %s16
    %p13 = scmp.ge.s32.totalorder %s12, 4
    %s22 = sphi 0, %s24
    %s25 = sphi 0, %s22
    %s26 = sphi 0, %s25
    %s42 = sphi 0, %s26
    %s46 = sphi 0, %s46
    %s48 = sphi 0, %s46
    %s49 = sphi 0, %s48
    %s63 = sphi 0, %s49
    %s67 = sphi 0, %s67
    %s69 = sphi 0, %s67
    %s70 = sphi 0, %s69
    %s84 = sphi 0, %s70
    %s88 = sphi 0, %s88
    %s90 = sphi 0, %s88
    %s91 = sphi 0, %s90
    %s105 = sphi 0, %s91
    %s111 = sphi 0, %s113
    %s114 = sphi 0, %s111
    %s115 = sphi 0, %s114
    %s131 = sphi 0, %s115
    %s137 = sphi 0, %s139
    %s140 = sphi 0, %s137
    %s141 = sphi 0, %s140
    %s157 = sphi 0, %s141
  $region4: #{bottleneck_block.4} parent=0 // loop_header_branch
    %15 = sbr.rel (%p13) target = $region8
  $region5: #{bottleneck_block.4} parent=0 // loop_body
    %s17 = ssub.s32 %s12, 1
    %s18 = ssub.s32 %s12, 2
    %s19 = sadd.s32 %s12, 1
    %s20 = ssub.s32 %s12, %s19
    %p21 = scmp.eq.s32.totalorder %s20, 0
    %s23 = sadd.s32 %s22, 1
    %s24 = scalar_select %p21, %s22, %s23
    %p27 = pneg %p21
    %p28 = scmp.eq.s32.totalorder %s12, 1
    %p29 = por %p27, %p28
    %p30 = scmp.ne.s32.totalorder %s22, %s25
    %p31 = scmp.eq.s32.totalorder %s12, 0
    %p32 = por %p30, %p31
    %p33 = scmp.ne.s32.totalorder %s22, %s25
    %p34 = scmp.eq.s32.totalorder %s17, 1
    %p35 = por %p33, %p34
    %p36 = scmp.ne.s32.totalorder %s25, %s26
    %p37 = scmp.eq.s32.totalorder %s17, 0
    %p38 = por %p36, %p37
    %p39 = scmp.ne.s32.totalorder %s25, %s26
    %p40 = scmp.eq.s32.totalorder %s18, 1
    %p41 = por %p39, %p40
    %p43 = scmp.ne.s32.totalorder %s26, %s42
    %p44 = scmp.eq.s32.totalorder %s18, 0
    %p45 = por %p43, %p44
    %s47 = sadd.s32 %s46, 1
    %p50 = scmp.eq.s32.totalorder %s12, 1
    %p51 = scmp.ne.s32.totalorder %s46, %s48
    %p52 = scmp.eq.s32.totalorder %s12, 0
    %p53 = por %p51, %p52
    %p54 = scmp.ne.s32.totalorder %s46, %s48
    %p55 = scmp.eq.s32.totalorder %s17, 1
    %p56 = por %p54, %p55
    %p57 = scmp.ne.s32.totalorder %s48, %s49
    %p58 = scmp.eq.s32.totalorder %s17, 0
    %p59 = por %p57, %p58
    %p60 = scmp.ne.s32.totalorder %s48, %s49
    %p61 = scmp.eq.s32.totalorder %s18, 1
    %p62 = por %p60, %p61
    %p64 = scmp.ne.s32.totalorder %s49, %s63
    %p65 = scmp.eq.s32.totalorder %s18, 0
    %p66 = por %p64, %p65
    %s68 = sadd.s32 %s67, 1
    %p71 = scmp.eq.s32.totalorder %s12, 1
    %p72 = scmp.ne.s32.totalorder %s67, %s69
    %p73 = scmp.eq.s32.totalorder %s12, 0
    %p74 = por %p72, %p73
    %p75 = scmp.ne.s32.totalorder %s67, %s69
    %p76 = scmp.eq.s32.totalorder %s17, 1
    %p77 = por %p75, %p76
    %p78 = scmp.ne.s32.totalorder %s69, %s70
    %p79 = scmp.eq.s32.totalorder %s17, 0
    %p80 = por %p78, %p79
    %p81 = scmp.ne.s32.totalorder %s69, %s70
    %p82 = scmp.eq.s32.totalorder %s18, 1
    %p83 = por %p81, %p82
    %p85 = scmp.ne.s32.totalorder %s70, %s84
    %p86 = scmp.eq.s32.totalorder %s18, 0
    %p87 = por %p85, %p86
    %s89 = sadd.s32 %s88, 1
    %p92 = scmp.eq.s32.totalorder %s12, 1
    %p93 = scmp.ne.s32.totalorder %s88, %s90
    %p94 = scmp.eq.s32.totalorder %s12, 0
    %p95 = por %p93, %p94
    %p96 = scmp.ne.s32.totalorder %s88, %s90
    %p97 = scmp.eq.s32.totalorder %s17, 1
    %p98 = por %p96, %p97
    %p99 = scmp.ne.s32.totalorder %s90, %s91
    %p100 = scmp.eq.s32.totalorder %s17, 0
    %p101 = por %p99, %p100
    %p102 = scmp.ne.s32.totalorder %s90, %s91
    %p103 = scmp.eq.s32.totalorder %s18, 1
    %p104 = por %p102, %p103
    %p106 = scmp.ne.s32.totalorder %s91, %s105
    %p107 = scmp.eq.s32.totalorder %s18, 0
    %p108 = por %p106, %p107
    %s109 = ssub.s32 %s12, %s19
    %p110 = scmp.eq.s32.totalorder %s109, 0
    %s112 = sadd.s32 %s111, 1
    %s113 = scalar_select %p110, %s111, %s112
    %p116 = pneg %p110
    %p117 = scmp.eq.s32.totalorder %s12, 1
    %p118 = por %p116, %p117
    %p119 = scmp.ne.s32.totalorder %s111, %s114
    %p120 = scmp.eq.s32.totalorder %s12, 0
    %p121 = por %p119, %p120
    %p122 = scmp.ne.s32.totalorder %s111, %s114
    %p123 = scmp.eq.s32.totalorder %s17, 1
    %p124 = por %p122, %p123
    %p125 = scmp.ne.s32.totalorder %s114, %s115
    %p126 = scmp.eq.s32.totalorder %s17, 0
    %p127 = por %p125, %p126
    %p128 = scmp.ne.s32.totalorder %s114, %s115
    %p129 = scmp.eq.s32.totalorder %s18, 1
    %p130 = por %p128, %p129
    %p132 = scmp.ne.s32.totalorder %s115, %s131
    %p133 = scmp.eq.s32.totalorder %s18, 0
    %p134 = por %p132, %p133
    %s135 = ssub.s32 %s12, %s19
    %p136 = scmp.eq.s32.totalorder %s135, 0
    %s138 = sadd.s32 %s137, 1
    %s139 = scalar_select %p136, %s137, %s138
    %p142 = pneg %p136
    %p143 = scmp.eq.s32.totalorder %s12, 1
    %p144 = por %p142, %p143
    %p145 = scmp.ne.s32.totalorder %s137, %s140
    %p146 = scmp.eq.s32.totalorder %s12, 0
    %p147 = por %p145, %p146
    %p148 = scmp.ne.s32.totalorder %s137, %s140
    %p149 = scmp.eq.s32.totalorder %s17, 1
    %p150 = por %p148, %p149
    %p151 = scmp.ne.s32.totalorder %s140, %s141
    %p152 = scmp.eq.s32.totalorder %s17, 0
    %p153 = por %p151, %p152
    %p154 = scmp.ne.s32.totalorder %s140, %s141
    %p155 = scmp.eq.s32.totalorder %s18, 1
    %p156 = por %p154, %p155
    %p158 = scmp.ne.s32.totalorder %s141, %s157
    %p159 = scmp.eq.s32.totalorder %s18, 0
    %p160 = por %p158, %p159
    %p161 = scmp.le.s32.totalorder 1, %s12
    %p162 = scmp.lt.s32.totalorder %s12, 3
    %p163 = pnand %p161, %p162
    %p164 = pneg %p163
    // Predicated region
    $region9: #{bottleneck_block.4} parent=5 // pred_check
      _
    $region10: #{bottleneck_block.4} parent=5 // pred_check_branch
      %166 = sbr.rel (%p163) target = $region12
    $region11: #{bottleneck_block.4} parent=5 // pred_region
      %s167 = ssub.s32 %s12, 1
      // Predicated region
      $region13: #{bottleneck_block.4} parent=11 // pred_check
        %p168 = pneg %p59
      $region14: #{bottleneck_block.4} parent=11 // pred_check_branch
        %170 = sbr.rel (%p168) target = $region16
      $region15: #{bottleneck_block.4} parent=11 // pred_region
        _
      $region16: #{bottleneck_block.4} parent=11 // pred_fallthru
        _
      // Predicated region
      $region17: #{bottleneck_block.4} parent=11 // pred_check
        %p171 = pneg %p80
      $region18: #{bottleneck_block.4} parent=11 // pred_check_branch
        %173 = sbr.rel (%p171) target = $region20
      $region19: #{bottleneck_block.4} parent=11 // pred_region
        _
      $region20: #{bottleneck_block.4} parent=11 // pred_fallthru
        _
      // Predicated region
      $region21: #{bottleneck_block.4} parent=11 // pred_check
        %p174 = pneg %p101
      $region22: #{bottleneck_block.4} parent=11 // pred_check_branch
        %176 = sbr.rel (%p174) target = $region24
      $region23: #{bottleneck_block.4} parent=11 // pred_region
        _
      $region24: #{bottleneck_block.4} parent=11 // pred_fallthru
        _
    $region12: #{bottleneck_block.4} parent=5 // pred_fallthru
      _
    %p177 = scmp.lt.s32.totalorder %s12, 2
    // Predicated region
    $region25: #{bottleneck_block.4} parent=5 // pred_check
      %p178 = pneg %p177
    $region26: #{bottleneck_block.4} parent=5 // pred_check_branch
      %180 = sbr.rel (%p178) target = $region28
    $region27: #{bottleneck_block.4} parent=5 // pred_region
      // Predicated region
      $region29: #{bottleneck_block.4} parent=27 // pred_check
        %p181 = pneg %p32
      $region30: #{bottleneck_block.4} parent=27 // pred_check_branch
        %183 = sbr.rel (%p181) target = $region32
      $region31: #{bottleneck_block.4} parent=27 // pred_region
        %p184 = scmp.lt.s32.totalorder %s12, 1
        %s185 = scalar_select %p184, %s12, 1
        %s186 = smul.addr %s185, 32
        %s187 = smul.addr %s186, 8
        %s188 = scalar_lea.vmem %s0, %s187
      $region32: #{bottleneck_block.4} parent=27 // pred_fallthru
        _
    $region28: #{bottleneck_block.4} parent=5 // pred_fallthru
      _
    %p189 = scmp.le.s32.totalorder 1, %s12
    %p190 = scmp.lt.s32.totalorder %s12, 3
    %p191 = pnand %p189, %p190
    %p192 = pneg %p191
    // Predicated region
    $region33: #{bottleneck_block.4} parent=5 // pred_check
      _
    $region34: #{bottleneck_block.4} parent=5 // pred_check_branch
      %194 = sbr.rel (%p191) target = $region36
    $region35: #{bottleneck_block.4} parent=5 // pred_region
      %s195 = ssub.s32 %s12, 1
      %p196 = scmp.lt.s32.totalorder %s17, 1
      %s197 = scalar_select %p196, %s17, 1
      %s198 = smul.addr %s197, 32
      %s199 = smul.addr %s198, 8
      %s200 = scalar_lea.vmem %s0, %s199
      %p201 = pneg %p38
      %p202 = pneg %p35
      %p203 = pneg %p59
      %p204 = pneg %p56
      %p205 = pneg %p80
      %p206 = pneg %p77
      %p207 = pneg %p101
      %p208 = pneg %p98
      %p209 = pneg %p127
      %p210 = pneg %p124
      %p211 = scmp.lt.s32.totalorder %s17, 1
      %s212 = scalar_select %p211, %s17, 1
      %s213 = smul.addr %s212, 6
      %s214 = smul.addr %s213, 8
      %s215 = scalar_lea.vmem %s4, %s214
      %p216 = pneg %p153
      %p217 = pneg %p150
      %p218 = scmp.lt.s32.totalorder %s17, 1
      %s219 = scalar_select %p218, %s17, 1
      %s220 = smul.addr %s219, 2
      %s221 = scalar_lea.vmem %s5, %s220
      %p222 = scmp.lt.s32.totalorder %s17, 1
      %s223 = scalar_select %p222, %s17, 1
      %s224 = smul.addr %s223, 32
      %s225 = smul.addr %s224, 8
      %s226 = scalar_lea.vmem %s0, %s225
      %p227 = scmp.lt.s32.totalorder %s17, 1
      %s228 = scalar_select %p227, %s17, 1
      %s229 = smul.addr %s228, 6
      %s230 = smul.addr %s229, 8
      %s231 = scalar_lea.vmem %s4, %s230
      %p232 = scmp.lt.s32.totalorder %s17, 1
      %s233 = scalar_select %p232, %s17, 1
      %s234 = smul.addr %s233, 2
      %s235 = scalar_lea.vmem %s5, %s234
      %v236 = vld [vmem:[%s226] sm:$0xff]
      %v237 = vld [vmem:[%s226 + $0x8] sm:$0xff]
      %v238 = vld [vmem:[%s226 + $0x10] sm:$0xff]
      %v239 = vld [vmem:[%s226 + $0x18] sm:$0xff]
      %v240 = vld [vmem:[%s226 + $0x20] sm:$0xff]
      %v241 = vld [vmem:[%s226 + $0x28] sm:$0xff]
      %v242 = vld [vmem:[%s226 + $0x30] sm:$0xff]
      %v243 = vld [vmem:[%s226 + $0x38] sm:$0xff]
      %v244 = vld [vmem:[%s226 + $0x40] sm:$0xff]
      %v245 = vld [vmem:[%s226 + $0x48] sm:$0xff]
      %v246 = vld [vmem:[%s226 + $0x50] sm:$0xff]
      %v247 = vld [vmem:[%s226 + $0x58] sm:$0xff]
      %v248 = vld [vmem:[%s226 + $0x60] sm:$0xff]
      %v249 = vld [vmem:[%s226 + $0x68] sm:$0xff]
      %v250 = vld [vmem:[%s226 + $0x70] sm:$0xff]
      %v251 = vld [vmem:[%s226 + $0x78] sm:$0xff]
      %v252 = vld [vmem:[%s226 + $0x80] sm:$0xff]
      %v253 = vld [vmem:[%s226 + $0x88] sm:$0xff]
      %v254 = vld [vmem:[%s226 + $0x90] sm:$0xff]
      %v255 = vld [vmem:[%s226 + $0x98] sm:$0xff]
      %v256 = vld [vmem:[%s226 + $0xa0] sm:$0xff]
      %v257 = vld [vmem:[%s226 + $0xa8] sm:$0xff]
      %v258 = vld [vmem:[%s226 + $0xb0] sm:$0xff]
      %v259 = vld [vmem:[%s226 + $0xb8] sm:$0xff]
      %v260 = vld [vmem:[%s226 + $0xc0] sm:$0xff]
      %v261 = vld [vmem:[%s226 + $0xc8] sm:$0xff]
      %v262 = vld [vmem:[%s226 + $0xd0] sm:$0xff]
      %v263 = vld [vmem:[%s226 + $0xd8] sm:$0xff]
      %v264 = vld [vmem:[%s226 + $0xe0] sm:$0xff]
      %v265 = vld [vmem:[%s226 + $0xe8] sm:$0xff]
      %v266 = vld [vmem:[%s226 + $0xf0] sm:$0xff]
      %v267 = vld [vmem:[%s226 + $0xf8] sm:$0xff]
      %268 = vxpose.xlu0.b32.start [1/16] %v236, 128
      %269 = vxpose.xlu0.b32.cont [2/16] %v238, 128
      %270 = vxpose.xlu0.b32.cont [3/16] %v240, 128
      %271 = vxpose.xlu0.b32.cont [4/16] %v242, 128
      %272 = vxpose.xlu0.b32.cont [5/16] %v244, 128
      %273 = vxpose.xlu0.b32.cont [6/16] %v246, 128
      %274 = vxpose.xlu0.b32.cont [7/16] %v248, 128
      %275 = vxpose.xlu0.b32.cont [8/16] %v250, 128
      %276 = vxpose.xlu0.b32.cont [9/16] %v252, 128
      %277 = vxpose.xlu0.b32.cont [10/16] %v254, 128
      %278 = vxpose.xlu0.b32.cont [11/16] %v256, 128
      %279 = vxpose.xlu0.b32.cont [12/16] %v258, 128
      %280 = vxpose.xlu0.b32.cont [13/16] %v260, 128
      %281 = vxpose.xlu0.b32.cont [14/16] %v262, 128
      %282 = vxpose.xlu0.b32.cont [15/16] %v264, 128
      %283 = vxpose.xlu0.b32.end [16/16] %v266, 128
      %v284 = vpop.trf.xlu0
      %v285 = vpop.trf.xlu0
      %v286 = vpop.trf.xlu0
      %v287 = vpop.trf.xlu0
      %v288 = vpop.trf.xlu0
      %v289 = vpop.trf.xlu0
      %v290 = vpop.trf.xlu0
      %v291 = vpop.trf.xlu0
      %v292 = vpop.trf.xlu0
      %v293 = vpop.trf.xlu0
      %v294 = vpop.trf.xlu0
      %v295 = vpop.trf.xlu0
      %v296 = vpop.trf.xlu0
      %v297 = vpop.trf.xlu0
      %v298 = vpop.trf.xlu0
      %v299 = vpop.trf.xlu0
      %300 = vxpose.xlu0.b32.start [1/16] %v237, 128
      %301 = vxpose.xlu0.b32.cont [2/16] %v239, 128
      %302 = vxpose.xlu0.b32.cont [3/16] %v241, 128
      %303 = vxpose.xlu0.b32.cont [4/16] %v243, 128
      %304 = vxpose.xlu0.b32.cont [5/16] %v245, 128
      %305 = vxpose.xlu0.b32.cont [6/16] %v247, 128
      %306 = vxpose.xlu0.b32.cont [7/16] %v249, 128
      %307 = vxpose.xlu0.b32.cont [8/16] %v251, 128
      %308 = vxpose.xlu0.b32.cont [9/16] %v253, 128
      %309 = vxpose.xlu0.b32.cont [10/16] %v255, 128
      %310 = vxpose.xlu0.b32.cont [11/16] %v257, 128
      %311 = vxpose.xlu0.b32.cont [12/16] %v259, 128
      %312 = vxpose.xlu0.b32.cont [13/16] %v261, 128
      %313 = vxpose.xlu0.b32.cont [14/16] %v263, 128
      %314 = vxpose.xlu0.b32.cont [15/16] %v265, 128
      %315 = vxpose.xlu0.b32.end [16/16] %v267, 128
      %v316 = vpop.trf.xlu0
      %v317 = vpop.trf.xlu0
      %v318 = vpop.trf.xlu0
      %v319 = vpop.trf.xlu0
      %v320 = vpop.trf.xlu0
      %v321 = vpop.trf.xlu0
      %v322 = vpop.trf.xlu0
      %v323 = vpop.trf.xlu0
      %v324 = vpop.trf.xlu0
      %v325 = vpop.trf.xlu0
      %v326 = vpop.trf.xlu0
      %v327 = vpop.trf.xlu0
      %v328 = vpop.trf.xlu0
      %v329 = vpop.trf.xlu0
      %v330 = vpop.trf.xlu0
      %v331 = vpop.trf.xlu0
      %v332 = vld [vmem:[%s1] sm:$0x1]
      %v334 = vlaneseq
      %v335 = vshrl.u32 %v334, 7
      %v336 = vsub.s32 0, %v335
      %v337 = vrot.slane %v332, %v336
      %v339 = vmul.f32 %v284, %v337
      %v340 = vmul.f32 %v285, %v337
      %v341 = vmul.f32 %v286, %v337
      %v342 = vmul.f32 %v287, %v337
      %v343 = vmul.f32 %v288, %v337
      %v344 = vmul.f32 %v289, %v337
      %v345 = vmul.f32 %v290, %v337
      %v346 = vmul.f32 %v291, %v337
      %v347 = vmul.f32 %v292, %v337
      %v348 = vmul.f32 %v293, %v337
      %v349 = vmul.f32 %v294, %v337
      %v350 = vmul.f32 %v295, %v337
      %v351 = vmul.f32 %v296, %v337
      %v352 = vmul.f32 %v297, %v337
      %v353 = vmul.f32 %v298, %v337
      %v354 = vmul.f32 %v299, %v337
      %v355 = vmul.f32 %v316, %v337
      %v356 = vmul.f32 %v317, %v337
      %v357 = vmul.f32 %v318, %v337
      %v358 = vmul.f32 %v319, %v337
      %v359 = vmul.f32 %v320, %v337
      %v360 = vmul.f32 %v321, %v337
      %v361 = vmul.f32 %v322, %v337
      %v362 = vmul.f32 %v323, %v337
      %v363 = vmul.f32 %v324, %v337
      %v364 = vmul.f32 %v325, %v337
      %v365 = vmul.f32 %v326, %v337
      %v366 = vmul.f32 %v327, %v337
      %v367 = vmul.f32 %v328, %v337
      %v368 = vmul.f32 %v329, %v337
      %v369 = vmul.f32 %v330, %v337
      %v370 = vmul.f32 %v331, %v337
      %v371 = vld [vmem:[%s2] sm:$0x1]
      %v373 = vlaneseq
      %v374 = vshrl.u32 %v373, 7
      %v375 = vsub.s32 0, %v374
      %v376 = vrot.slane %v371, %v375
      %v378 = vadd.f32 %v339, %v376
      %v379 = vadd.f32 %v340, %v376
      %v380 = vadd.f32 %v341, %v376
      %v381 = vadd.f32 %v342, %v376
      %v382 = vadd.f32 %v343, %v376
      %v383 = vadd.f32 %v344, %v376
      %v384 = vadd.f32 %v345, %v376
      %v385 = vadd.f32 %v346, %v376
      %v386 = vadd.f32 %v347, %v376
      %v387 = vadd.f32 %v348, %v376
      %v388 = vadd.f32 %v349, %v376
      %v389 = vadd.f32 %v350, %v376
      %v390 = vadd.f32 %v351, %v376
      %v391 = vadd.f32 %v352, %v376
      %v392 = vadd.f32 %v353, %v376
      %v393 = vadd.f32 %v354, %v376
      %v394 = vadd.f32 %v355, %v376
      %v395 = vadd.f32 %v356, %v376
      %v396 = vadd.f32 %v357, %v376
      %v397 = vadd.f32 %v358, %v376
      %v398 = vadd.f32 %v359, %v376
      %v399 = vadd.f32 %v360, %v376
      %v400 = vadd.f32 %v361, %v376
      %v401 = vadd.f32 %v362, %v376
      %v402 = vadd.f32 %v363, %v376
      %v403 = vadd.f32 %v364, %v376
      %v404 = vadd.f32 %v365, %v376
      %v405 = vadd.f32 %v366, %v376
      %v406 = vadd.f32 %v367, %v376
      %v407 = vadd.f32 %v368, %v376
      %v408 = vadd.f32 %v369, %v376
      %v409 = vadd.f32 %v370, %v376
      %v410 = vlaneseq
      %v411 = vshrl.u32 %v410, 7
      %v412 = vadd.s32 %v411, 8
      %v413 = vadd.s32 %v411, 16
      %v414 = vadd.s32 %v411, 24
      %v415 = vadd.s32 %v411, 32
      %v416 = vadd.s32 %v411, 40
      %v417 = vadd.s32 %v411, 48
      %v418 = vadd.s32 %v411, 56
      %v419 = vadd.s32 %v411, 64
      %v420 = vadd.s32 %v411, 72
      %v421 = vadd.s32 %v411, 80
      %v422 = vadd.s32 %v411, 88
      %v423 = vadd.s32 %v411, 96
      %v424 = vadd.s32 %v411, 104
      %v425 = vadd.s32 %v411, 112
      %v426 = vadd.s32 %v411, 120
      %v427 = vadd.s32 %v411, 128
      %v428 = vadd.s32 %v411, 136
      %v429 = vadd.s32 %v411, 144
      %v430 = vadd.s32 %v411, 152
      %v431 = vadd.s32 %v411, 160
      %v432 = vadd.s32 %v411, 168
      %v433 = vadd.s32 %v411, 176
      %v434 = vadd.s32 %v411, 184
      %v435 = vadd.s32 %v411, 192
      %v436 = vadd.s32 %v411, 200
      %v437 = vadd.s32 %v411, 208
      %v438 = vadd.s32 %v411, 216
      %v439 = vadd.s32 %v411, 224
      %v440 = vadd.s32 %v411, 232
      %v441 = vadd.s32 %v411, 240
      %v442 = vadd.s32 %v411, 248
      %v443 = vadd.s32 %v411, 256
      %v444 = vadd.s32 %v411, 264
      %v445 = vadd.s32 %v411, 272
      %v446 = vadd.s32 %v411, 280
      %vm447 = vcmp.lt.s32.totalorder %v411, 0
      %v448 = vsub.s32 0, %v411
      %v449 = vsel %vm447, %v448, %v411
      %v450 = vshrl.u32 %v449, 4
      %v451 = vand.u32 %v449, 15
      %v452 = vsub.s32 0, %v451
      %v453 = vsel %vm447, %v452, %v451
      %vm454 = vcmp.lt.s32.totalorder %v412, 0
      %v455 = vsub.s32 0, %v412
      %v456 = vsel %vm454, %v455, %v412
      %v457 = vshrl.u32 %v456, 4
      %v458 = vand.u32 %v456, 15
      %v459 = vsub.s32 0, %v458
      %v460 = vsel %vm454, %v459, %v458
      %vm461 = vcmp.lt.s32.totalorder %v413, 0
      %v462 = vsub.s32 0, %v413
      %v463 = vsel %vm461, %v462, %v413
      %v464 = vshrl.u32 %v463, 4
      %v465 = vand.u32 %v463, 15
      %v466 = vsub.s32 0, %v465
      %v467 = vsel %vm461, %v466, %v465
      %vm468 = vcmp.lt.s32.totalorder %v414, 0
      %v469 = vsub.s32 0, %v414
      %v470 = vsel %vm468, %v469, %v414
      %v471 = vshrl.u32 %v470, 4
      %v472 = vand.u32 %v470, 15
      %v473 = vsub.s32 0, %v472
      %v474 = vsel %vm468, %v473, %v472
      %vm475 = vcmp.lt.s32.totalorder %v415, 0
      %v476 = vsub.s32 0, %v415
      %v477 = vsel %vm475, %v476, %v415
      %v478 = vshrl.u32 %v477, 4
      %v479 = vand.u32 %v477, 15
      %v480 = vsub.s32 0, %v479
      %v481 = vsel %vm475, %v480, %v479
      %vm482 = vcmp.lt.s32.totalorder %v416, 0
      %v483 = vsub.s32 0, %v416
      %v484 = vsel %vm482, %v483, %v416
      %v485 = vshrl.u32 %v484, 4
      %v486 = vand.u32 %v484, 15
      %v487 = vsub.s32 0, %v486
      %v488 = vsel %vm482, %v487, %v486
      %vm489 = vcmp.lt.s32.totalorder %v417, 0
      %v490 = vsub.s32 0, %v417
      %v491 = vsel %vm489, %v490, %v417
      %v492 = vshrl.u32 %v491, 4
      %v493 = vand.u32 %v491, 15
      %v494 = vsub.s32 0, %v493
      %v495 = vsel %vm489, %v494, %v493
      %vm496 = vcmp.lt.s32.totalorder %v418, 0
      %v497 = vsub.s32 0, %v418
      %v498 = vsel %vm496, %v497, %v418
      %v499 = vshrl.u32 %v498, 4
      %v500 = vand.u32 %v498, 15
      %v501 = vsub.s32 0, %v500
      %v502 = vsel %vm496, %v501, %v500
      %vm503 = vcmp.lt.s32.totalorder %v419, 0
      %v504 = vsub.s32 0, %v419
      %v505 = vsel %vm503, %v504, %v419
      %v506 = vshrl.u32 %v505, 4
      %v507 = vand.u32 %v505, 15
      %v508 = vsub.s32 0, %v507
      %v509 = vsel %vm503, %v508, %v507
      %vm510 = vcmp.lt.s32.totalorder %v420, 0
      %v511 = vsub.s32 0, %v420
      %v512 = vsel %vm510, %v511, %v420
      %v513 = vshrl.u32 %v512, 4
      %v514 = vand.u32 %v512, 15
      %v515 = vsub.s32 0, %v514
      %v516 = vsel %vm510, %v515, %v514
      %vm517 = vcmp.lt.s32.totalorder %v421, 0
      %v518 = vsub.s32 0, %v421
      %v519 = vsel %vm517, %v518, %v421
      %v520 = vshrl.u32 %v519, 4
      %v521 = vand.u32 %v519, 15
      %v522 = vsub.s32 0, %v521
      %v523 = vsel %vm517, %v522, %v521
      %vm524 = vcmp.lt.s32.totalorder %v422, 0
      %v525 = vsub.s32 0, %v422
      %v526 = vsel %vm524, %v525, %v422
      %v527 = vshrl.u32 %v526, 4
      %v528 = vand.u32 %v526, 15
      %v529 = vsub.s32 0, %v528
      %v530 = vsel %vm524, %v529, %v528
      %vm531 = vcmp.lt.s32.totalorder %v423, 0
      %v532 = vsub.s32 0, %v423
      %v533 = vsel %vm531, %v532, %v423
      %v534 = vshrl.u32 %v533, 4
      %v535 = vand.u32 %v533, 15
      %v536 = vsub.s32 0, %v535
      %v537 = vsel %vm531, %v536, %v535
      %vm538 = vcmp.lt.s32.totalorder %v424, 0
      %v539 = vsub.s32 0, %v424
      %v540 = vsel %vm538, %v539, %v424
      %v541 = vshrl.u32 %v540, 4
      %v542 = vand.u32 %v540, 15
      %v543 = vsub.s32 0, %v542
      %v544 = vsel %vm538, %v543, %v542
      %vm545 = vcmp.lt.s32.totalorder %v425, 0
      %v546 = vsub.s32 0, %v425
      %v547 = vsel %vm545, %v546, %v425
      %v548 = vshrl.u32 %v547, 4
      %v549 = vand.u32 %v547, 15
      %v550 = vsub.s32 0, %v549
      %v551 = vsel %vm545, %v550, %v549
      %vm552 = vcmp.lt.s32.totalorder %v426, 0
      %v553 = vsub.s32 0, %v426
      %v554 = vsel %vm552, %v553, %v426
      %v555 = vshrl.u32 %v554, 4
      %v556 = vand.u32 %v554, 15
      %v557 = vsub.s32 0, %v556
      %v558 = vsel %vm552, %v557, %v556
      %vm559 = vcmp.lt.s32.totalorder %v427, 0
      %v560 = vsub.s32 0, %v427
      %v561 = vsel %vm559, %v560, %v427
      %v562 = vshrl.u32 %v561, 4
      %v563 = vand.u32 %v561, 15
      %v564 = vsub.s32 0, %v563
      %v565 = vsel %vm559, %v564, %v563
      %vm566 = vcmp.lt.s32.totalorder %v428, 0
      %v567 = vsub.s32 0, %v428
      %v568 = vsel %vm566, %v567, %v428
      %v569 = vshrl.u32 %v568, 4
      %v570 = vand.u32 %v568, 15
      %v571 = vsub.s32 0, %v570
      %v572 = vsel %vm566, %v571, %v570
      %vm573 = vcmp.lt.s32.totalorder %v429, 0
      %v574 = vsub.s32 0, %v429
      %v575 = vsel %vm573, %v574, %v429
      %v576 = vshrl.u32 %v575, 4
      %v577 = vand.u32 %v575, 15
      %v578 = vsub.s32 0, %v577
      %v579 = vsel %vm573, %v578, %v577
      %vm580 = vcmp.lt.s32.totalorder %v430, 0
      %v581 = vsub.s32 0, %v430
      %v582 = vsel %vm580, %v581, %v430
      %v583 = vshrl.u32 %v582, 4
      %v584 = vand.u32 %v582, 15
      %v585 = vsub.s32 0, %v584
      %v586 = vsel %vm580, %v585, %v584
      %vm587 = vcmp.lt.s32.totalorder %v431, 0
      %v588 = vsub.s32 0, %v431
      %v589 = vsel %vm587, %v588, %v431
      %v590 = vshrl.u32 %v589, 4
      %v591 = vand.u32 %v589, 15
      %v592 = vsub.s32 0, %v591
      %v593 = vsel %vm587, %v592, %v591
      %vm594 = vcmp.lt.s32.totalorder %v432, 0
      %v595 = vsub.s32 0, %v432
      %v596 = vsel %vm594, %v595, %v432
      %v597 = vshrl.u32 %v596, 4
      %v598 = vand.u32 %v596, 15
      %v599 = vsub.s32 0, %v598
      %v600 = vsel %vm594, %v599, %v598
      %vm601 = vcmp.lt.s32.totalorder %v433, 0
      %v602 = vsub.s32 0, %v433
      %v603 = vsel %vm601, %v602, %v433
      %v604 = vshrl.u32 %v603, 4
      %v605 = vand.u32 %v603, 15
      %v606 = vsub.s32 0, %v605
      %v607 = vsel %vm601, %v606, %v605
      %vm608 = vcmp.lt.s32.totalorder %v434, 0
      %v609 = vsub.s32 0, %v434
      %v610 = vsel %vm608, %v609, %v434
      %v611 = vshrl.u32 %v610, 4
      %v612 = vand.u32 %v610, 15
      %v613 = vsub.s32 0, %v612
      %v614 = vsel %vm608, %v613, %v612
      %vm615 = vcmp.lt.s32.totalorder %v435, 0
      %v616 = vsub.s32 0, %v435
      %v617 = vsel %vm615, %v616, %v435
      %v618 = vshrl.u32 %v617, 4
      %v619 = vand.u32 %v617, 15
      %v620 = vsub.s32 0, %v619
      %v621 = vsel %vm615, %v620, %v619
      %vm622 = vcmp.lt.s32.totalorder %v436, 0
      %v623 = vsub.s32 0, %v436
      %v624 = vsel %vm622, %v623, %v436
      %v625 = vshrl.u32 %v624, 4
      %v626 = vand.u32 %v624, 15
      %v627 = vsub.s32 0, %v626
      %v628 = vsel %vm622, %v627, %v626
      %vm629 = vcmp.lt.s32.totalorder %v437, 0
      %v630 = vsub.s32 0, %v437
      %v631 = vsel %vm629, %v630, %v437
      %v632 = vshrl.u32 %v631, 4
      %v633 = vand.u32 %v631, 15
      %v634 = vsub.s32 0, %v633
      %v635 = vsel %vm629, %v634, %v633
      %vm636 = vcmp.lt.s32.totalorder %v438, 0
      %v637 = vsub.s32 0, %v438
      %v638 = vsel %vm636, %v637, %v438
      %v639 = vshrl.u32 %v638, 4
      %v640 = vand.u32 %v638, 15
      %v641 = vsub.s32 0, %v640
      %v642 = vsel %vm636, %v641, %v640
      %vm643 = vcmp.lt.s32.totalorder %v439, 0
      %v644 = vsub.s32 0, %v439
      %v645 = vsel %vm643, %v644, %v439
      %v646 = vshrl.u32 %v645, 4
      %v647 = vand.u32 %v645, 15
      %v648 = vsub.s32 0, %v647
      %v649 = vsel %vm643, %v648, %v647
      %vm650 = vcmp.lt.s32.totalorder %v440, 0
      %v651 = vsub.s32 0, %v440
      %v652 = vsel %vm650, %v651, %v440
      %v653 = vshrl.u32 %v652, 4
      %v654 = vand.u32 %v652, 15
      %v655 = vsub.s32 0, %v654
      %v656 = vsel %vm650, %v655, %v654
      %vm657 = vcmp.lt.s32.totalorder %v441, 0
      %v658 = vsub.s32 0, %v441
      %v659 = vsel %vm657, %v658, %v441
      %v660 = vshrl.u32 %v659, 4
      %v661 = vand.u32 %v659, 15
      %v662 = vsub.s32 0, %v661
      %v663 = vsel %vm657, %v662, %v661
      %vm664 = vcmp.lt.s32.totalorder %v442, 0
      %v665 = vsub.s32 0, %v442
      %v666 = vsel %vm664, %v665, %v442
      %v667 = vshrl.u32 %v666, 4
      %v668 = vand.u32 %v666, 15
      %v669 = vsub.s32 0, %v668
      %v670 = vsel %vm664, %v669, %v668
      %vm671 = vcmp.lt.s32.totalorder %v443, 0
      %v672 = vsub.s32 0, %v443
      %v673 = vsel %vm671, %v672, %v443
      %v674 = vshrl.u32 %v673, 4
      %v675 = vand.u32 %v673, 15
      %v676 = vsub.s32 0, %v675
      %v677 = vsel %vm671, %v676, %v675
      %vm678 = vcmp.lt.s32.totalorder %v444, 0
      %v679 = vsub.s32 0, %v444
      %v680 = vsel %vm678, %v679, %v444
      %v681 = vshrl.u32 %v680, 4
      %v682 = vand.u32 %v680, 15
      %v683 = vsub.s32 0, %v682
      %v684 = vsel %vm678, %v683, %v682
      %vm685 = vcmp.lt.s32.totalorder %v445, 0
      %v686 = vsub.s32 0, %v445
      %v687 = vsel %vm685, %v686, %v445
      %v688 = vshrl.u32 %v687, 4
      %v689 = vand.u32 %v687, 15
      %v690 = vsub.s32 0, %v689
      %v691 = vsel %vm685, %v690, %v689
      %vm692 = vcmp.lt.s32.totalorder %v446, 0
      %v693 = vsub.s32 0, %v446
      %v694 = vsel %vm692, %v693, %v446
      %v695 = vshrl.u32 %v694, 4
      %v696 = vand.u32 %v694, 15
      %v697 = vsub.s32 0, %v696
      %v698 = vsel %vm692, %v697, %v696
      %vm699 = vcmp.ne.s32.totalorder %v453, 0
      %vm700 = vcmp.ne.s32.totalorder %v460, 0
      %vm701 = vcmp.ne.s32.totalorder %v467, 0
      %vm702 = vcmp.ne.s32.totalorder %v474, 0
      %vm703 = vcmp.ne.s32.totalorder %v481, 0
      %vm704 = vcmp.ne.s32.totalorder %v488, 0
      %vm705 = vcmp.ne.s32.totalorder %v495, 0
      %vm706 = vcmp.ne.s32.totalorder %v502, 0
      %vm707 = vcmp.ne.s32.totalorder %v509, 0
      %vm708 = vcmp.ne.s32.totalorder %v516, 0
      %vm709 = vcmp.ne.s32.totalorder %v523, 0
      %vm710 = vcmp.ne.s32.totalorder %v530, 0
      %vm711 = vcmp.ne.s32.totalorder %v537, 0
      %vm712 = vcmp.ne.s32.totalorder %v544, 0
      %vm713 = vcmp.ne.s32.totalorder %v551, 0
      %vm714 = vcmp.ne.s32.totalorder %v558, 0
      %vm715 = vcmp.ne.s32.totalorder %v565, 0
      %vm716 = vcmp.ne.s32.totalorder %v572, 0
      %vm717 = vcmp.ne.s32.totalorder %v579, 0
      %vm718 = vcmp.ne.s32.totalorder %v586, 0
      %vm719 = vcmp.ne.s32.totalorder %v593, 0
      %vm720 = vcmp.ne.s32.totalorder %v600, 0
      %vm721 = vcmp.ne.s32.totalorder %v607, 0
      %vm722 = vcmp.ne.s32.totalorder %v614, 0
      %vm723 = vcmp.ne.s32.totalorder %v621, 0
      %vm724 = vcmp.ne.s32.totalorder %v628, 0
      %vm725 = vcmp.ne.s32.totalorder %v635, 0
      %vm726 = vcmp.ne.s32.totalorder %v642, 0
      %vm727 = vcmp.ne.s32.totalorder %v649, 0
      %vm728 = vcmp.ne.s32.totalorder %v656, 0
      %vm729 = vcmp.ne.s32.totalorder %v663, 0
      %vm730 = vcmp.ne.s32.totalorder %v670, 0
      %vm731 = vcmp.ne.s32.totalorder %v677, 0
      %vm732 = vcmp.ne.s32.totalorder %v684, 0
      %vm733 = vcmp.ne.s32.totalorder %v691, 0
      %vm734 = vcmp.ne.s32.totalorder %v698, 0
      %vm735 = vcmp.lt.s32.totalorder %v453, 0
      %vm736 = vcmp.lt.s32.totalorder %v460, 0
      %vm737 = vcmp.lt.s32.totalorder %v467, 0
      %vm738 = vcmp.lt.s32.totalorder %v474, 0
      %vm739 = vcmp.lt.s32.totalorder %v481, 0
      %vm740 = vcmp.lt.s32.totalorder %v488, 0
      %vm741 = vcmp.lt.s32.totalorder %v495, 0
      %vm742 = vcmp.lt.s32.totalorder %v502, 0
      %vm743 = vcmp.lt.s32.totalorder %v509, 0
      %vm744 = vcmp.lt.s32.totalorder %v516, 0
      %vm745 = vcmp.lt.s32.totalorder %v523, 0
      %vm746 = vcmp.lt.s32.totalorder %v530, 0
      %vm747 = vcmp.lt.s32.totalorder %v537, 0
      %vm748 = vcmp.lt.s32.totalorder %v544, 0
      %vm749 = vcmp.lt.s32.totalorder %v551, 0
      %vm750 = vcmp.lt.s32.totalorder %v558, 0
      %vm751 = vcmp.lt.s32.totalorder %v565, 0
      %vm752 = vcmp.lt.s32.totalorder %v572, 0
      %vm753 = vcmp.lt.s32.totalorder %v579, 0
      %vm754 = vcmp.lt.s32.totalorder %v586, 0
      %vm755 = vcmp.lt.s32.totalorder %v593, 0
      %vm756 = vcmp.lt.s32.totalorder %v600, 0
      %vm757 = vcmp.lt.s32.totalorder %v607, 0
      %vm758 = vcmp.lt.s32.totalorder %v614, 0
      %vm759 = vcmp.lt.s32.totalorder %v621, 0
      %vm760 = vcmp.lt.s32.totalorder %v628, 0
      %vm761 = vcmp.lt.s32.totalorder %v635, 0
      %vm762 = vcmp.lt.s32.totalorder %v642, 0
      %vm763 = vcmp.lt.s32.totalorder %v649, 0
      %vm764 = vcmp.lt.s32.totalorder %v656, 0
      %vm765 = vcmp.lt.s32.totalorder %v663, 0
      %vm766 = vcmp.lt.s32.totalorder %v670, 0
      %vm767 = vcmp.lt.s32.totalorder %v677, 0
      %vm768 = vcmp.lt.s32.totalorder %v684, 0
      %vm769 = vcmp.lt.s32.totalorder %v691, 0
      %vm770 = vcmp.lt.s32.totalorder %v698, 0
      %vm771 = vmand %vm735, %vm699
      %vm772 = vmand %vm736, %vm700
      %vm773 = vmand %vm737, %vm701
      %vm774 = vmand %vm738, %vm702
      %vm775 = vmand %vm739, %vm703
      %vm776 = vmand %vm740, %vm704
      %vm777 = vmand %vm741, %vm705
      %vm778 = vmand %vm742, %vm706
      %vm779 = vmand %vm743, %vm707
      %vm780 = vmand %vm744, %vm708
      %vm781 = vmand %vm745, %vm709
      %vm782 = vmand %vm746, %vm710
      %vm783 = vmand %vm747, %vm711
      %vm784 = vmand %vm748, %vm712
      %vm785 = vmand %vm749, %vm713
      %vm786 = vmand %vm750, %vm714
      %vm787 = vmand %vm751, %vm715
      %vm788 = vmand %vm752, %vm716
      %vm789 = vmand %vm753, %vm717
      %vm790 = vmand %vm754, %vm718
      %vm791 = vmand %vm755, %vm719
      %vm792 = vmand %vm756, %vm720
      %vm793 = vmand %vm757, %vm721
      %vm794 = vmand %vm758, %vm722
      %vm795 = vmand %vm759, %vm723
      %vm796 = vmand %vm760, %vm724
      %vm797 = vmand %vm761, %vm725
      %vm798 = vmand %vm762, %vm726
      %vm799 = vmand %vm763, %vm727
      %vm800 = vmand %vm764, %vm728
      %vm801 = vmand %vm765, %vm729
      %vm802 = vmand %vm766, %vm730
      %vm803 = vmand %vm767, %vm731
      %vm804 = vmand %vm768, %vm732
      %vm805 = vmand %vm769, %vm733
      %vm806 = vmand %vm770, %vm734
      %v807 = vadd.s32 %v453, 16
      %v808 = vadd.s32 %v460, 16
      %v809 = vadd.s32 %v467, 16
      %v810 = vadd.s32 %v474, 16
      %v811 = vadd.s32 %v481, 16
      %v812 = vadd.s32 %v488, 16
      %v813 = vadd.s32 %v495, 16
      %v814 = vadd.s32 %v502, 16
      %v815 = vadd.s32 %v509, 16
      %v816 = vadd.s32 %v516, 16
      %v817 = vadd.s32 %v523, 16
      %v818 = vadd.s32 %v530, 16
      %v819 = vadd.s32 %v537, 16
      %v820 = vadd.s32 %v544, 16
      %v821 = vadd.s32 %v551, 16
      %v822 = vadd.s32 %v558, 16
      %v823 = vadd.s32 %v565, 16
      %v824 = vadd.s32 %v572, 16
      %v825 = vadd.s32 %v579, 16
      %v826 = vadd.s32 %v586, 16
      %v827 = vadd.s32 %v593, 16
      %v828 = vadd.s32 %v600, 16
      %v829 = vadd.s32 %v607, 16
      %v830 = vadd.s32 %v614, 16
      %v831 = vadd.s32 %v621, 16
      %v832 = vadd.s32 %v628, 16
      %v833 = vadd.s32 %v635, 16
      %v834 = vadd.s32 %v642, 16
      %v835 = vadd.s32 %v649, 16
      %v836 = vadd.s32 %v656, 16
      %v837 = vadd.s32 %v663, 16
      %v838 = vadd.s32 %v670, 16
      %v839 = vadd.s32 %v677, 16
      %v840 = vadd.s32 %v684, 16
      %v841 = vadd.s32 %v691, 16
      %v842 = vadd.s32 %v698, 16
      %v843 = vsel %vm771, %v807, %v453
      %v844 = vsel %vm772, %v808, %v460
      %v845 = vsel %vm773, %v809, %v467
      %v846 = vsel %vm774, %v810, %v474
      %v847 = vsel %vm775, %v811, %v481
      %v848 = vsel %vm776, %v812, %v488
      %v849 = vsel %vm777, %v813, %v495
      %v850 = vsel %vm778, %v814, %v502
      %v851 = vsel %vm779, %v815, %v509
      %v852 = vsel %vm780, %v816, %v516
      %v853 = vsel %vm781, %v817, %v523
      %v854 = vsel %vm782, %v818, %v530
      %v855 = vsel %vm783, %v819, %v537
      %v856 = vsel %vm784, %v820, %v544
      %v857 = vsel %vm785, %v821, %v551
      %v858 = vsel %vm786, %v822, %v558
      %v859 = vsel %vm787, %v823, %v565
      %v860 = vsel %vm788, %v824, %v572
      %v861 = vsel %vm789, %v825, %v579
      %v862 = vsel %vm790, %v826, %v586
      %v863 = vsel %vm791, %v827, %v593
      %v864 = vsel %vm792, %v828, %v600
      %v865 = vsel %vm793, %v829, %v607
      %v866 = vsel %vm794, %v830, %v614
      %v867 = vsel %vm795, %v831, %v621
      %v868 = vsel %vm796, %v832, %v628
      %v869 = vsel %vm797, %v833, %v635
      %v870 = vsel %vm798, %v834, %v642
      %v871 = vsel %vm799, %v835, %v649
      %v872 = vsel %vm800, %v836, %v656
      %v873 = vsel %vm801, %v837, %v663
      %v874 = vsel %vm802, %v838, %v670
      %v875 = vsel %vm803, %v839, %v677
      %v876 = vsel %vm804, %v840, %v684
      %v877 = vsel %vm805, %v841, %v691
      %v878 = vsel %vm806, %v842, %v698
      %vm879 = vcmp.gt.s32.totalorder %v843, 0
      %vm880 = vcmp.gt.s32.totalorder %v844, 0
      %vm881 = vcmp.gt.s32.totalorder %v845, 0
      %vm882 = vcmp.gt.s32.totalorder %v846, 0
      %vm883 = vcmp.gt.s32.totalorder %v847, 0
      %vm884 = vcmp.gt.s32.totalorder %v848, 0
      %vm885 = vcmp.gt.s32.totalorder %v849, 0
      %vm886 = vcmp.gt.s32.totalorder %v850, 0
      %vm887 = vcmp.gt.s32.totalorder %v851, 0
      %vm888 = vcmp.gt.s32.totalorder %v852, 0
      %vm889 = vcmp.gt.s32.totalorder %v853, 0
      %vm890 = vcmp.gt.s32.totalorder %v854, 0
      %vm891 = vcmp.gt.s32.totalorder %v855, 0
      %vm892 = vcmp.gt.s32.totalorder %v856, 0
      %vm893 = vcmp.gt.s32.totalorder %v857, 0
      %vm894 = vcmp.gt.s32.totalorder %v858, 0
      %vm895 = vcmp.gt.s32.totalorder %v859, 0
      %vm896 = vcmp.gt.s32.totalorder %v860, 0
      %vm897 = vcmp.gt.s32.totalorder %v861, 0
      %vm898 = vcmp.gt.s32.totalorder %v862, 0
      %vm899 = vcmp.gt.s32.totalorder %v863, 0
      %vm900 = vcmp.gt.s32.totalorder %v864, 0
      %vm901 = vcmp.gt.s32.totalorder %v865, 0
      %vm902 = vcmp.gt.s32.totalorder %v866, 0
      %vm903 = vcmp.gt.s32.totalorder %v867, 0
      %vm904 = vcmp.gt.s32.totalorder %v868, 0
      %vm905 = vcmp.gt.s32.totalorder %v869, 0
      %vm906 = vcmp.gt.s32.totalorder %v870, 0
      %vm907 = vcmp.gt.s32.totalorder %v871, 0
      %vm908 = vcmp.gt.s32.totalorder %v872, 0
      %vm909 = vcmp.gt.s32.totalorder %v873, 0
      %vm910 = vcmp.gt.s32.totalorder %v874, 0
      %vm911 = vcmp.gt.s32.totalorder %v875, 0
      %vm912 = vcmp.gt.s32.totalorder %v876, 0
      %vm913 = vcmp.gt.s32.totalorder %v877, 0
      %vm914 = vcmp.gt.s32.totalorder %v878, 0
      %vm948 = vcmask 1040384
      %v949 = vrot.slane 0.0, 7
      %v950 = vsel %vm948, %v949, %v949
      %v951 = vrot.slane %v378, 7
      %v952 = vsel %vm948, %v949, %v951
      %v953 = vrot.slane %v379, 7
      %v954 = vsel %vm948, %v951, %v953
      %v955 = vrot.slane %v380, 7
      %v956 = vsel %vm948, %v953, %v955
      %v957 = vrot.slane %v381, 7
      %v958 = vsel %vm948, %v955, %v957
      %v959 = vrot.slane %v382, 7
      %v960 = vsel %vm948, %v957, %v959
      %v961 = vrot.slane %v383, 7
      %v962 = vsel %vm948, %v959, %v961
      %v963 = vrot.slane %v384, 7
      %v964 = vsel %vm948, %v961, %v963
      %v965 = vrot.slane %v385, 7
      %v966 = vsel %vm948, %v963, %v965
      %v967 = vrot.slane %v386, 7
      %v968 = vsel %vm948, %v965, %v967
      %v969 = vrot.slane %v387, 7
      %v970 = vsel %vm948, %v967, %v969
      %v971 = vrot.slane %v388, 7
      %v972 = vsel %vm948, %v969, %v971
      %v973 = vrot.slane %v389, 7
      %v974 = vsel %vm948, %v971, %v973
      %v975 = vrot.slane %v390, 7
      %v976 = vsel %vm948, %v973, %v975
      %v977 = vrot.slane %v391, 7
      %v978 = vsel %vm948, %v975, %v977
      %v979 = vrot.slane %v392, 7
      %v980 = vsel %vm948, %v977, %v979
      %v981 = vrot.slane %v393, 7
      %v982 = vsel %vm948, %v979, %v981
      %v983 = vrot.slane %v394, 7
      %v984 = vsel %vm948, %v981, %v983
      %v985 = vrot.slane %v395, 7
      %v986 = vsel %vm948, %v983, %v985
      %v987 = vrot.slane %v396, 7
      %v988 = vsel %vm948, %v985, %v987
      %v989 = vrot.slane %v397, 7
      %v990 = vsel %vm948, %v987, %v989
      %v991 = vrot.slane %v398, 7
      %v992 = vsel %vm948, %v989, %v991
      %v993 = vrot.slane %v399, 7
      %v994 = vsel %vm948, %v991, %v993
      %v995 = vrot.slane %v400, 7
      %v996 = vsel %vm948, %v993, %v995
      %v997 = vrot.slane %v401, 7
      %v998 = vsel %vm948, %v995, %v997
      %v999 = vrot.slane %v402, 7
      %v1000 = vsel %vm948, %v997, %v999
      %v1001 = vrot.slane %v403, 7
      %v1002 = vsel %vm948, %v999, %v1001
      %v1003 = vrot.slane %v404, 7
      %v1004 = vsel %vm948, %v1001, %v1003
      %v1005 = vrot.slane %v405, 7
      %v1006 = vsel %vm948, %v1003, %v1005
      %v1007 = vrot.slane %v406, 7
      %v1008 = vsel %vm948, %v1005, %v1007
      %v1009 = vrot.slane %v407, 7
      %v1010 = vsel %vm948, %v1007, %v1009
      %v1011 = vrot.slane %v408, 7
      %v1012 = vsel %vm948, %v1009, %v1011
      %v1013 = vrot.slane %v409, 7
      %v1014 = vsel %vm948, %v1011, %v1013
      %v1015 = vsel %vm948, %v1013, %v949
      %v1051 = vsel %vm948, 0.0, %v949
      %v1052 = vsel %vm879, 1, 0
      %v1053 = vsel %vm880, 1, 0
      %v1054 = vsel %vm881, 1, 0
      %v1055 = vsel %vm882, 1, 0
      %v1056 = vsel %vm883, 1, 0
      %v1057 = vsel %vm884, 1, 0
      %v1058 = vsel %vm885, 1, 0
      %v1059 = vsel %vm886, 1, 0
      %v1060 = vsel %vm887, 1, 0
      %v1061 = vsel %vm888, 1, 0
      %v1062 = vsel %vm889, 1, 0
      %v1063 = vsel %vm890, 1, 0
      %v1064 = vsel %vm891, 1, 0
      %v1065 = vsel %vm892, 1, 0
      %v1066 = vsel %vm893, 1, 0
      %v1067 = vsel %vm894, 1, 0
      %v1068 = vsel %vm895, 1, 0
      %v1069 = vsel %vm896, 1, 0
      %v1070 = vsel %vm897, 1, 0
      %v1071 = vsel %vm898, 1, 0
      %v1072 = vsel %vm899, 1, 0
      %v1073 = vsel %vm900, 1, 0
      %v1074 = vsel %vm901, 1, 0
      %v1075 = vsel %vm902, 1, 0
      %v1076 = vsel %vm903, 1, 0
      %v1077 = vsel %vm904, 1, 0
      %v1078 = vsel %vm905, 1, 0
      %v1079 = vsel %vm906, 1, 0
      %v1080 = vsel %vm907, 1, 0
      %v1081 = vsel %vm908, 1, 0
      %v1082 = vsel %vm909, 1, 0
      %v1083 = vsel %vm910, 1, 0
      %v1084 = vsel %vm911, 1, 0
      %v1085 = vsel %vm912, 1, 0
      %v1086 = vsel %vm913, 1, 0
      %v1087 = vsel %vm914, 1, 0
      %vm1088 = vcmp.eq.s32.totalorder %v1052, 1
      %vm1089 = vcmp.eq.s32.totalorder %v1053, 1
      %vm1090 = vcmp.eq.s32.totalorder %v1054, 1
      %vm1091 = vcmp.eq.s32.totalorder %v1055, 1
      %vm1092 = vcmp.eq.s32.totalorder %v1056, 1
      %vm1093 = vcmp.eq.s32.totalorder %v1057, 1
      %vm1094 = vcmp.eq.s32.totalorder %v1058, 1
      %vm1095 = vcmp.eq.s32.totalorder %v1059, 1
      %vm1096 = vcmp.eq.s32.totalorder %v1060, 1
      %vm1097 = vcmp.eq.s32.totalorder %v1061, 1
      %vm1098 = vcmp.eq.s32.totalorder %v1062, 1
      %vm1099 = vcmp.eq.s32.totalorder %v1063, 1
      %vm1100 = vcmp.eq.s32.totalorder %v1064, 1
      %vm1101 = vcmp.eq.s32.totalorder %v1065, 1
      %vm1102 = vcmp.eq.s32.totalorder %v1066, 1
      %vm1103 = vcmp.eq.s32.totalorder %v1067, 1
      %vm1104 = vcmp.eq.s32.totalorder %v1068, 1
      %vm1105 = vcmp.eq.s32.totalorder %v1069, 1
      %vm1106 = vcmp.eq.s32.totalorder %v1070, 1
      %vm1107 = vcmp.eq.s32.totalorder %v1071, 1
      %vm1108 = vcmp.eq.s32.totalorder %v1072, 1
      %vm1109 = vcmp.eq.s32.totalorder %v1073, 1
      %vm1110 = vcmp.eq.s32.totalorder %v1074, 1
      %vm1111 = vcmp.eq.s32.totalorder %v1075, 1
      %vm1112 = vcmp.eq.s32.totalorder %v1076, 1
      %vm1113 = vcmp.eq.s32.totalorder %v1077, 1
      %vm1114 = vcmp.eq.s32.totalorder %v1078, 1
      %vm1115 = vcmp.eq.s32.totalorder %v1079, 1
      %vm1116 = vcmp.eq.s32.totalorder %v1080, 1
      %vm1117 = vcmp.eq.s32.totalorder %v1081, 1
      %vm1118 = vcmp.eq.s32.totalorder %v1082, 1
      %vm1119 = vcmp.eq.s32.totalorder %v1083, 1
      %vm1120 = vcmp.eq.s32.totalorder %v1084, 1
      %vm1121 = vcmp.eq.s32.totalorder %v1085, 1
      %vm1122 = vcmp.eq.s32.totalorder %v1086, 1
      %vm1123 = vcmp.eq.s32.totalorder %v1087, 1
      %v1124 = vsel %vm1088, %v1051, 0.0
      %v1125 = vsel %vm1089, %v950, 0.0
      %v1126 = vsel %vm1090, %v952, 0.0
      %v1127 = vsel %vm1091, %v954, 0.0
      %v1128 = vsel %vm1092, %v956, 0.0
      %v1129 = vsel %vm1093, %v958, 0.0
      %v1130 = vsel %vm1094, %v960, 0.0
      %v1131 = vsel %vm1095, %v962, 0.0
      %v1132 = vsel %vm1096, %v964, 0.0
      %v1133 = vsel %vm1097, %v966, 0.0
      %v1134 = vsel %vm1098, %v968, 0.0
      %v1135 = vsel %vm1099, %v970, 0.0
      %v1136 = vsel %vm1100, %v972, 0.0
      %v1137 = vsel %vm1101, %v974, 0.0
      %v1138 = vsel %vm1102, %v976, 0.0
      %v1139 = vsel %vm1103, %v978, 0.0
      %v1140 = vsel %vm1104, %v980, 0.0
      %v1141 = vsel %vm1105, %v982, 0.0
      %v1142 = vsel %vm1106, %v984, 0.0
      %v1143 = vsel %vm1107, %v986, 0.0
      %v1144 = vsel %vm1108, %v988, 0.0
      %v1145 = vsel %vm1109, %v990, 0.0
      %v1146 = vsel %vm1110, %v992, 0.0
      %v1147 = vsel %vm1111, %v994, 0.0
      %v1148 = vsel %vm1112, %v996, 0.0
      %v1149 = vsel %vm1113, %v998, 0.0
      %v1150 = vsel %vm1114, %v1000, 0.0
      %v1151 = vsel %vm1115, %v1002, 0.0
      %v1152 = vsel %vm1116, %v1004, 0.0
      %v1153 = vsel %vm1117, %v1006, 0.0
      %v1154 = vsel %vm1118, %v1008, 0.0
      %v1155 = vsel %vm1119, %v1010, 0.0
      %v1156 = vsel %vm1120, %v1012, 0.0
      %v1157 = vsel %vm1121, %v1014, 0.0
      %v1158 = vsel %vm1122, %v1015, 0.0
      %v1159 = vsel %vm1123, %v950, 0.0
      %vm1160 = vcmp.lt.s32.totalorder %v843, 15
      %vm1161 = vcmp.lt.s32.totalorder %v844, 15
      %vm1162 = vcmp.lt.s32.totalorder %v845, 15
      %vm1163 = vcmp.lt.s32.totalorder %v846, 15
      %vm1164 = vcmp.lt.s32.totalorder %v847, 15
      %vm1165 = vcmp.lt.s32.totalorder %v848, 15
      %vm1166 = vcmp.lt.s32.totalorder %v849, 15
      %vm1167 = vcmp.lt.s32.totalorder %v850, 15
      %vm1168 = vcmp.lt.s32.totalorder %v851, 15
      %vm1169 = vcmp.lt.s32.totalorder %v852, 15
      %vm1170 = vcmp.lt.s32.totalorder %v853, 15
      %vm1171 = vcmp.lt.s32.totalorder %v854, 15
      %vm1172 = vcmp.lt.s32.totalorder %v855, 15
      %vm1173 = vcmp.lt.s32.totalorder %v856, 15
      %vm1174 = vcmp.lt.s32.totalorder %v857, 15
      %vm1175 = vcmp.lt.s32.totalorder %v858, 15
      %vm1176 = vcmp.lt.s32.totalorder %v859, 15
      %vm1177 = vcmp.lt.s32.totalorder %v860, 15
      %vm1178 = vcmp.lt.s32.totalorder %v861, 15
      %vm1179 = vcmp.lt.s32.totalorder %v862, 15
      %vm1180 = vcmp.lt.s32.totalorder %v863, 15
      %vm1181 = vcmp.lt.s32.totalorder %v864, 15
      %vm1182 = vcmp.lt.s32.totalorder %v865, 15
      %vm1183 = vcmp.lt.s32.totalorder %v866, 15
      %vm1184 = vcmp.lt.s32.totalorder %v867, 15
      %vm1185 = vcmp.lt.s32.totalorder %v868, 15
      %vm1186 = vcmp.lt.s32.totalorder %v869, 15
      %vm1187 = vcmp.lt.s32.totalorder %v870, 15
      %vm1188 = vcmp.lt.s32.totalorder %v871, 15
      %vm1189 = vcmp.lt.s32.totalorder %v872, 15
      %vm1190 = vcmp.lt.s32.totalorder %v873, 15
      %vm1191 = vcmp.lt.s32.totalorder %v874, 15
      %vm1192 = vcmp.lt.s32.totalorder %v875, 15
      %vm1193 = vcmp.lt.s32.totalorder %v876, 15
      %vm1194 = vcmp.lt.s32.totalorder %v877, 15
      %vm1195 = vcmp.lt.s32.totalorder %v878, 15
      %vm1196 = vcmask 1046528
      %v1197 = vrot.slane 0.0, 1
      %v1198 = vsel %vm1196, %v1197, %v1197
      %v1199 = vrot.slane %v378, 1
      %v1200 = vsel %vm1196, %v1197, %v1199
      %v1201 = vrot.slane %v379, 1
      %v1202 = vsel %vm1196, %v1199, %v1201
      %v1203 = vrot.slane %v380, 1
      %v1204 = vsel %vm1196, %v1201, %v1203
      %v1205 = vrot.slane %v381, 1
      %v1206 = vsel %vm1196, %v1203, %v1205
      %v1207 = vrot.slane %v382, 1
      %v1208 = vsel %vm1196, %v1205, %v1207
      %v1209 = vrot.slane %v383, 1
      %v1210 = vsel %vm1196, %v1207, %v1209
      %v1211 = vrot.slane %v384, 1
      %v1212 = vsel %vm1196, %v1209, %v1211
      %v1213 = vrot.slane %v385, 1
      %v1214 = vsel %vm1196, %v1211, %v1213
      %v1215 = vrot.slane %v386, 1
      %v1216 = vsel %vm1196, %v1213, %v1215
      %v1217 = vrot.slane %v387, 1
      %v1218 = vsel %vm1196, %v1215, %v1217
      %v1219 = vrot.slane %v388, 1
      %v1220 = vsel %vm1196, %v1217, %v1219
      %v1221 = vrot.slane %v389, 1
      %v1222 = vsel %vm1196, %v1219, %v1221
      %v1223 = vrot.slane %v390, 1
      %v1224 = vsel %vm1196, %v1221, %v1223
      %v1225 = vrot.slane %v391, 1
      %v1226 = vsel %vm1196, %v1223, %v1225
      %v1227 = vrot.slane %v392, 1
      %v1228 = vsel %vm1196, %v1225, %v1227
      %v1229 = vrot.slane %v393, 1
      %v1230 = vsel %vm1196, %v1227, %v1229
      %v1231 = vrot.slane %v394, 1
      %v1232 = vsel %vm1196, %v1229, %v1231
      %v1233 = vrot.slane %v395, 1
      %v1234 = vsel %vm1196, %v1231, %v1233
      %v1235 = vrot.slane %v396, 1
      %v1236 = vsel %vm1196, %v1233, %v1235
      %v1237 = vrot.slane %v397, 1
      %v1238 = vsel %vm1196, %v1235, %v1237
      %v1239 = vrot.slane %v398, 1
      %v1240 = vsel %vm1196, %v1237, %v1239
      %v1241 = vrot.slane %v399, 1
      %v1242 = vsel %vm1196, %v1239, %v1241
      %v1243 = vrot.slane %v400, 1
      %v1244 = vsel %vm1196, %v1241, %v1243
      %v1245 = vrot.slane %v401, 1
      %v1246 = vsel %vm1196, %v1243, %v1245
      %v1247 = vrot.slane %v402, 1
      %v1248 = vsel %vm1196, %v1245, %v1247
      %v1249 = vrot.slane %v403, 1
      %v1250 = vsel %vm1196, %v1247, %v1249
      %v1251 = vrot.slane %v404, 1
      %v1252 = vsel %vm1196, %v1249, %v1251
      %v1253 = vrot.slane %v405, 1
      %v1254 = vsel %vm1196, %v1251, %v1253
      %v1255 = vrot.slane %v406, 1
      %v1256 = vsel %vm1196, %v1253, %v1255
      %v1257 = vrot.slane %v407, 1
      %v1258 = vsel %vm1196, %v1255, %v1257
      %v1259 = vrot.slane %v408, 1
      %v1260 = vsel %vm1196, %v1257, %v1259
      %v1261 = vrot.slane %v409, 1
      %v1262 = vsel %vm1196, %v1259, %v1261
      %v1263 = vsel %vm1196, %v1261, %v1197
      %v1299 = vsel %vm1196, %v1197, 0.0
      %v1300 = vsel %vm1160, 1, 0
      %v1301 = vsel %vm1161, 1, 0
      %v1302 = vsel %vm1162, 1, 0
      %v1303 = vsel %vm1163, 1, 0
      %v1304 = vsel %vm1164, 1, 0
      %v1305 = vsel %vm1165, 1, 0
      %v1306 = vsel %vm1166, 1, 0
      %v1307 = vsel %vm1167, 1, 0
      %v1308 = vsel %vm1168, 1, 0
      %v1309 = vsel %vm1169, 1, 0
      %v1310 = vsel %vm1170, 1, 0
      %v1311 = vsel %vm1171, 1, 0
      %v1312 = vsel %vm1172, 1, 0
      %v1313 = vsel %vm1173, 1, 0
      %v1314 = vsel %vm1174, 1, 0
      %v1315 = vsel %vm1175, 1, 0
      %v1316 = vsel %vm1176, 1, 0
      %v1317 = vsel %vm1177, 1, 0
      %v1318 = vsel %vm1178, 1, 0
      %v1319 = vsel %vm1179, 1, 0
      %v1320 = vsel %vm1180, 1, 0
      %v1321 = vsel %vm1181, 1, 0
      %v1322 = vsel %vm1182, 1, 0
      %v1323 = vsel %vm1183, 1, 0
      %v1324 = vsel %vm1184, 1, 0
      %v1325 = vsel %vm1185, 1, 0
      %v1326 = vsel %vm1186, 1, 0
      %v1327 = vsel %vm1187, 1, 0
      %v1328 = vsel %vm1188, 1, 0
      %v1329 = vsel %vm1189, 1, 0
      %v1330 = vsel %vm1190, 1, 0
      %v1331 = vsel %vm1191, 1, 0
      %v1332 = vsel %vm1192, 1, 0
      %v1333 = vsel %vm1193, 1, 0
      %v1334 = vsel %vm1194, 1, 0
      %v1335 = vsel %vm1195, 1, 0
      %vm1336 = vcmp.eq.s32.totalorder %v1300, 1
      %vm1337 = vcmp.eq.s32.totalorder %v1301, 1
      %vm1338 = vcmp.eq.s32.totalorder %v1302, 1
      %vm1339 = vcmp.eq.s32.totalorder %v1303, 1
      %vm1340 = vcmp.eq.s32.totalorder %v1304, 1
      %vm1341 = vcmp.eq.s32.totalorder %v1305, 1
      %vm1342 = vcmp.eq.s32.totalorder %v1306, 1
      %vm1343 = vcmp.eq.s32.totalorder %v1307, 1
      %vm1344 = vcmp.eq.s32.totalorder %v1308, 1
      %vm1345 = vcmp.eq.s32.totalorder %v1309, 1
      %vm1346 = vcmp.eq.s32.totalorder %v1310, 1
      %vm1347 = vcmp.eq.s32.totalorder %v1311, 1
      %vm1348 = vcmp.eq.s32.totalorder %v1312, 1
      %vm1349 = vcmp.eq.s32.totalorder %v1313, 1
      %vm1350 = vcmp.eq.s32.totalorder %v1314, 1
      %vm1351 = vcmp.eq.s32.totalorder %v1315, 1
      %vm1352 = vcmp.eq.s32.totalorder %v1316, 1
      %vm1353 = vcmp.eq.s32.totalorder %v1317, 1
      %vm1354 = vcmp.eq.s32.totalorder %v1318, 1
      %vm1355 = vcmp.eq.s32.totalorder %v1319, 1
      %vm1356 = vcmp.eq.s32.totalorder %v1320, 1
      %vm1357 = vcmp.eq.s32.totalorder %v1321, 1
      %vm1358 = vcmp.eq.s32.totalorder %v1322, 1
      %vm1359 = vcmp.eq.s32.totalorder %v1323, 1
      %vm1360 = vcmp.eq.s32.totalorder %v1324, 1
      %vm1361 = vcmp.eq.s32.totalorder %v1325, 1
      %vm1362 = vcmp.eq.s32.totalorder %v1326, 1
      %vm1363 = vcmp.eq.s32.totalorder %v1327, 1
      %vm1364 = vcmp.eq.s32.totalorder %v1328, 1
      %vm1365 = vcmp.eq.s32.totalorder %v1329, 1
      %vm1366 = vcmp.eq.s32.totalorder %v1330, 1
      %vm1367 = vcmp.eq.s32.totalorder %v1331, 1
      %vm1368 = vcmp.eq.s32.totalorder %v1332, 1
      %vm1369 = vcmp.eq.s32.totalorder %v1333, 1
      %vm1370 = vcmp.eq.s32.totalorder %v1334, 1
      %vm1371 = vcmp.eq.s32.totalorder %v1335, 1
      %v1372 = vsel %vm1336, %v1198, 0.0
      %v1373 = vsel %vm1337, %v1200, 0.0
      %v1374 = vsel %vm1338, %v1202, 0.0
      %v1375 = vsel %vm1339, %v1204, 0.0
      %v1376 = vsel %vm1340, %v1206, 0.0
      %v1377 = vsel %vm1341, %v1208, 0.0
      %v1378 = vsel %vm1342, %v1210, 0.0
      %v1379 = vsel %vm1343, %v1212, 0.0
      %v1380 = vsel %vm1344, %v1214, 0.0
      %v1381 = vsel %vm1345, %v1216, 0.0
      %v1382 = vsel %vm1346, %v1218, 0.0
      %v1383 = vsel %vm1347, %v1220, 0.0
      %v1384 = vsel %vm1348, %v1222, 0.0
      %v1385 = vsel %vm1349, %v1224, 0.0
      %v1386 = vsel %vm1350, %v1226, 0.0
      %v1387 = vsel %vm1351, %v1228, 0.0
      %v1388 = vsel %vm1352, %v1230, 0.0
      %v1389 = vsel %vm1353, %v1232, 0.0
      %v1390 = vsel %vm1354, %v1234, 0.0
      %v1391 = vsel %vm1355, %v1236, 0.0
      %v1392 = vsel %vm1356, %v1238, 0.0
      %v1393 = vsel %vm1357, %v1240, 0.0
      %v1394 = vsel %vm1358, %v1242, 0.0
      %v1395 = vsel %vm1359, %v1244, 0.0
      %v1396 = vsel %vm1360, %v1246, 0.0
      %v1397 = vsel %vm1361, %v1248, 0.0
      %v1398 = vsel %vm1362, %v1250, 0.0
      %v1399 = vsel %vm1363, %v1252, 0.0
      %v1400 = vsel %vm1364, %v1254, 0.0
      %v1401 = vsel %vm1365, %v1256, 0.0
      %v1402 = vsel %vm1366, %v1258, 0.0
      %v1403 = vsel %vm1367, %v1260, 0.0
      %v1404 = vsel %vm1368, %v1262, 0.0
      %v1405 = vsel %vm1369, %v1263, 0.0
      %v1406 = vsel %vm1370, %v1198, 0.0
      %v1407 = vsel %vm1371, %v1299, 0.0
      %v1408 = vld [vmem:[%s3] sm:$0xff]
      %v1409 = vld [vmem:[%s3 + $0x8] sm:$0xff]
      %v1410 = vld [vmem:[%s3 + $0x10] sm:$0xff]
      %v1411 = vld [vmem:[%s3 + $0x18] sm:$0xff]
      %v1412 = vld [vmem:[%s3 + $0x20] sm:$0xff]
      %v1413 = vld [vmem:[%s3 + $0x28] sm:$0xff]
      %v1414 = vld [vmem:[%s3 + $0x30] sm:$0xff]
      %v1415 = vld [vmem:[%s3 + $0x38] sm:$0xff]
      %v1416 = vld [vmem:[%s3 + $0x40] sm:$0xff]
      %v1417 = vld [vmem:[%s3 + $0x48] sm:$0xff]
      %v1418 = vld [vmem:[%s3 + $0x50] sm:$0xff]
      %v1419 = vld [vmem:[%s3 + $0x58] sm:$0xff]
      %v1420 = vld [vmem:[%s3 + $0x60] sm:$0xff]
      %v1421 = vld [vmem:[%s3 + $0x68] sm:$0xff]
      %v1422 = vld [vmem:[%s3 + $0x70] sm:$0xff]
      %v1423 = vld [vmem:[%s3 + $0x78] sm:$0xff]
      %v1424 = vld [vmem:[%s3 + $0x80] sm:$0xff]
      %v1425 = vld [vmem:[%s3 + $0x88] sm:$0xff]
      %v1426 = vld [vmem:[%s3 + $0x90] sm:$0xff]
      %v1427 = vld [vmem:[%s3 + $0x98] sm:$0xff]
      %v1428 = vld [vmem:[%s3 + $0xa0] sm:$0xff]
      %v1429 = vld [vmem:[%s3 + $0xa8] sm:$0xff]
      %v1430 = vld [vmem:[%s3 + $0xb0] sm:$0xff]
      %v1431 = vld [vmem:[%s3 + $0xb8] sm:$0xff]
      %v1432 = vld [vmem:[%s3 + $0xc0] sm:$0xff]
      %v1433 = vld [vmem:[%s3 + $0xc8] sm:$0xff]
      %v1434 = vld [vmem:[%s3 + $0xd0] sm:$0xff]
      %v1435 = vld [vmem:[%s3 + $0xd8] sm:$0xff]
      %v1436 = vld [vmem:[%s3 + $0xe0] sm:$0xff]
      %v1437 = vld [vmem:[%s3 + $0xe8] sm:$0xff]
      %v1438 = vld [vmem:[%s3 + $0xf0] sm:$0xff]
      %v1439 = vld [vmem:[%s3 + $0xf8] sm:$0xff]
      %v1440 = vld [vmem:[%s3 + $0x100] sm:$0xff]
      %v1441 = vld [vmem:[%s3 + $0x108] sm:$0xff]
      %v1442 = vld [vmem:[%s3 + $0x110] sm:$0xff]
      %v1443 = vld [vmem:[%s3 + $0x118] sm:$0xff]
      %v1444 = vld [vmem:[%s3 + $0x120] sm:$0xff]
      %v1445 = vld [vmem:[%s3 + $0x128] sm:$0xff]
      %v1446 = vld [vmem:[%s3 + $0x130] sm:$0xff]
      %v1447 = vld [vmem:[%s3 + $0x138] sm:$0xff]
      %v1448 = vld [vmem:[%s3 + $0x140] sm:$0xff]
      %v1449 = vld [vmem:[%s3 + $0x148] sm:$0xff]
      %v1450 = vld [vmem:[%s3 + $0x150] sm:$0xff]
      %v1451 = vld [vmem:[%s3 + $0x158] sm:$0xff]
      %v1452 = vld [vmem:[%s3 + $0x160] sm:$0xff]
      %v1453 = vld [vmem:[%s3 + $0x168] sm:$0xff]
      %v1454 = vld [vmem:[%s3 + $0x170] sm:$0xff]
      %v1455 = vld [vmem:[%s3 + $0x178] sm:$0xff]
      %s1456 = scalar_lea.vmem %s3, 384
      %v1457 = vld [vmem:[%s1456] sm:$0xff]
      %v1458 = vld [vmem:[%s1456 + $0x8] sm:$0xff]
      %v1459 = vld [vmem:[%s1456 + $0x10] sm:$0xff]
      %v1460 = vld [vmem:[%s1456 + $0x18] sm:$0xff]
      %v1461 = vld [vmem:[%s1456 + $0x20] sm:$0xff]
      %v1462 = vld [vmem:[%s1456 + $0x28] sm:$0xff]
      %v1463 = vld [vmem:[%s1456 + $0x30] sm:$0xff]
      %v1464 = vld [vmem:[%s1456 + $0x38] sm:$0xff]
      %v1465 = vld [vmem:[%s1456 + $0x40] sm:$0xff]
      %v1466 = vld [vmem:[%s1456 + $0x48] sm:$0xff]
      %v1467 = vld [vmem:[%s1456 + $0x50] sm:$0xff]
      %v1468 = vld [vmem:[%s1456 + $0x58] sm:$0xff]
      %v1469 = vld [vmem:[%s1456 + $0x60] sm:$0xff]
      %v1470 = vld [vmem:[%s1456 + $0x68] sm:$0xff]
      %v1471 = vld [vmem:[%s1456 + $0x70] sm:$0xff]
      %v1472 = vld [vmem:[%s1456 + $0x78] sm:$0xff]
      %v1473 = vld [vmem:[%s1456 + $0x80] sm:$0xff]
      %v1474 = vld [vmem:[%s1456 + $0x88] sm:$0xff]
      %v1475 = vld [vmem:[%s1456 + $0x90] sm:$0xff]
      %v1476 = vld [vmem:[%s1456 + $0x98] sm:$0xff]
      %v1477 = vld [vmem:[%s1456 + $0xa0] sm:$0xff]
      %v1478 = vld [vmem:[%s1456 + $0xa8] sm:$0xff]
      %v1479 = vld [vmem:[%s1456 + $0xb0] sm:$0xff]
      %v1480 = vld [vmem:[%s1456 + $0xb8] sm:$0xff]
      %v1481 = vld [vmem:[%s1456 + $0xc0] sm:$0xff]
      %v1482 = vld [vmem:[%s1456 + $0xc8] sm:$0xff]
      %v1483 = vld [vmem:[%s1456 + $0xd0] sm:$0xff]
      %v1484 = vld [vmem:[%s1456 + $0xd8] sm:$0xff]
      %v1485 = vld [vmem:[%s1456 + $0xe0] sm:$0xff]
      %v1486 = vld [vmem:[%s1456 + $0xe8] sm:$0xff]
      %v1487 = vld [vmem:[%s1456 + $0xf0] sm:$0xff]
      %v1488 = vld [vmem:[%s1456 + $0xf8] sm:$0xff]
      %v1489 = vld [vmem:[%s1456 + $0x100] sm:$0xff]
      %v1490 = vld [vmem:[%s1456 + $0x108] sm:$0xff]
      %v1491 = vld [vmem:[%s1456 + $0x110] sm:$0xff]
      %v1492 = vld [vmem:[%s1456 + $0x118] sm:$0xff]
      %v1493 = vld [vmem:[%s1456 + $0x120] sm:$0xff]
      %v1494 = vld [vmem:[%s1456 + $0x128] sm:$0xff]
      %v1495 = vld [vmem:[%s1456 + $0x130] sm:$0xff]
      %v1496 = vld [vmem:[%s1456 + $0x138] sm:$0xff]
      %v1497 = vld [vmem:[%s1456 + $0x140] sm:$0xff]
      %v1498 = vld [vmem:[%s1456 + $0x148] sm:$0xff]
      %v1499 = vld [vmem:[%s1456 + $0x150] sm:$0xff]
      %v1500 = vld [vmem:[%s1456 + $0x158] sm:$0xff]
      %v1501 = vld [vmem:[%s1456 + $0x160] sm:$0xff]
      %v1502 = vld [vmem:[%s1456 + $0x168] sm:$0xff]
      %v1503 = vld [vmem:[%s1456 + $0x170] sm:$0xff]
      %v1504 = vld [vmem:[%s1456 + $0x178] sm:$0xff]
      %1505 = vmatprep.subr.mxu0 0.0
      %1506 = vmatpush1.msra.mxu0 %v1457
      %1507 = vmatprep.subr.mxu0 0.0
      %1508 = vmatpush1.msra.mxu0 %v1458
      %1509 = vmatprep.subr.mxu0 0.0
      %1510 = vmatpush1.msra.mxu0 %v1459
      %1511 = vmatprep.subr.mxu0 0.0
      %1512 = vmatpush1.msra.mxu0 %v1460
      %1513 = vmatprep.subr.mxu0 0.0
      %1514 = vmatpush1.msra.mxu0 %v1461
      %1515 = vmatprep.subr.mxu0 0.0
      %1516 = vmatpush1.msra.mxu0 %v1462
      %1517 = vmatprep.subr.mxu0 0.0
      %1518 = vmatpush1.msra.mxu0 %v1463
      %1519 = vmatprep.subr.mxu0 0.0
      %1520 = vmatpush1.msra.mxu0 %v1464
      %1521 = vmatprep.subr.mxu0 0.0
      %1522 = vmatpush1.msra.mxu0 %v1465
      %1523 = vmatprep.subr.mxu0 0.0
      %1524 = vmatpush1.msra.mxu0 %v1466
      %1525 = vmatprep.subr.mxu0 0.0
      %1526 = vmatpush1.msra.mxu0 %v1467
      %1527 = vmatprep.subr.mxu0 0.0
      %1528 = vmatpush1.msra.mxu0 %v1468
      %1529 = vmatprep.subr.mxu0 0.0
      %1530 = vmatpush1.msra.mxu0 %v1469
      %1531 = vmatprep.subr.mxu0 0.0
      %1532 = vmatpush1.msra.mxu0 %v1470
      %1533 = vmatprep.subr.mxu0 0.0
      %1534 = vmatpush1.msra.mxu0 %v1471
      %1535 = vmatprep.subr.mxu0 0.0
      %1536 = vmatpush1.msra.mxu0 %v1472
      %1537 = vmatprep.subr.mxu0 0.0
      %1538 = vmatpush1.msra.mxu0 %v1473
      %1539 = vmatprep.subr.mxu0 0.0
      %1540 = vmatpush1.msra.mxu0 %v1474
      %1541 = vmatprep.subr.mxu0 0.0
      %1542 = vmatpush1.msra.mxu0 %v1475
      %1543 = vmatprep.subr.mxu0 0.0
      %1544 = vmatpush1.msra.mxu0 %v1476
      %1545 = vmatprep.subr.mxu0 0.0
      %1546 = vmatpush1.msra.mxu0 %v1477
      %1547 = vmatprep.subr.mxu0 0.0
      %1548 = vmatpush1.msra.mxu0 %v1478
      %1549 = vmatprep.subr.mxu0 0.0
      %1550 = vmatpush1.msra.mxu0 %v1479
      %1551 = vmatprep.subr.mxu0 0.0
      %1552 = vmatpush1.msra.mxu0 %v1480
      %1553 = vmatprep.subr.mxu0 0.0
      %1554 = vmatpush1.msra.mxu0 %v1481
      %1555 = vmatprep.subr.mxu0 0.0
      %1556 = vmatpush1.msra.mxu0 %v1482
      %1557 = vmatprep.subr.mxu0 0.0
      %1558 = vmatpush1.msra.mxu0 %v1483
      %1559 = vmatprep.subr.mxu0 0.0
      %1560 = vmatpush1.msra.mxu0 %v1484
      %1561 = vmatprep.subr.mxu0 0.0
      %1562 = vmatpush1.msra.mxu0 %v1485
      %1563 = vmatprep.subr.mxu0 0.0
      %1564 = vmatpush1.msra.mxu0 %v1486
      %1565 = vmatprep.subr.mxu0 0.0
      %1566 = vmatpush1.msra.mxu0 %v1487
      %1567 = vmatprep.subr.mxu0 0.0
      %1568 = vmatpush1.msra.mxu0 %v1488
      %1569 = vmatprep.mubr.f32.mxu0 %v378
      %1570 = vmatmul.mubr.f32.gmra.mrb[0].mxu0 %v1126
      %v1571 = vpop.f32.mrb[0].mxu0
      %v1572 = vadd.f32 0.0, %v1571
      %v1573 = vpop.f32.mrb[0].mxu0
      %1574 = vmatprep.mubr.f32.mxu0 %v379
      %1575 = vmatmul.mubr.f32.gmra.mrb[0].mxu0 %v1127
      %v1576 = vpop.f32.mrb[0].mxu0
      %v1577 = vadd.f32 0.0, %v1576
      %v1578 = vpop.f32.mrb[0].mxu0
      %1579 = vmatprep.mubr.f32.mxu0 %v380
      %1580 = vmatmul.mubr.f32.gmra.mrb[0].mxu0 %v1128
      %v1581 = vpop.f32.mrb[0].mxu0
      %v1582 = vadd.f32 0.0, %v1581
      %v1583 = vpop.f32.mrb[0].mxu0
      %1584 = vmatprep.mubr.f32.mxu0 %v381
      %1585 = vmatmul.mubr.f32.gmra.mrb[0].mxu0 %v1129
      %v1586 = vpop.f32.mrb[0].mxu0
      %v1587 = vadd.f32 0.0, %v1586
      %v1588 = vpop.f32.mrb[0].mxu0
      %1589 = vmatprep.mubr.f32.mxu0 %v382
      %1590 = vmatmul.mubr.f32.gmra.mrb[0].mxu0 %v1130
      %v1591 = vpop.f32.mrb[0].mxu0
      %v1592 = vadd.f32 0.0, %v1591
      %v1593 = vpop.f32.mrb[0].mxu0
      %1594 = vmatprep.mubr.f32.mxu0 %v383
      %1595 = vmatmul.mubr.f32.gmra.mrb[0].mxu0 %v1131
      %v1596 = vpop.f32.mrb[0].mxu0
      %v1597 = vadd.f32 0.0, %v1596
      %v1598 = vpop.f32.mrb[0].mxu0
      %1599 = vmatprep.mubr.f32.mxu0 %v384
      %1600 = vmatmul.mubr.f32.gmra.mrb[0].mxu0 %v1132
      %v1601 = vpop.f32.mrb[0].mxu0
      %v1602 = vadd.f32 0.0, %v1601
      %v1603 = vpop.f32.mrb[0].mxu0
      %1604 = vmatprep.mubr.f32.mxu0 %v385
      %1605 = vmatmul.mubr.f32.gmra.mrb[0].mxu0 %v1133
      %v1606 = vpop.f32.mrb[0].mxu0
      %v1607 = vadd.f32 0.0, %v1606
      %v1608 = vpop.f32.mrb[0].mxu0
      %1609 = vmatprep.mubr.f32.mxu0 %v386
      %1610 = vmatmul.mubr.f32.gmra.mrb[0].mxu0 %v1134
      %v1611 = vpop.f32.mrb[0].mxu0
      %v1612 = vadd.f32 0.0, %v1611
      %v1613 = vpop.f32.mrb[0].mxu0
      %1614 = vmatprep.mubr.f32.mxu0 %v387
      %1615 = vmatmul.mubr.f32.gmra.mrb[0].mxu0 %v1135
      %v1616 = vpop.f32.mrb[0].mxu0
      %v1617 = vadd.f32 0.0, %v1616
      %v1618 = vpop.f32.mrb[0].mxu0
      %1619 = vmatprep.mubr.f32.mxu0 %v388
      %1620 = vmatmul.mubr.f32.gmra.mrb[0].mxu0 %v1136
      %v1621 = vpop.f32.mrb[0].mxu0
      %v1622 = vadd.f32 0.0, %v1621
      %v1623 = vpop.f32.mrb[0].mxu0
      %1624 = vmatprep.mubr.f32.mxu0 %v389
      %1625 = vmatmul.mubr.f32.gmra.mrb[0].mxu0 %v1137
      %v1626 = vpop.f32.mrb[0].mxu0
      %v1627 = vadd.f32 0.0, %v1626
      %v1628 = vpop.f32.mrb[0].mxu0
      %1629 = vmatprep.mubr.f32.mxu0 %v390
      %1630 = vmatmul.mubr.f32.gmra.mrb[0].mxu0 %v1138
      %v1631 = vpop.f32.mrb[0].mxu0
      %v1632 = vadd.f32 0.0, %v1631
      %v1633 = vpop.f32.mrb[0].mxu0
      %1634 = vmatprep.mubr.f32.mxu0 %v391
      %1635 = vmatmul.mubr.f32.gmra.mrb[0].mxu0 %v1139
      %v1636 = vpop.f32.mrb[0].mxu0
      %v1637 = vadd.f32 0.0, %v1636
      %v1638 = vpop.f32.mrb[0].mxu0
      %1639 = vmatprep.mubr.f32.mxu0 %v392
      %1640 = vmatmul.mubr.f32.gmra.mrb[0].mxu0 %v1140
      %v1641 = vpop.f32.mrb[0].mxu0
      %v1642 = vadd.f32 0.0, %v1641
      %v1643 = vpop.f32.mrb[0].mxu0
      %1644 = vmatprep.mubr.f32.mxu0 %v393
      %1645 = vmatmul.mubr.f32.gmra.mrb[0].mxu0 %v1141
      %v1646 = vpop.f32.mrb[0].mxu0
      %v1647 = vadd.f32 0.0, %v1646
      %v1648 = vpop.f32.mrb[0].mxu0
      %1649 = vmatprep.mubr.f32.mxu0 %v394
      %1650 = vmatmul.mubr.f32.gmra.mrb[0].mxu0 %v1142
      %v1651 = vpop.f32.mrb[0].mxu0
      %v1652 = vadd.f32 0.0, %v1651
      %v1653 = vpop.f32.mrb[0].mxu0
      %1654 = vmatprep.mubr.f32.mxu0 %v395
      %1655 = vmatmul.mubr.f32.gmra.mrb[0].mxu0 %v1143
      %v1656 = vpop.f32.mrb[0].mxu0
      %v1657 = vadd.f32 0.0, %v1656
      %v1658 = vpop.f32.mrb[0].mxu0
      %1659 = vmatprep.mubr.f32.mxu0 %v396
      %1660 = vmatmul.mubr.f32.gmra.mrb[0].mxu0 %v1144
      %v1661 = vpop.f32.mrb[0].mxu0
      %v1662 = vadd.f32 0.0, %v1661
      %v1663 = vpop.f32.mrb[0].mxu0
      %1664 = vmatprep.mubr.f32.mxu0 %v397
      %1665 = vmatmul.mubr.f32.gmra.mrb[0].mxu0 %v1145
      %v1666 = vpop.f32.mrb[0].mxu0
      %v1667 = vadd.f32 0.0, %v1666
      %v1668 = vpop.f32.mrb[0].mxu0
      %1669 = vmatprep.mubr.f32.mxu0 %v398
      %1670 = vmatmul.mubr.f32.gmra.mrb[0].mxu0 %v1146
      %v1671 = vpop.f32.mrb[0].mxu0
      %v1672 = vadd.f32 0.0, %v1671
      %v1673 = vpop.f32.mrb[0].mxu0
      %1674 = vmatprep.mubr.f32.mxu0 %v399
      %1675 = vmatmul.mubr.f32.gmra.mrb[0].mxu0 %v1147
      %v1676 = vpop.f32.mrb[0].mxu0
      %v1677 = vadd.f32 0.0, %v1676
      %v1678 = vpop.f32.mrb[0].mxu0
      %1679 = vmatprep.mubr.f32.mxu0 %v400
      %1680 = vmatmul.mubr.f32.gmra.mrb[0].mxu0 %v1148
      %v1681 = vpop.f32.mrb[0].mxu0
      %v1682 = vadd.f32 0.0, %v1681
      %v1683 = vpop.f32.mrb[0].mxu0
      %1684 = vmatprep.mubr.f32.mxu0 %v401
      %1685 = vmatmul.mubr.f32.gmra.mrb[0].mxu0 %v1149
      %v1686 = vpop.f32.mrb[0].mxu0
      %v1687 = vadd.f32 0.0, %v1686
      %v1688 = vpop.f32.mrb[0].mxu0
      %1689 = vmatprep.mubr.f32.mxu0 %v402
      %1690 = vmatmul.mubr.f32.gmra.mrb[0].mxu0 %v1150
      %v1691 = vpop.f32.mrb[0].mxu0
      %v1692 = vadd.f32 0.0, %v1691
      %v1693 = vpop.f32.mrb[0].mxu0
      %1694 = vmatprep.mubr.f32.mxu0 %v403
      %1695 = vmatmul.mubr.f32.gmra.mrb[0].mxu0 %v1151
      %v1696 = vpop.f32.mrb[0].mxu0
      %v1697 = vadd.f32 0.0, %v1696
      %v1698 = vpop.f32.mrb[0].mxu0
      %1699 = vmatprep.mubr.f32.mxu0 %v404
      %1700 = vmatmul.mubr.f32.gmra.mrb[0].mxu0 %v1152
      %v1701 = vpop.f32.mrb[0].mxu0
      %v1702 = vadd.f32 0.0, %v1701
      %v1703 = vpop.f32.mrb[0].mxu0
      %1704 = vmatprep.mubr.f32.mxu0 %v405
      %1705 = vmatmul.mubr.f32.gmra.mrb[0].mxu0 %v1153
      %v1706 = vpop.f32.mrb[0].mxu0
      %v1707 = vadd.f32 0.0, %v1706
      %v1708 = vpop.f32.mrb[0].mxu0
      %1709 = vmatprep.mubr.f32.mxu0 %v406
      %1710 = vmatmul.mubr.f32.gmra.mrb[0].mxu0 %v1154
      %v1711 = vpop.f32.mrb[0].mxu0
      %v1712 = vadd.f32 0.0, %v1711
      %v1713 = vpop.f32.mrb[0].mxu0
      %1714 = vmatprep.mubr.f32.mxu0 %v407
      %1715 = vmatmul.mubr.f32.gmra.mrb[0].mxu0 %v1155
      %v1716 = vpop.f32.mrb[0].mxu0
      %v1717 = vadd.f32 0.0, %v1716
      %v1718 = vpop.f32.mrb[0].mxu0
      %1719 = vmatprep.mubr.f32.mxu0 %v408
      %1720 = vmatmul.mubr.f32.gmra.mrb[0].mxu0 %v1156
      %v1721 = vpop.f32.mrb[0].mxu0
      %v1722 = vadd.f32 0.0, %v1721
      %v1723 = vpop.f32.mrb[0].mxu0
      %1724 = vmatprep.mubr.f32.mxu0 %v409
      %1725 = vmatmul.mubr.f32.gmra.mrb[0].mxu0 %v1157
      %v1726 = vpop.f32.mrb[0].mxu0
      %v1727 = vadd.f32 0.0, %v1726
      %v1728 = vpop.f32.mrb[0].mxu0
      %1729 = vdwg.mxu0
      %1730 = vmatprep.subr.mxu0 0.0
      %1731 = vmatpush1.msra.mxu0 %v1489
      %1732 = vmatprep.subr.mxu0 0.0
      %1733 = vmatpush1.msra.mxu0 %v1490
      %1734 = vmatprep.subr.mxu0 0.0
      %1735 = vmatpush1.msra.mxu0 %v1491
      %1736 = vmatprep.subr.mxu0 0.0
      %1737 = vmatpush1.msra.mxu0 %v1492
      %1738 = vmatprep.subr.mxu0 0.0
      %1739 = vmatpush1.msra.mxu0 %v1493
      %1740 = vmatprep.subr.mxu0 0.0
      %1741 = vmatpush1.msra.mxu0 %v1494
      %1742 = vmatprep.subr.mxu0 0.0
      %1743 = vmatpush1.msra.mxu0 %v1495
      %1744 = vmatprep.subr.mxu0 0.0
      %1745 = vmatpush1.msra.mxu0 %v1496
      %1746 = vmatprep.subr.mxu0 0.0
      %1747 = vmatpush1.msra.mxu0 %v1497
      %1748 = vmatprep.subr.mxu0 0.0
      %1749 = vmatpush1.msra.mxu0 %v1498
      %1750 = vmatprep.subr.mxu0 0.0
      %1751 = vmatpush1.msra.mxu0 %v1499
      %1752 = vmatprep.subr.mxu0 0.0
      %1753 = vmatpush1.msra.mxu0 %v1500
      %1754 = vmatprep.subr.mxu0 0.0
      %1755 = vmatpush1.msra.mxu0 %v1501
      %1756 = vmatprep.subr.mxu0 0.0
      %1757 = vmatpush1.msra.mxu0 %v1502
      %1758 = vmatprep.subr.mxu0 0.0
      %1759 = vmatpush1.msra.mxu0 %v1503
      %1760 = vmatprep.subr.mxu0 0.0
      %1761 = vmatpush1.msra.mxu0 %v1504
      %1762 = vmatprep.subr.mxu0 0.0
      %1763 = vmatpush1.msra.mxu0 0.0
      %1764 = vmatprep.subr.mxu0 0.0
      %1765 = vmatpush1.msra.mxu0 0.0
      %1766 = vmatprep.subr.mxu0 0.0
      %1767 = vmatpush1.msra.mxu0 0.0
      %1768 = vmatprep.subr.mxu0 0.0
      %1769 = vmatpush1.msra.mxu0 0.0
      %1770 = vmatprep.subr.mxu0 0.0
      %1771 = vmatpush1.msra.mxu0 0.0
      %1772 = vmatprep.subr.mxu0 0.0
      %1773 = vmatpush1.msra.mxu0 0.0
      %1774 = vmatprep.subr.mxu0 0.0
      %1775 = vmatpush1.msra.mxu0 0.0
      %1776 = vmatprep.subr.mxu0 0.0
      %1777 = vmatpush1.msra.mxu0 0.0
      %1778 = vmatprep.subr.mxu0 0.0
      %1779 = vmatpush1.msra.mxu0 0.0
      %1780 = vmatprep.subr.mxu0 0.0
      %1781 = vmatpush1.msra.mxu0 0.0
      %1782 = vmatprep.subr.mxu0 0.0
      %1783 = vmatpush1.msra.mxu0 0.0
      %1784 = vmatprep.subr.mxu0 0.0
      %1785 = vmatpush1.msra.mxu0 0.0
      %1786 = vmatprep.subr.mxu0 0.0
      %1787 = vmatpush1.msra.mxu0 0.0
      %1788 = vmatprep.subr.mxu0 0.0
      %1789 = vmatpush1.msra.mxu0 0.0
      %1790 = vmatprep.subr.mxu0 0.0
      %1791 = vmatpush1.msra.mxu0 0.0
      %1792 = vmatprep.subr.mxu0 0.0
      %1793 = vmatpush1.msra.mxu0 0.0
      %1794 = vmatprep.mubr.f32.mxu0 0.0
      %1795 = vmatmul.mubr.f32.gmra.mrb[0].mxu0 %v1374
      %v1796 = vpop.f32.mrb[0].mxu0
      %v1797 = vadd.f32 %v1572, %v1796
      %v1798 = vpop.f32.mrb[0].mxu0
      %1799 = vmatprep.mubr.f32.mxu0 0.0
      %1800 = vmatmul.mubr.f32.gmra.mrb[0].mxu0 %v1375
      %v1801 = vpop.f32.mrb[0].mxu0
      %v1802 = vadd.f32 %v1577, %v1801
      %v1803 = vpop.f32.mrb[0].mxu0
      %1804 = vmatprep.mubr.f32.mxu0 0.0
      %1805 = vmatmul.mubr.f32.gmra.mrb[0].mxu0 %v1376
      %v1806 = vpop.f32.mrb[0].mxu0
      %v1807 = vadd.f32 %v1582, %v1806
      %v1808 = vpop.f32.mrb[0].mxu0
      %1809 = vmatprep.mubr.f32.mxu0 0.0
      %1810 = vmatmul.mubr.f32.gmra.mrb[0].mxu0 %v1377
      %v1811 = vpop.f32.mrb[0].mxu0
      %v1812 = vadd.f32 %v1587, %v1811
      %v1813 = vpop.f32.mrb[0].mxu0
      %1814 = vmatprep.mubr.f32.mxu0 0.0
      %1815 = vmatmul.mubr.f32.gmra.mrb[0].mxu0 %v1378
      %v1816 = vpop.f32.mrb[0].mxu0
      %v1817 = vadd.f32 %v1592, %v1816
      %v1818 = vpop.f32.mrb[0].mxu0
      %1819 = vmatprep.mubr.f32.mxu0 0.0
      %1820 = vmatmul.mubr.f32.gmra.mrb[0].mxu0 %v1379
      %v1821 = vpop.f32.mrb[0].mxu0
      %v1822 = vadd.f32 %v1597, %v1821
      %v1823 = vpop.f32.mrb[0].mxu0
      %1824 = vmatprep.mubr.f32.mxu0 0.0
      %1825 = vmatmul.mubr.f32.gmra.mrb[0].mxu0 %v1380
      %v1826 = vpop.f32.mrb[0].mxu0
      %v1827 = vadd.f32 %v1602, %v1826
      %v1828 = vpop.f32.mrb[0].mxu0
      %1829 = vmatprep.mubr.f32.mxu0 0.0
      %1830 = vmatmul.mubr.f32.gmra.mrb[0].mxu0 %v1381
      %v1831 = vpop.f32.mrb[0].mxu0
      %v1832 = vadd.f32 %v1607, %v1831
      %v1833 = vpop.f32.mrb[0].mxu0
      %1834 = vmatprep.mubr.f32.mxu0 0.0
      %1835 = vmatmul.mubr.f32.gmra.mrb[0].mxu0 %v1382
      %v1836 = vpop.f32.mrb[0].mxu0
      %v1837 = vadd.f32 %v1612, %v1836
      %v1838 = vpop.f32.mrb[0].mxu0
      %1839 = vmatprep.mubr.f32.mxu0 0.0
      %1840 = vmatmul.mubr.f32.gmra.mrb[0].mxu0 %v1383
      %v1841 = vpop.f32.mrb[0].mxu0
      %v1842 = vadd.f32 %v1617, %v1841
      %v1843 = vpop.f32.mrb[0].mxu0
      %1844 = vmatprep.mubr.f32.mxu0 0.0
      %1845 = vmatmul.mubr.f32.gmra.mrb[0].mxu0 %v1384
      %v1846 = vpop.f32.mrb[0].mxu0
      %v1847 = vadd.f32 %v1622, %v1846
      %v1848 = vpop.f32.mrb[0].mxu0
      %1849 = vmatprep.mubr.f32.mxu0 0.0
      %1850 = vmatmul.mubr.f32.gmra.mrb[0].mxu0 %v1385
      %v1851 = vpop.f32.mrb[0].mxu0
      %v1852 = vadd.f32 %v1627, %v1851
      %v1853 = vpop.f32.mrb[0].mxu0
      %1854 = vmatprep.mubr.f32.mxu0 0.0
      %1855 = vmatmul.mubr.f32.gmra.mrb[0].mxu0 %v1386
      %v1856 = vpop.f32.mrb[0].mxu0
      %v1857 = vadd.f32 %v1632, %v1856
      %v1858 = vpop.f32.mrb[0].mxu0
      %1859 = vmatprep.mubr.f32.mxu0 0.0
      %1860 = vmatmul.mubr.f32.gmra.mrb[0].mxu0 %v1387
      %v1861 = vpop.f32.mrb[0].mxu0
      %v1862 = vadd.f32 %v1637, %v1861
      %v1863 = vpop.f32.mrb[0].mxu0
      %1864 = vmatprep.mubr.f32.mxu0 0.0
      %1865 = vmatmul.mubr.f32.gmra.mrb[0].mxu0 %v1388
      %v1866 = vpop.f32.mrb[0].mxu0
      %v1867 = vadd.f32 %v1642, %v1866
      %v1868 = vpop.f32.mrb[0].mxu0
      %1869 = vmatprep.mubr.f32.mxu0 0.0
      %1870 = vmatmul.mubr.f32.gmra.mrb[0].mxu0 %v1389
      %v1871 = vpop.f32.mrb[0].mxu0
      %v1872 = vadd.f32 %v1647, %v1871
      %v1873 = vpop.f32.mrb[0].mxu0
      %1874 = vmatprep.mubr.f32.mxu0 0.0
      %1875 = vmatmul.mubr.f32.gmra.mrb[0].mxu0 %v1390
      %v1876 = vpop.f32.mrb[0].mxu0
      %v1877 = vadd.f32 %v1652, %v1876
      %v1878 = vpop.f32.mrb[0].mxu0
      %1879 = vmatprep.mubr.f32.mxu0 0.0
      %1880 = vmatmul.mubr.f32.gmra.mrb[0].mxu0 %v1391
      %v1881 = vpop.f32.mrb[0].mxu0
      %v1882 = vadd.f32 %v1657, %v1881
      %v1883 = vpop.f32.mrb[0].mxu0
      %1884 = vmatprep.mubr.f32.mxu0 0.0
      %1885 = vmatmul.mubr.f32.gmra.mrb[0].mxu0 %v1392
      %v1886 = vpop.f32.mrb[0].mxu0
      %v1887 = vadd.f32 %v1662, %v1886
      %v1888 = vpop.f32.mrb[0].mxu0
      %1889 = vmatprep.mubr.f32.mxu0 0.0
      %1890 = vmatmul.mubr.f32.gmra.mrb[0].mxu0 %v1393
      %v1891 = vpop.f32.mrb[0].mxu0
      %v1892 = vadd.f32 %v1667, %v1891
      %v1893 = vpop.f32.mrb[0].mxu0
      %1894 = vmatprep.mubr.f32.mxu0 0.0
      %1895 = vmatmul.mubr.f32.gmra.mrb[0].mxu0 %v1394
      %v1896 = vpop.f32.mrb[0].mxu0
      %v1897 = vadd.f32 %v1672, %v1896
      %v1898 = vpop.f32.mrb[0].mxu0
      %1899 = vmatprep.mubr.f32.mxu0 0.0
      %1900 = vmatmul.mubr.f32.gmra.mrb[0].mxu0 %v1395
      %v1901 = vpop.f32.mrb[0].mxu0
      %v1902 = vadd.f32 %v1677, %v1901
      %v1903 = vpop.f32.mrb[0].mxu0
      %1904 = vmatprep.mubr.f32.mxu0 0.0
      %1905 = vmatmul.mubr.f32.gmra.mrb[0].mxu0 %v1396
      %v1906 = vpop.f32.mrb[0].mxu0
      %v1907 = vadd.f32 %v1682, %v1906
      %v1908 = vpop.f32.mrb[0].mxu0
      %1909 = vmatprep.mubr.f32.mxu0 0.0
      %1910 = vmatmul.mubr.f32.gmra.mrb[0].mxu0 %v1397
      %v1911 = vpop.f32.mrb[0].mxu0
      %v1912 = vadd.f32 %v1687, %v1911
      %v1913 = vpop.f32.mrb[0].mxu0
      %1914 = vmatprep.mubr.f32.mxu0 0.0
      %1915 = vmatmul.mubr.f32.gmra.mrb[0].mxu0 %v1398
      %v1916 = vpop.f32.mrb[0].mxu0
      %v1917 = vadd.f32 %v1692, %v1916
      %v1918 = vpop.f32.mrb[0].mxu0
      %1919 = vmatprep.mubr.f32.mxu0 0.0
      %1920 = vmatmul.mubr.f32.gmra.mrb[0].mxu0 %v1399
      %v1921 = vpop.f32.mrb[0].mxu0
      %v1922 = vadd.f32 %v1697, %v1921
      %v1923 = vpop.f32.mrb[0].mxu0
      %1924 = vmatprep.mubr.f32.mxu0 0.0
      %1925 = vmatmul.mubr.f32.gmra.mrb[0].mxu0 %v1400
      %v1926 = vpop.f32.mrb[0].mxu0
      %v1927 = vadd.f32 %v1702, %v1926
      %v1928 = vpop.f32.mrb[0].mxu0
      %1929 = vmatprep.mubr.f32.mxu0 0.0
      %1930 = vmatmul.mubr.f32.gmra.mrb[0].mxu0 %v1401
      %v1931 = vpop.f32.mrb[0].mxu0
      %v1932 = vadd.f32 %v1707, %v1931
      %v1933 = vpop.f32.mrb[0].mxu0
      %1934 = vmatprep.mubr.f32.mxu0 0.0
      %1935 = vmatmul.mubr.f32.gmra.mrb[0].mxu0 %v1402
      %v1936 = vpop.f32.mrb[0].mxu0
      %v1937 = vadd.f32 %v1712, %v1936
      %v1938 = vpop.f32.mrb[0].mxu0
      %1939 = vmatprep.mubr.f32.mxu0 0.0
      %1940 = vmatmul.mubr.f32.gmra.mrb[0].mxu0 %v1403
      %v1941 = vpop.f32.mrb[0].mxu0
      %v1942 = vadd.f32 %v1717, %v1941
      %v1943 = vpop.f32.mrb[0].mxu0
      %1944 = vmatprep.mubr.f32.mxu0 0.0
      %1945 = vmatmul.mubr.f32.gmra.mrb[0].mxu0 %v1404
      %v1946 = vpop.f32.mrb[0].mxu0
      %v1947 = vadd.f32 %v1722, %v1946
      %v1948 = vpop.f32.mrb[0].mxu0
      %1949 = vmatprep.mubr.f32.mxu0 0.0
      %1950 = vmatmul.mubr.f32.gmra.mrb[0].mxu0 %v1405
      %v1951 = vpop.f32.mrb[0].mxu0
      %v1952 = vadd.f32 %v1727, %v1951
      %v1953 = vpop.f32.mrb[0].mxu0
      %1954 = vdwg.mxu0
      %1955 = vmatprep.subr.mxu0 0.0
      %1956 = vmatpush1.msra.mxu0 %v1408
      %1957 = vmatprep.subr.mxu0 0.0
      %1958 = vmatpush1.msra.mxu0 %v1409
      %1959 = vmatprep.subr.mxu0 0.0
      %1960 = vmatpush1.msra.mxu0 %v1410
      %1961 = vmatprep.subr.mxu0 0.0
      %1962 = vmatpush1.msra.mxu0 %v1411
      %1963 = vmatprep.subr.mxu0 0.0
      %1964 = vmatpush1.msra.mxu0 %v1412
      %1965 = vmatprep.subr.mxu0 0.0
      %1966 = vmatpush1.msra.mxu0 %v1413
      %1967 = vmatprep.subr.mxu0 0.0
      %1968 = vmatpush1.msra.mxu0 %v1414
      %1969 = vmatprep.subr.mxu0 0.0
      %1970 = vmatpush1.msra.mxu0 %v1415
      %1971 = vmatprep.subr.mxu0 0.0
      %1972 = vmatpush1.msra.mxu0 %v1416
      %1973 = vmatprep.subr.mxu0 0.0
      %1974 = vmatpush1.msra.mxu0 %v1417
      %1975 = vmatprep.subr.mxu0 0.0
      %1976 = vmatpush1.msra.mxu0 %v1418
      %1977 = vmatprep.subr.mxu0 0.0
      %1978 = vmatpush1.msra.mxu0 %v1419
      %1979 = vmatprep.subr.mxu0 0.0
      %1980 = vmatpush1.msra.mxu0 %v1420
      %1981 = vmatprep.subr.mxu0 0.0
      %1982 = vmatpush1.msra.mxu0 %v1421
      %1983 = vmatprep.subr.mxu0 0.0
      %1984 = vmatpush1.msra.mxu0 %v1422
      %1985 = vmatprep.subr.mxu0 0.0
      %1986 = vmatpush1.msra.mxu0 %v1423
      %1987 = vmatprep.subr.mxu0 0.0
      %1988 = vmatpush1.msra.mxu0 %v1424
      %1989 = vmatprep.subr.mxu0 0.0
      %1990 = vmatpush1.msra.mxu0 %v1425
      %1991 = vmatprep.subr.mxu0 0.0
      %1992 = vmatpush1.msra.mxu0 %v1426
      %1993 = vmatprep.subr.mxu0 0.0
      %1994 = vmatpush1.msra.mxu0 %v1427
      %1995 = vmatprep.subr.mxu0 0.0
      %1996 = vmatpush1.msra.mxu0 %v1428
      %1997 = vmatprep.subr.mxu0 0.0
      %1998 = vmatpush1.msra.mxu0 %v1429
      %1999 = vmatprep.subr.mxu0 0.0
      %2000 = vmatpush1.msra.mxu0 %v1430
      %2001 = vmatprep.subr.mxu0 0.0
      %2002 = vmatpush1.msra.mxu0 %v1431
      %2003 = vmatprep.subr.mxu0 0.0
      %2004 = vmatpush1.msra.mxu0 %v1432
      %2005 = vmatprep.subr.mxu0 0.0
      %2006 = vmatpush1.msra.mxu0 %v1433
      %2007 = vmatprep.subr.mxu0 0.0
      %2008 = vmatpush1.msra.mxu0 %v1434
      %2009 = vmatprep.subr.mxu0 0.0
      %2010 = vmatpush1.msra.mxu0 %v1435
      %2011 = vmatprep.subr.mxu0 0.0
      %2012 = vmatpush1.msra.mxu0 %v1436
      %2013 = vmatprep.subr.mxu0 0.0
      %2014 = vmatpush1.msra.mxu0 %v1437
      %2015 = vmatprep.subr.mxu0 0.0
      %2016 = vmatpush1.msra.mxu0 %v1438
      %2017 = vmatprep.subr.mxu0 0.0
      %2018 = vmatpush1.msra.mxu0 %v1439
      %2019 = vmatprep.mubr.f32.mxu0 0.0
      %2020 = vmatmul.mubr.f32.gmra.mrb[0].mxu0 %v1124
      %v2021 = vpop.f32.mrb[0].mxu0
      %v2022 = vadd.f32 %v1797, %v2021
      %v2023 = vpop.f32.mrb[0].mxu0
      %2024 = vmatprep.mubr.f32.mxu0 0.0
      %2025 = vmatmul.mubr.f32.gmra.mrb[0].mxu0 %v1125
      %v2026 = vpop.f32.mrb[0].mxu0
      %v2027 = vadd.f32 %v1802, %v2026
      %v2028 = vpop.f32.mrb[0].mxu0
      %2029 = vmatprep.mubr.f32.mxu0 %v378
      %2030 = vmatmul.mubr.f32.gmra.mrb[0].mxu0 %v1126
      %v2031 = vpop.f32.mrb[0].mxu0
      %v2032 = vadd.f32 %v1807, %v2031
      %v2033 = vpop.f32.mrb[0].mxu0
      %2034 = vmatprep.mubr.f32.mxu0 %v379
      %2035 = vmatmul.mubr.f32.gmra.mrb[0].mxu0 %v1127
      %v2036 = vpop.f32.mrb[0].mxu0
      %v2037 = vadd.f32 %v1812, %v2036
      %v2038 = vpop.f32.mrb[0].mxu0
      %2039 = vmatprep.mubr.f32.mxu0 %v380
      %2040 = vmatmul.mubr.f32.gmra.mrb[0].mxu0 %v1128
      %v2041 = vpop.f32.mrb[0].mxu0
      %v2042 = vadd.f32 %v1817, %v2041
      %v2043 = vpop.f32.mrb[0].mxu0
      %2044 = vmatprep.mubr.f32.mxu0 %v381
      %2045 = vmatmul.mubr.f32.gmra.mrb[0].mxu0 %v1129
      %v2046 = vpop.f32.mrb[0].mxu0
      %v2047 = vadd.f32 %v1822, %v2046
      %v2048 = vpop.f32.mrb[0].mxu0
      %2049 = vmatprep.mubr.f32.mxu0 %v382
      %2050 = vmatmul.mubr.f32.gmra.mrb[0].mxu0 %v1130
      %v2051 = vpop.f32.mrb[0].mxu0
      %v2052 = vadd.f32 %v1827, %v2051
      %v2053 = vpop.f32.mrb[0].mxu0
      %2054 = vmatprep.mubr.f32.mxu0 %v383
      %2055 = vmatmul.mubr.f32.gmra.mrb[0].mxu0 %v1131
      %v2056 = vpop.f32.mrb[0].mxu0
      %v2057 = vadd.f32 %v1832, %v2056
      %v2058 = vpop.f32.mrb[0].mxu0
      %2059 = vmatprep.mubr.f32.mxu0 %v384
      %2060 = vmatmul.mubr.f32.gmra.mrb[0].mxu0 %v1132
      %v2061 = vpop.f32.mrb[0].mxu0
      %v2062 = vadd.f32 %v1837, %v2061
      %v2063 = vpop.f32.mrb[0].mxu0
      %2064 = vmatprep.mubr.f32.mxu0 %v385
      %2065 = vmatmul.mubr.f32.gmra.mrb[0].mxu0 %v1133
      %v2066 = vpop.f32.mrb[0].mxu0
      %v2067 = vadd.f32 %v1842, %v2066
      %v2068 = vpop.f32.mrb[0].mxu0
      %2069 = vmatprep.mubr.f32.mxu0 %v386
      %2070 = vmatmul.mubr.f32.gmra.mrb[0].mxu0 %v1134
      %v2071 = vpop.f32.mrb[0].mxu0
      %v2072 = vadd.f32 %v1847, %v2071
      %v2073 = vpop.f32.mrb[0].mxu0
      %2074 = vmatprep.mubr.f32.mxu0 %v387
      %2075 = vmatmul.mubr.f32.gmra.mrb[0].mxu0 %v1135
      %v2076 = vpop.f32.mrb[0].mxu0
      %v2077 = vadd.f32 %v1852, %v2076
      %v2078 = vpop.f32.mrb[0].mxu0
      %2079 = vmatprep.mubr.f32.mxu0 %v388
      %2080 = vmatmul.mubr.f32.gmra.mrb[0].mxu0 %v1136
      %v2081 = vpop.f32.mrb[0].mxu0
      %v2082 = vadd.f32 %v1857, %v2081
      %v2083 = vpop.f32.mrb[0].mxu0
      %2084 = vmatprep.mubr.f32.mxu0 %v389
      %2085 = vmatmul.mubr.f32.gmra.mrb[0].mxu0 %v1137
      %v2086 = vpop.f32.mrb[0].mxu0
      %v2087 = vadd.f32 %v1862, %v2086
      %v2088 = vpop.f32.mrb[0].mxu0
      %2089 = vmatprep.mubr.f32.mxu0 %v390
      %2090 = vmatmul.mubr.f32.gmra.mrb[0].mxu0 %v1138
      %v2091 = vpop.f32.mrb[0].mxu0
      %v2092 = vadd.f32 %v1867, %v2091
      %v2093 = vpop.f32.mrb[0].mxu0
      %2094 = vmatprep.mubr.f32.mxu0 %v391
      %2095 = vmatmul.mubr.f32.gmra.mrb[0].mxu0 %v1139
      %v2096 = vpop.f32.mrb[0].mxu0
      %v2097 = vadd.f32 %v1872, %v2096
      %v2098 = vpop.f32.mrb[0].mxu0
      %2099 = vmatprep.mubr.f32.mxu0 %v392
      %2100 = vmatmul.mubr.f32.gmra.mrb[0].mxu0 %v1140
      %v2101 = vpop.f32.mrb[0].mxu0
      %v2102 = vadd.f32 %v1877, %v2101
      %v2103 = vpop.f32.mrb[0].mxu0
      %2104 = vmatprep.mubr.f32.mxu0 %v393
      %2105 = vmatmul.mubr.f32.gmra.mrb[0].mxu0 %v1141
      %v2106 = vpop.f32.mrb[0].mxu0
      %v2107 = vadd.f32 %v1882, %v2106
      %v2108 = vpop.f32.mrb[0].mxu0
      %2109 = vmatprep.mubr.f32.mxu0 %v394
      %2110 = vmatmul.mubr.f32.gmra.mrb[0].mxu0 %v1142
      %v2111 = vpop.f32.mrb[0].mxu0
      %v2112 = vadd.f32 %v1887, %v2111
      %v2113 = vpop.f32.mrb[0].mxu0
      %2114 = vmatprep.mubr.f32.mxu0 %v395
      %2115 = vmatmul.mubr.f32.gmra.mrb[0].mxu0 %v1143
      %v2116 = vpop.f32.mrb[0].mxu0
      %v2117 = vadd.f32 %v1892, %v2116
      %v2118 = vpop.f32.mrb[0].mxu0
      %2119 = vmatprep.mubr.f32.mxu0 %v396
      %2120 = vmatmul.mubr.f32.gmra.mrb[0].mxu0 %v1144
      %v2121 = vpop.f32.mrb[0].mxu0
      %v2122 = vadd.f32 %v1897, %v2121
      %v2123 = vpop.f32.mrb[0].mxu0
      %2124 = vmatprep.mubr.f32.mxu0 %v397
      %2125 = vmatmul.mubr.f32.gmra.mrb[0].mxu0 %v1145
      %v2126 = vpop.f32.mrb[0].mxu0
      %v2127 = vadd.f32 %v1902, %v2126
      %v2128 = vpop.f32.mrb[0].mxu0
      %2129 = vmatprep.mubr.f32.mxu0 %v398
      %2130 = vmatmul.mubr.f32.gmra.mrb[0].mxu0 %v1146
      %v2131 = vpop.f32.mrb[0].mxu0
      %v2132 = vadd.f32 %v1907, %v2131
      %v2133 = vpop.f32.mrb[0].mxu0
      %2134 = vmatprep.mubr.f32.mxu0 %v399
      %2135 = vmatmul.mubr.f32.gmra.mrb[0].mxu0 %v1147
      %v2136 = vpop.f32.mrb[0].mxu0
      %v2137 = vadd.f32 %v1912, %v2136
      %v2138 = vpop.f32.mrb[0].mxu0
      %2139 = vmatprep.mubr.f32.mxu0 %v400
      %2140 = vmatmul.mubr.f32.gmra.mrb[0].mxu0 %v1148
      %v2141 = vpop.f32.mrb[0].mxu0
      %v2142 = vadd.f32 %v1917, %v2141
      %v2143 = vpop.f32.mrb[0].mxu0
      %2144 = vmatprep.mubr.f32.mxu0 %v401
      %2145 = vmatmul.mubr.f32.gmra.mrb[0].mxu0 %v1149
      %v2146 = vpop.f32.mrb[0].mxu0
      %v2147 = vadd.f32 %v1922, %v2146
      %v2148 = vpop.f32.mrb[0].mxu0
      %2149 = vmatprep.mubr.f32.mxu0 %v402
      %2150 = vmatmul.mubr.f32.gmra.mrb[0].mxu0 %v1150
      %v2151 = vpop.f32.mrb[0].mxu0
      %v2152 = vadd.f32 %v1927, %v2151
      %v2153 = vpop.f32.mrb[0].mxu0
      %2154 = vmatprep.mubr.f32.mxu0 %v403
      %2155 = vmatmul.mubr.f32.gmra.mrb[0].mxu0 %v1151
      %v2156 = vpop.f32.mrb[0].mxu0
      %v2157 = vadd.f32 %v1932, %v2156
      %v2158 = vpop.f32.mrb[0].mxu0
      %2159 = vmatprep.mubr.f32.mxu0 %v404
      %2160 = vmatmul.mubr.f32.gmra.mrb[0].mxu0 %v1152
      %v2161 = vpop.f32.mrb[0].mxu0
      %v2162 = vadd.f32 %v1937, %v2161
      %v2163 = vpop.f32.mrb[0].mxu0
      %2164 = vmatprep.mubr.f32.mxu0 %v405
      %2165 = vmatmul.mubr.f32.gmra.mrb[0].mxu0 %v1153
      %v2166 = vpop.f32.mrb[0].mxu0
      %v2167 = vadd.f32 %v1942, %v2166
      %v2168 = vpop.f32.mrb[0].mxu0
      %2169 = vmatprep.mubr.f32.mxu0 %v406
      %2170 = vmatmul.mubr.f32.gmra.mrb[0].mxu0 %v1154
      %v2171 = vpop.f32.mrb[0].mxu0
      %v2172 = vadd.f32 %v1947, %v2171
      %v2173 = vpop.f32.mrb[0].mxu0
      %2174 = vmatprep.mubr.f32.mxu0 %v407
      %2175 = vmatmul.mubr.f32.gmra.mrb[0].mxu0 %v1155
      %v2176 = vpop.f32.mrb[0].mxu0
      %v2177 = vadd.f32 %v1952, %v2176
      %v2178 = vpop.f32.mrb[0].mxu0
      %2179 = vdwg.mxu0
      %2180 = vmatprep.subr.mxu0 0.0
      %2181 = vmatpush1.msra.mxu0 %v1440
      %2182 = vmatprep.subr.mxu0 0.0
      %2183 = vmatpush1.msra.mxu0 %v1441
      %2184 = vmatprep.subr.mxu0 0.0
      %2185 = vmatpush1.msra.mxu0 %v1442
      %2186 = vmatprep.subr.mxu0 0.0
      %2187 = vmatpush1.msra.mxu0 %v1443
      %2188 = vmatprep.subr.mxu0 0.0
      %2189 = vmatpush1.msra.mxu0 %v1444
      %2190 = vmatprep.subr.mxu0 0.0
      %2191 = vmatpush1.msra.mxu0 %v1445
      %2192 = vmatprep.subr.mxu0 0.0
      %2193 = vmatpush1.msra.mxu0 %v1446
      %2194 = vmatprep.subr.mxu0 0.0
      %2195 = vmatpush1.msra.mxu0 %v1447
      %2196 = vmatprep.subr.mxu0 0.0
      %2197 = vmatpush1.msra.mxu0 %v1448
      %2198 = vmatprep.subr.mxu0 0.0
      %2199 = vmatpush1.msra.mxu0 %v1449
      %2200 = vmatprep.subr.mxu0 0.0
      %2201 = vmatpush1.msra.mxu0 %v1450
      %2202 = vmatprep.subr.mxu0 0.0
      %2203 = vmatpush1.msra.mxu0 %v1451
      %2204 = vmatprep.subr.mxu0 0.0
      %2205 = vmatpush1.msra.mxu0 %v1452
      %2206 = vmatprep.subr.mxu0 0.0
      %2207 = vmatpush1.msra.mxu0 %v1453
      %2208 = vmatprep.subr.mxu0 0.0
      %2209 = vmatpush1.msra.mxu0 %v1454
      %2210 = vmatprep.subr.mxu0 0.0
      %2211 = vmatpush1.msra.mxu0 %v1455
      %2212 = vmatprep.subr.mxu0 0.0
      %2213 = vmatpush1.msra.mxu0 0.0
      %2214 = vmatprep.subr.mxu0 0.0
      %2215 = vmatpush1.msra.mxu0 0.0
      %2216 = vmatprep.subr.mxu0 0.0
      %2217 = vmatpush1.msra.mxu0 0.0
      %2218 = vmatprep.subr.mxu0 0.0
      %2219 = vmatpush1.msra.mxu0 0.0
      %2220 = vmatprep.subr.mxu0 0.0
      %2221 = vmatpush1.msra.mxu0 0.0
      %2222 = vmatprep.subr.mxu0 0.0
      %2223 = vmatpush1.msra.mxu0 0.0
      %2224 = vmatprep.subr.mxu0 0.0
      %2225 = vmatpush1.msra.mxu0 0.0
      %2226 = vmatprep.subr.mxu0 0.0
      %2227 = vmatpush1.msra.mxu0 0.0
      %2228 = vmatprep.subr.mxu0 0.0
      %2229 = vmatpush1.msra.mxu0 0.0
      %2230 = vmatprep.subr.mxu0 0.0
      %2231 = vmatpush1.msra.mxu0 0.0
      %2232 = vmatprep.subr.mxu0 0.0
      %2233 = vmatpush1.msra.mxu0 0.0
      %2234 = vmatprep.subr.mxu0 0.0
      %2235 = vmatpush1.msra.mxu0 0.0
      %2236 = vmatprep.subr.mxu0 0.0
      %2237 = vmatpush1.msra.mxu0 0.0
      %2238 = vmatprep.subr.mxu0 0.0
      %2239 = vmatpush1.msra.mxu0 0.0
      %2240 = vmatprep.subr.mxu0 0.0
      %2241 = vmatpush1.msra.mxu0 0.0
      %2242 = vmatprep.subr.mxu0 0.0
      %2243 = vmatpush1.msra.mxu0 0.0
      %2244 = vmatprep.mubr.f32.mxu0 0.0
      %2245 = vmatmul.mubr.f32.gmra.mrb[0].mxu0 %v1372
      %v2246 = vpop.f32.mrb[0].mxu0
      %v2247 = vadd.f32 %v2022, %v2246
      %v2248 = vpop.f32.mrb[0].mxu0
      %2249 = vmatprep.mubr.f32.mxu0 0.0
      %2250 = vmatmul.mubr.f32.gmra.mrb[0].mxu0 %v1373
      %v2251 = vpop.f32.mrb[0].mxu0
      %v2252 = vadd.f32 %v2027, %v2251
      %v2253 = vpop.f32.mrb[0].mxu0
      %2254 = vmatprep.mubr.f32.mxu0 0.0
      %2255 = vmatmul.mubr.f32.gmra.mrb[0].mxu0 %v1374
      %v2256 = vpop.f32.mrb[0].mxu0
      %v2257 = vadd.f32 %v2032, %v2256
      %v2258 = vpop.f32.mrb[0].mxu0
      %2259 = vmatprep.mubr.f32.mxu0 0.0
      %2260 = vmatmul.mubr.f32.gmra.mrb[0].mxu0 %v1375
      %v2261 = vpop.f32.mrb[0].mxu0
      %v2262 = vadd.f32 %v2037, %v2261
      %v2263 = vpop.f32.mrb[0].mxu0
      %2264 = vmatprep.mubr.f32.mxu0 0.0
      %2265 = vmatmul.mubr.f32.gmra.mrb[0].mxu0 %v1376
      %v2266 = vpop.f32.mrb[0].mxu0
      %v2267 = vadd.f32 %v2042, %v2266
      %v2268 = vpop.f32.mrb[0].mxu0
      %2269 = vmatprep.mubr.f32.mxu0 0.0
      %2270 = vmatmul.mubr.f32.gmra.mrb[0].mxu0 %v1377
      %v2271 = vpop.f32.mrb[0].mxu0
      %v2272 = vadd.f32 %v2047, %v2271
      %v2273 = vpop.f32.mrb[0].mxu0
      %2274 = vmatprep.mubr.f32.mxu0 0.0
      %2275 = vmatmul.mubr.f32.gmra.mrb[0].mxu0 %v1378
      %v2276 = vpop.f32.mrb[0].mxu0
      %v2277 = vadd.f32 %v2052, %v2276
      %v2278 = vpop.f32.mrb[0].mxu0
      %2279 = vmatprep.mubr.f32.mxu0 0.0
      %2280 = vmatmul.mubr.f32.gmra.mrb[0].mxu0 %v1379
      %v2281 = vpop.f32.mrb[0].mxu0
      %v2282 = vadd.f32 %v2057, %v2281
      %v2283 = vpop.f32.mrb[0].mxu0
      %2284 = vmatprep.mubr.f32.mxu0 0.0
      %2285 = vmatmul.mubr.f32.gmra.mrb[0].mxu0 %v1380
      %v2286 = vpop.f32.mrb[0].mxu0
      %v2287 = vadd.f32 %v2062, %v2286
      %v2288 = vpop.f32.mrb[0].mxu0
      %2289 = vmatprep.mubr.f32.mxu0 0.0
      %2290 = vmatmul.mubr.f32.gmra.mrb[0].mxu0 %v1381
      %v2291 = vpop.f32.mrb[0].mxu0
      %v2292 = vadd.f32 %v2067, %v2291
      %v2293 = vpop.f32.mrb[0].mxu0
      %2294 = vmatprep.mubr.f32.mxu0 0.0
      %2295 = vmatmul.mubr.f32.gmra.mrb[0].mxu0 %v1382
      %v2296 = vpop.f32.mrb[0].mxu0
      %v2297 = vadd.f32 %v2072, %v2296
      %v2298 = vpop.f32.mrb[0].mxu0
      %2299 = vmatprep.mubr.f32.mxu0 0.0
      %2300 = vmatmul.mubr.f32.gmra.mrb[0].mxu0 %v1383
      %v2301 = vpop.f32.mrb[0].mxu0
      %v2302 = vadd.f32 %v2077, %v2301
      %v2303 = vpop.f32.mrb[0].mxu0
      %2304 = vmatprep.mubr.f32.mxu0 0.0
      %2305 = vmatmul.mubr.f32.gmra.mrb[0].mxu0 %v1384
      %v2306 = vpop.f32.mrb[0].mxu0
      %v2307 = vadd.f32 %v2082, %v2306
      %v2308 = vpop.f32.mrb[0].mxu0
      %2309 = vmatprep.mubr.f32.mxu0 0.0
      %2310 = vmatmul.mubr.f32.gmra.mrb[0].mxu0 %v1385
      %v2311 = vpop.f32.mrb[0].mxu0
      %v2312 = vadd.f32 %v2087, %v2311
      %v2313 = vpop.f32.mrb[0].mxu0
      %2314 = vmatprep.mubr.f32.mxu0 0.0
      %2315 = vmatmul.mubr.f32.gmra.mrb[0].mxu0 %v1386
      %v2316 = vpop.f32.mrb[0].mxu0
      %v2317 = vadd.f32 %v2092, %v2316
      %v2318 = vpop.f32.mrb[0].mxu0
      %2319 = vmatprep.mubr.f32.mxu0 0.0
      %2320 = vmatmul.mubr.f32.gmra.mrb[0].mxu0 %v1387
      %v2321 = vpop.f32.mrb[0].mxu0
      %v2322 = vadd.f32 %v2097, %v2321
      %v2323 = vpop.f32.mrb[0].mxu0
      %2324 = vmatprep.mubr.f32.mxu0 0.0
      %2325 = vmatmul.mubr.f32.gmra.mrb[0].mxu0 %v1388
      %v2326 = vpop.f32.mrb[0].mxu0
      %v2327 = vadd.f32 %v2102, %v2326
      %v2328 = vpop.f32.mrb[0].mxu0
      %2329 = vmatprep.mubr.f32.mxu0 0.0
      %2330 = vmatmul.mubr.f32.gmra.mrb[0].mxu0 %v1389
      %v2331 = vpop.f32.mrb[0].mxu0
      %v2332 = vadd.f32 %v2107, %v2331
      %v2333 = vpop.f32.mrb[0].mxu0
      %2334 = vmatprep.mubr.f32.mxu0 0.0
      %2335 = vmatmul.mubr.f32.gmra.mrb[0].mxu0 %v1390
      %v2336 = vpop.f32.mrb[0].mxu0
      %v2337 = vadd.f32 %v2112, %v2336
      %v2338 = vpop.f32.mrb[0].mxu0
      %2339 = vmatprep.mubr.f32.mxu0 0.0
      %2340 = vmatmul.mubr.f32.gmra.mrb[0].mxu0 %v1391
      %v2341 = vpop.f32.mrb[0].mxu0
      %v2342 = vadd.f32 %v2117, %v2341
      %v2343 = vpop.f32.mrb[0].mxu0
      %2344 = vmatprep.mubr.f32.mxu0 0.0
      %2345 = vmatmul.mubr.f32.gmra.mrb[0].mxu0 %v1392
      %v2346 = vpop.f32.mrb[0].mxu0
      %v2347 = vadd.f32 %v2122, %v2346
      %v2348 = vpop.f32.mrb[0].mxu0
      %2349 = vmatprep.mubr.f32.mxu0 0.0
      %2350 = vmatmul.mubr.f32.gmra.mrb[0].mxu0 %v1393
      %v2351 = vpop.f32.mrb[0].mxu0
      %v2352 = vadd.f32 %v2127, %v2351
      %v2353 = vpop.f32.mrb[0].mxu0
      %2354 = vmatprep.mubr.f32.mxu0 0.0
      %2355 = vmatmul.mubr.f32.gmra.mrb[0].mxu0 %v1394
      %v2356 = vpop.f32.mrb[0].mxu0
      %v2357 = vadd.f32 %v2132, %v2356
      %v2358 = vpop.f32.mrb[0].mxu0
      %2359 = vmatprep.mubr.f32.mxu0 0.0
      %2360 = vmatmul.mubr.f32.gmra.mrb[0].mxu0 %v1395
      %v2361 = vpop.f32.mrb[0].mxu0
      %v2362 = vadd.f32 %v2137, %v2361
      %v2363 = vpop.f32.mrb[0].mxu0
      %2364 = vmatprep.mubr.f32.mxu0 0.0
      %2365 = vmatmul.mubr.f32.gmra.mrb[0].mxu0 %v1396
      %v2366 = vpop.f32.mrb[0].mxu0
      %v2367 = vadd.f32 %v2142, %v2366
      %v2368 = vpop.f32.mrb[0].mxu0
      %2369 = vmatprep.mubr.f32.mxu0 0.0
      %2370 = vmatmul.mubr.f32.gmra.mrb[0].mxu0 %v1397
      %v2371 = vpop.f32.mrb[0].mxu0
      %v2372 = vadd.f32 %v2147, %v2371
      %v2373 = vpop.f32.mrb[0].mxu0
      %2374 = vmatprep.mubr.f32.mxu0 0.0
      %2375 = vmatmul.mubr.f32.gmra.mrb[0].mxu0 %v1398
      %v2376 = vpop.f32.mrb[0].mxu0
      %v2377 = vadd.f32 %v2152, %v2376
      %v2378 = vpop.f32.mrb[0].mxu0
      %2379 = vmatprep.mubr.f32.mxu0 0.0
      %2380 = vmatmul.mubr.f32.gmra.mrb[0].mxu0 %v1399
      %v2381 = vpop.f32.mrb[0].mxu0
      %v2382 = vadd.f32 %v2157, %v2381
      %v2383 = vpop.f32.mrb[0].mxu0
      %2384 = vmatprep.mubr.f32.mxu0 0.0
      %2385 = vmatmul.mubr.f32.gmra.mrb[0].mxu0 %v1400
      %v2386 = vpop.f32.mrb[0].mxu0
      %v2387 = vadd.f32 %v2162, %v2386
      %v2388 = vpop.f32.mrb[0].mxu0
      %2389 = vmatprep.mubr.f32.mxu0 0.0
      %2390 = vmatmul.mubr.f32.gmra.mrb[0].mxu0 %v1401
      %v2391 = vpop.f32.mrb[0].mxu0
      %v2392 = vadd.f32 %v2167, %v2391
      %v2393 = vpop.f32.mrb[0].mxu0
      %2394 = vmatprep.mubr.f32.mxu0 0.0
      %2395 = vmatmul.mubr.f32.gmra.mrb[0].mxu0 %v1402
      %v2396 = vpop.f32.mrb[0].mxu0
      %v2397 = vadd.f32 %v2172, %v2396
      %v2398 = vpop.f32.mrb[0].mxu0
      %2399 = vmatprep.mubr.f32.mxu0 0.0
      %2400 = vmatmul.mubr.f32.gmra.mrb[0].mxu0 %v1403
      %v2401 = vpop.f32.mrb[0].mxu0
      %v2402 = vadd.f32 %v2177, %v2401
      %v2403 = vpop.f32.mrb[0].mxu0
      %2404 = vdwg.mxu0
      %s2405 = scalar_lea.vmem %s3, 768
      %v2406 = vld [vmem:[%s2405] sm:$0xff]
      %v2407 = vld [vmem:[%s2405 + $0x8] sm:$0xff]
      %v2408 = vld [vmem:[%s2405 + $0x10] sm:$0xff]
      %v2409 = vld [vmem:[%s2405 + $0x18] sm:$0xff]
      %v2410 = vld [vmem:[%s2405 + $0x20] sm:$0xff]
      %v2411 = vld [vmem:[%s2405 + $0x28] sm:$0xff]
      %v2412 = vld [vmem:[%s2405 + $0x30] sm:$0xff]
      %v2413 = vld [vmem:[%s2405 + $0x38] sm:$0xff]
      %v2414 = vld [vmem:[%s2405 + $0x40] sm:$0xff]
      %v2415 = vld [vmem:[%s2405 + $0x48] sm:$0xff]
      %v2416 = vld [vmem:[%s2405 + $0x50] sm:$0xff]
      %v2417 = vld [vmem:[%s2405 + $0x58] sm:$0xff]
      %v2418 = vld [vmem:[%s2405 + $0x60] sm:$0xff]
      %v2419 = vld [vmem:[%s2405 + $0x68] sm:$0xff]
      %v2420 = vld [vmem:[%s2405 + $0x70] sm:$0xff]
      %v2421 = vld [vmem:[%s2405 + $0x78] sm:$0xff]
      %v2422 = vld [vmem:[%s2405 + $0x80] sm:$0xff]
      %v2423 = vld [vmem:[%s2405 + $0x88] sm:$0xff]
      %v2424 = vld [vmem:[%s2405 + $0x90] sm:$0xff]
      %v2425 = vld [vmem:[%s2405 + $0x98] sm:$0xff]
      %v2426 = vld [vmem:[%s2405 + $0xa0] sm:$0xff]
      %v2427 = vld [vmem:[%s2405 + $0xa8] sm:$0xff]
      %v2428 = vld [vmem:[%s2405 + $0xb0] sm:$0xff]
      %v2429 = vld [vmem:[%s2405 + $0xb8] sm:$0xff]
      %v2430 = vld [vmem:[%s2405 + $0xc0] sm:$0xff]
      %v2431 = vld [vmem:[%s2405 + $0xc8] sm:$0xff]
      %v2432 = vld [vmem:[%s2405 + $0xd0] sm:$0xff]
      %v2433 = vld [vmem:[%s2405 + $0xd8] sm:$0xff]
      %v2434 = vld [vmem:[%s2405 + $0xe0] sm:$0xff]
      %v2435 = vld [vmem:[%s2405 + $0xe8] sm:$0xff]
      %v2436 = vld [vmem:[%s2405 + $0xf0] sm:$0xff]
      %v2437 = vld [vmem:[%s2405 + $0xf8] sm:$0xff]
      %v2438 = vld [vmem:[%s2405 + $0x100] sm:$0xff]
      %v2439 = vld [vmem:[%s2405 + $0x108] sm:$0xff]
      %v2440 = vld [vmem:[%s2405 + $0x110] sm:$0xff]
      %v2441 = vld [vmem:[%s2405 + $0x118] sm:$0xff]
      %v2442 = vld [vmem:[%s2405 + $0x120] sm:$0xff]
      %v2443 = vld [vmem:[%s2405 + $0x128] sm:$0xff]
      %v2444 = vld [vmem:[%s2405 + $0x130] sm:$0xff]
      %v2445 = vld [vmem:[%s2405 + $0x138] sm:$0xff]
      %v2446 = vld [vmem:[%s2405 + $0x140] sm:$0xff]
      %v2447 = vld [vmem:[%s2405 + $0x148] sm:$0xff]
      %v2448 = vld [vmem:[%s2405 + $0x150] sm:$0xff]
      %v2449 = vld [vmem:[%s2405 + $0x158] sm:$0xff]
      %v2450 = vld [vmem:[%s2405 + $0x160] sm:$0xff]
      %v2451 = vld [vmem:[%s2405 + $0x168] sm:$0xff]
      %v2452 = vld [vmem:[%s2405 + $0x170] sm:$0xff]
      %v2453 = vld [vmem:[%s2405 + $0x178] sm:$0xff]
      %2454 = vmatprep.subr.mxu0 0.0
      %2455 = vmatpush1.msra.mxu0 %v2406
      %2456 = vmatprep.subr.mxu0 0.0
      %2457 = vmatpush1.msra.mxu0 %v2407
      %2458 = vmatprep.subr.mxu0 0.0
      %2459 = vmatpush1.msra.mxu0 %v2408
      %2460 = vmatprep.subr.mxu0 0.0
      %2461 = vmatpush1.msra.mxu0 %v2409
      %2462 = vmatprep.subr.mxu0 0.0
      %2463 = vmatpush1.msra.mxu0 %v2410
      %2464 = vmatprep.subr.mxu0 0.0
      %2465 = vmatpush1.msra.mxu0 %v2411
      %2466 = vmatprep.subr.mxu0 0.0
      %2467 = vmatpush1.msra.mxu0 %v2412
      %2468 = vmatprep.subr.mxu0 0.0
      %2469 = vmatpush1.msra.mxu0 %v2413
      %2470 = vmatprep.subr.mxu0 0.0
      %2471 = vmatpush1.msra.mxu0 %v2414
      %2472 = vmatprep.subr.mxu0 0.0
      %2473 = vmatpush1.msra.mxu0 %v2415
      %2474 = vmatprep.subr.mxu0 0.0
      %2475 = vmatpush1.msra.mxu0 %v2416
      %2476 = vmatprep.subr.mxu0 0.0
      %2477 = vmatpush1.msra.mxu0 %v2417
      %2478 = vmatprep.subr.mxu0 0.0
      %2479 = vmatpush1.msra.mxu0 %v2418
      %2480 = vmatprep.subr.mxu0 0.0
      %2481 = vmatpush1.msra.mxu0 %v2419
      %2482 = vmatprep.subr.mxu0 0.0
      %2483 = vmatpush1.msra.mxu0 %v2420
      %2484 = vmatprep.subr.mxu0 0.0
      %2485 = vmatpush1.msra.mxu0 %v2421
      %2486 = vmatprep.subr.mxu0 0.0
      %2487 = vmatpush1.msra.mxu0 %v2422
      %2488 = vmatprep.subr.mxu0 0.0
      %2489 = vmatpush1.msra.mxu0 %v2423
      %2490 = vmatprep.subr.mxu0 0.0
      %2491 = vmatpush1.msra.mxu0 %v2424
      %2492 = vmatprep.subr.mxu0 0.0
      %2493 = vmatpush1.msra.mxu0 %v2425
      %2494 = vmatprep.subr.mxu0 0.0
      %2495 = vmatpush1.msra.mxu0 %v2426
      %2496 = vmatprep.subr.mxu0 0.0
      %2497 = vmatpush1.msra.mxu0 %v2427
      %2498 = vmatprep.subr.mxu0 0.0
      %2499 = vmatpush1.msra.mxu0 %v2428
      %2500 = vmatprep.subr.mxu0 0.0
      %2501 = vmatpush1.msra.mxu0 %v2429
      %2502 = vmatprep.subr.mxu0 0.0
      %2503 = vmatpush1.msra.mxu0 %v2430
      %2504 = vmatprep.subr.mxu0 0.0
      %2505 = vmatpush1.msra.mxu0 %v2431
      %2506 = vmatprep.subr.mxu0 0.0
      %2507 = vmatpush1.msra.mxu0 %v2432
      %2508 = vmatprep.subr.mxu0 0.0
      %2509 = vmatpush1.msra.mxu0 %v2433
      %2510 = vmatprep.subr.mxu0 0.0
      %2511 = vmatpush1.msra.mxu0 %v2434
      %2512 = vmatprep.subr.mxu0 0.0
      %2513 = vmatpush1.msra.mxu0 %v2435
      %2514 = vmatprep.subr.mxu0 0.0
      %2515 = vmatpush1.msra.mxu0 %v2436
      %2516 = vmatprep.subr.mxu0 0.0
      %2517 = vmatpush1.msra.mxu0 %v2437
      %2518 = vmatprep.mubr.f32.mxu0 %v380
      %2519 = vmatmul.mubr.f32.gmra.mrb[0].mxu0 %v1128
      %v2520 = vpop.f32.mrb[0].mxu0
      %v2521 = vadd.f32 0.0, %v2520
      %v2522 = vpop.f32.mrb[0].mxu0
      %2523 = vmatprep.mubr.f32.mxu0 %v381
      %2524 = vmatmul.mubr.f32.gmra.mrb[0].mxu0 %v1129
      %v2525 = vpop.f32.mrb[0].mxu0
      %v2526 = vadd.f32 0.0, %v2525
      %v2527 = vpop.f32.mrb[0].mxu0
      %2528 = vmatprep.mubr.f32.mxu0 %v382
      %2529 = vmatmul.mubr.f32.gmra.mrb[0].mxu0 %v1130
      %v2530 = vpop.f32.mrb[0].mxu0
      %v2531 = vadd.f32 0.0, %v2530
      %v2532 = vpop.f32.mrb[0].mxu0
      %2533 = vmatprep.mubr.f32.mxu0 %v383
      %2534 = vmatmul.mubr.f32.gmra.mrb[0].mxu0 %v1131
      %v2535 = vpop.f32.mrb[0].mxu0
      %v2536 = vadd.f32 0.0, %v2535
      %v2537 = vpop.f32.mrb[0].mxu0
      %2538 = vmatprep.mubr.f32.mxu0 %v384
      %2539 = vmatmul.mubr.f32.gmra.mrb[0].mxu0 %v1132
      %v2540 = vpop.f32.mrb[0].mxu0
      %v2541 = vadd.f32 0.0, %v2540
      %v2542 = vpop.f32.mrb[0].mxu0
      %2543 = vmatprep.mubr.f32.mxu0 %v385
      %2544 = vmatmul.mubr.f32.gmra.mrb[0].mxu0 %v1133
      %v2545 = vpop.f32.mrb[0].mxu0
      %v2546 = vadd.f32 0.0, %v2545
      %v2547 = vpop.f32.mrb[0].mxu0
      %2548 = vmatprep.mubr.f32.mxu0 %v386
      %2549 = vmatmul.mubr.f32.gmra.mrb[0].mxu0 %v1134
      %v2550 = vpop.f32.mrb[0].mxu0
      %v2551 = vadd.f32 0.0, %v2550
      %v2552 = vpop.f32.mrb[0].mxu0
      %2553 = vmatprep.mubr.f32.mxu0 %v387
      %2554 = vmatmul.mubr.f32.gmra.mrb[0].mxu0 %v1135
      %v2555 = vpop.f32.mrb[0].mxu0
      %v2556 = vadd.f32 0.0, %v2555
      %v2557 = vpop.f32.mrb[0].mxu0
      %2558 = vmatprep.mubr.f32.mxu0 %v388
      %2559 = vmatmul.mubr.f32.gmra.mrb[0].mxu0 %v1136
      %v2560 = vpop.f32.mrb[0].mxu0
      %v2561 = vadd.f32 0.0, %v2560
      %v2562 = vpop.f32.mrb[0].mxu0
      %2563 = vmatprep.mubr.f32.mxu0 %v389
      %2564 = vmatmul.mubr.f32.gmra.mrb[0].mxu0 %v1137
      %v2565 = vpop.f32.mrb[0].mxu0
      %v2566 = vadd.f32 0.0, %v2565
      %v2567 = vpop.f32.mrb[0].mxu0
      %2568 = vmatprep.mubr.f32.mxu0 %v390
      %2569 = vmatmul.mubr.f32.gmra.mrb[0].mxu0 %v1138
      %v2570 = vpop.f32.mrb[0].mxu0
      %v2571 = vadd.f32 0.0, %v2570
      %v2572 = vpop.f32.mrb[0].mxu0
      %2573 = vmatprep.mubr.f32.mxu0 %v391
      %2574 = vmatmul.mubr.f32.gmra.mrb[0].mxu0 %v1139
      %v2575 = vpop.f32.mrb[0].mxu0
      %v2576 = vadd.f32 0.0, %v2575
      %v2577 = vpop.f32.mrb[0].mxu0
      %2578 = vmatprep.mubr.f32.mxu0 %v392
      %2579 = vmatmul.mubr.f32.gmra.mrb[0].mxu0 %v1140
      %v2580 = vpop.f32.mrb[0].mxu0
      %v2581 = vadd.f32 0.0, %v2580
      %v2582 = vpop.f32.mrb[0].mxu0
      %2583 = vmatprep.mubr.f32.mxu0 %v393
      %2584 = vmatmul.mubr.f32.gmra.mrb[0].mxu0 %v1141
      %v2585 = vpop.f32.mrb[0].mxu0
      %v2586 = vadd.f32 0.0, %v2585
      %v2587 = vpop.f32.mrb[0].mxu0
      %2588 = vmatprep.mubr.f32.mxu0 %v394
      %2589 = vmatmul.mubr.f32.gmra.mrb[0].mxu0 %v1142
      %v2590 = vpop.f32.mrb[0].mxu0
      %v2591 = vadd.f32 0.0, %v2590
      %v2592 = vpop.f32.mrb[0].mxu0
      %2593 = vmatprep.mubr.f32.mxu0 %v395
      %2594 = vmatmul.mubr.f32.gmra.mrb[0].mxu0 %v1143
      %v2595 = vpop.f32.mrb[0].mxu0
      %v2596 = vadd.f32 0.0, %v2595
      %v2597 = vpop.f32.mrb[0].mxu0
      %2598 = vmatprep.mubr.f32.mxu0 %v396
      %2599 = vmatmul.mubr.f32.gmra.mrb[0].mxu0 %v1144
      %v2600 = vpop.f32.mrb[0].mxu0
      %v2601 = vadd.f32 0.0, %v2600
      %v2602 = vpop.f32.mrb[0].mxu0
      %2603 = vmatprep.mubr.f32.mxu0 %v397
      %2604 = vmatmul.mubr.f32.gmra.mrb[0].mxu0 %v1145
      %v2605 = vpop.f32.mrb[0].mxu0
      %v2606 = vadd.f32 0.0, %v2605
      %v2607 = vpop.f32.mrb[0].mxu0
      %2608 = vmatprep.mubr.f32.mxu0 %v398
      %2609 = vmatmul.mubr.f32.gmra.mrb[0].mxu0 %v1146
      %v2610 = vpop.f32.mrb[0].mxu0
      %v2611 = vadd.f32 0.0, %v2610
      %v2612 = vpop.f32.mrb[0].mxu0
      %2613 = vmatprep.mubr.f32.mxu0 %v399
      %2614 = vmatmul.mubr.f32.gmra.mrb[0].mxu0 %v1147
      %v2615 = vpop.f32.mrb[0].mxu0
      %v2616 = vadd.f32 0.0, %v2615
      %v2617 = vpop.f32.mrb[0].mxu0
      %2618 = vmatprep.mubr.f32.mxu0 %v400
      %2619 = vmatmul.mubr.f32.gmra.mrb[0].mxu0 %v1148
      %v2620 = vpop.f32.mrb[0].mxu0
      %v2621 = vadd.f32 0.0, %v2620
      %v2622 = vpop.f32.mrb[0].mxu0
      %2623 = vmatprep.mubr.f32.mxu0 %v401
      %2624 = vmatmul.mubr.f32.gmra.mrb[0].mxu0 %v1149
      %v2625 = vpop.f32.mrb[0].mxu0
      %v2626 = vadd.f32 0.0, %v2625
      %v2627 = vpop.f32.mrb[0].mxu0
      %2628 = vmatprep.mubr.f32.mxu0 %v402
      %2629 = vmatmul.mubr.f32.gmra.mrb[0].mxu0 %v1150
      %v2630 = vpop.f32.mrb[0].mxu0
      %v2631 = vadd.f32 0.0, %v2630
      %v2632 = vpop.f32.mrb[0].mxu0
      %2633 = vmatprep.mubr.f32.mxu0 %v403
      %2634 = vmatmul.mubr.f32.gmra.mrb[0].mxu0 %v1151
      %v2635 = vpop.f32.mrb[0].mxu0
      %v2636 = vadd.f32 0.0, %v2635
      %v2637 = vpop.f32.mrb[0].mxu0
      %2638 = vmatprep.mubr.f32.mxu0 %v404
      %2639 = vmatmul.mubr.f32.gmra.mrb[0].mxu0 %v1152
      %v2640 = vpop.f32.mrb[0].mxu0
      %v2641 = vadd.f32 0.0, %v2640
      %v2642 = vpop.f32.mrb[0].mxu0
      %2643 = vmatprep.mubr.f32.mxu0 %v405
      %2644 = vmatmul.mubr.f32.gmra.mrb[0].mxu0 %v1153
      %v2645 = vpop.f32.mrb[0].mxu0
      %v2646 = vadd.f32 0.0, %v2645
      %v2647 = vpop.f32.mrb[0].mxu0
      %2648 = vmatprep.mubr.f32.mxu0 %v406
      %2649 = vmatmul.mubr.f32.gmra.mrb[0].mxu0 %v1154
      %v2650 = vpop.f32.mrb[0].mxu0
      %v2651 = vadd.f32 0.0, %v2650
      %v2652 = vpop.f32.mrb[0].mxu0
      %2653 = vmatprep.mubr.f32.mxu0 %v407
      %2654 = vmatmul.mubr.f32.gmra.mrb[0].mxu0 %v1155
      %v2655 = vpop.f32.mrb[0].mxu0
      %v2656 = vadd.f32 0.0, %v2655
      %v2657 = vpop.f32.mrb[0].mxu0
      %2658 = vmatprep.mubr.f32.mxu0 %v408
      %2659 = vmatmul.mubr.f32.gmra.mrb[0].mxu0 %v1156
      %v2660 = vpop.f32.mrb[0].mxu0
      %v2661 = vadd.f32 0.0, %v2660
      %v2662 = vpop.f32.mrb[0].mxu0
      %2663 = vmatprep.mubr.f32.mxu0 %v409
      %2664 = vmatmul.mubr.f32.gmra.mrb[0].mxu0 %v1157
      %v2665 = vpop.f32.mrb[0].mxu0
      %v2666 = vadd.f32 0.0, %v2665
      %v2667 = vpop.f32.mrb[0].mxu0
      %2668 = vmatprep.mubr.f32.mxu0 0.0
      %2669 = vmatmul.mubr.f32.gmra.mrb[0].mxu0 %v1158
      %v2670 = vpop.f32.mrb[0].mxu0
      %v2671 = vadd.f32 0.0, %v2670
      %v2672 = vpop.f32.mrb[0].mxu0
      %2673 = vmatprep.mubr.f32.mxu0 0.0
      %2674 = vmatmul.mubr.f32.gmra.mrb[0].mxu0 %v1159
      %v2675 = vpop.f32.mrb[0].mxu0
      %v2676 = vadd.f32 0.0, %v2675
      %v2677 = vpop.f32.mrb[0].mxu0
      %2678 = vdwg.mxu0
      %2679 = vmatprep.subr.mxu0 0.0
      %2680 = vmatpush1.msra.mxu0 %v2438
      %2681 = vmatprep.subr.mxu0 0.0
      %2682 = vmatpush1.msra.mxu0 %v2439
      %2683 = vmatprep.subr.mxu0 0.0
      %2684 = vmatpush1.msra.mxu0 %v2440
      %2685 = vmatprep.subr.mxu0 0.0
      %2686 = vmatpush1.msra.mxu0 %v2441
      %2687 = vmatprep.subr.mxu0 0.0
      %2688 = vmatpush1.msra.mxu0 %v2442
      %2689 = vmatprep.subr.mxu0 0.0
      %2690 = vmatpush1.msra.mxu0 %v2443
      %2691 = vmatprep.subr.mxu0 0.0
      %2692 = vmatpush1.msra.mxu0 %v2444
      %2693 = vmatprep.subr.mxu0 0.0
      %2694 = vmatpush1.msra.mxu0 %v2445
      %2695 = vmatprep.subr.mxu0 0.0
      %2696 = vmatpush1.msra.mxu0 %v2446
      %2697 = vmatprep.subr.mxu0 0.0
      %2698 = vmatpush1.msra.mxu0 %v2447
      %2699 = vmatprep.subr.mxu0 0.0
      %2700 = vmatpush1.msra.mxu0 %v2448
      %2701 = vmatprep.subr.mxu0 0.0
      %2702 = vmatpush1.msra.mxu0 %v2449
      %2703 = vmatprep.subr.mxu0 0.0
      %2704 = vmatpush1.msra.mxu0 %v2450
      %2705 = vmatprep.subr.mxu0 0.0
      %2706 = vmatpush1.msra.mxu0 %v2451
      %2707 = vmatprep.subr.mxu0 0.0
      %2708 = vmatpush1.msra.mxu0 %v2452
      %2709 = vmatprep.subr.mxu0 0.0
      %2710 = vmatpush1.msra.mxu0 %v2453
      %2711 = vmatprep.subr.mxu0 0.0
      %2712 = vmatpush1.msra.mxu0 0.0
      %2713 = vmatprep.subr.mxu0 0.0
      %2714 = vmatpush1.msra.mxu0 0.0
      %2715 = vmatprep.subr.mxu0 0.0
      %2716 = vmatpush1.msra.mxu0 0.0
      %2717 = vmatprep.subr.mxu0 0.0
      %2718 = vmatpush1.msra.mxu0 0.0
      %2719 = vmatprep.subr.mxu0 0.0
      %2720 = vmatpush1.msra.mxu0 0.0
      %2721 = vmatprep.subr.mxu0 0.0
      %2722 = vmatpush1.msra.mxu0 0.0
      %2723 = vmatprep.subr.mxu0 0.0
      %2724 = vmatpush1.msra.mxu0 0.0
      %2725 = vmatprep.subr.mxu0 0.0
      %2726 = vmatpush1.msra.mxu0 0.0
      %2727 = vmatprep.subr.mxu0 0.0
      %2728 = vmatpush1.msra.mxu0 0.0
      %2729 = vmatprep.subr.mxu0 0.0
      %2730 = vmatpush1.msra.mxu0 0.0
      %2731 = vmatprep.subr.mxu0 0.0
      %2732 = vmatpush1.msra.mxu0 0.0
      %2733 = vmatprep.subr.mxu0 0.0
      %2734 = vmatpush1.msra.mxu0 0.0
      %2735 = vmatprep.subr.mxu0 0.0
      %2736 = vmatpush1.msra.mxu0 0.0
      %2737 = vmatprep.subr.mxu0 0.0
      %2738 = vmatpush1.msra.mxu0 0.0
      %2739 = vmatprep.subr.mxu0 0.0
      %2740 = vmatpush1.msra.mxu0 0.0
      %2741 = vmatprep.subr.mxu0 0.0
      %2742 = vmatpush1.msra.mxu0 0.0
      %2743 = vmatprep.mubr.f32.mxu0 0.0
      %2744 = vmatmul.mubr.f32.gmra.mrb[0].mxu0 %v1376
      %v2745 = vpop.f32.mrb[0].mxu0
      %v2746 = vadd.f32 %v2521, %v2745
      %v2747 = vpop.f32.mrb[0].mxu0
      %2748 = vmatprep.mubr.f32.mxu0 0.0
      %2749 = vmatmul.mubr.f32.gmra.mrb[0].mxu0 %v1377
      %v2750 = vpop.f32.mrb[0].mxu0
      %v2751 = vadd.f32 %v2526, %v2750
      %v2752 = vpop.f32.mrb[0].mxu0
      %2753 = vmatprep.mubr.f32.mxu0 0.0
      %2754 = vmatmul.mubr.f32.gmra.mrb[0].mxu0 %v1378
      %v2755 = vpop.f32.mrb[0].mxu0
      %v2756 = vadd.f32 %v2531, %v2755
      %v2757 = vpop.f32.mrb[0].mxu0
      %2758 = vmatprep.mubr.f32.mxu0 0.0
      %2759 = vmatmul.mubr.f32.gmra.mrb[0].mxu0 %v1379
      %v2760 = vpop.f32.mrb[0].mxu0
      %v2761 = vadd.f32 %v2536, %v2760
      %v2762 = vpop.f32.mrb[0].mxu0
      %2763 = vmatprep.mubr.f32.mxu0 0.0
      %2764 = vmatmul.mubr.f32.gmra.mrb[0].mxu0 %v1380
      %v2765 = vpop.f32.mrb[0].mxu0
      %v2766 = vadd.f32 %v2541, %v2765
      %v2767 = vpop.f32.mrb[0].mxu0
      %2768 = vmatprep.mubr.f32.mxu0 0.0
      %2769 = vmatmul.mubr.f32.gmra.mrb[0].mxu0 %v1381
      %v2770 = vpop.f32.mrb[0].mxu0
      %v2771 = vadd.f32 %v2546, %v2770
      %v2772 = vpop.f32.mrb[0].mxu0
      %2773 = vmatprep.mubr.f32.mxu0 0.0
      %2774 = vmatmul.mubr.f32.gmra.mrb[0].mxu0 %v1382
      %v2775 = vpop.f32.mrb[0].mxu0
      %v2776 = vadd.f32 %v2551, %v2775
      %v2777 = vpop.f32.mrb[0].mxu0
      %2778 = vmatprep.mubr.f32.mxu0 0.0
      %2779 = vmatmul.mubr.f32.gmra.mrb[0].mxu0 %v1383
      %v2780 = vpop.f32.mrb[0].mxu0
      %v2781 = vadd.f32 %v2556, %v2780
      %v2782 = vpop.f32.mrb[0].mxu0
      %2783 = vmatprep.mubr.f32.mxu0 0.0
      %2784 = vmatmul.mubr.f32.gmra.mrb[0].mxu0 %v1384
      %v2785 = vpop.f32.mrb[0].mxu0
      %v2786 = vadd.f32 %v2561, %v2785
      %v2787 = vpop.f32.mrb[0].mxu0
      %2788 = vmatprep.mubr.f32.mxu0 0.0
      %2789 = vmatmul.mubr.f32.gmra.mrb[0].mxu0 %v1385
      %v2790 = vpop.f32.mrb[0].mxu0
      %v2791 = vadd.f32 %v2566, %v2790
      %v2792 = vpop.f32.mrb[0].mxu0
      %2793 = vmatprep.mubr.f32.mxu0 0.0
      %2794 = vmatmul.mubr.f32.gmra.mrb[0].mxu0 %v1386
      %v2795 = vpop.f32.mrb[0].mxu0
      %v2796 = vadd.f32 %v2571, %v2795
      %v2797 = vpop.f32.mrb[0].mxu0
      %2798 = vmatprep.mubr.f32.mxu0 0.0
      %2799 = vmatmul.mubr.f32.gmra.mrb[0].mxu0 %v1387
      %v2800 = vpop.f32.mrb[0].mxu0
      %v2801 = vadd.f32 %v2576, %v2800
      %v2802 = vpop.f32.mrb[0].mxu0
      %2803 = vmatprep.mubr.f32.mxu0 0.0
      %2804 = vmatmul.mubr.f32.gmra.mrb[0].mxu0 %v1388
      %v2805 = vpop.f32.mrb[0].mxu0
      %v2806 = vadd.f32 %v2581, %v2805
      %v2807 = vpop.f32.mrb[0].mxu0
      %2808 = vmatprep.mubr.f32.mxu0 0.0
      %2809 = vmatmul.mubr.f32.gmra.mrb[0].mxu0 %v1389
      %v2810 = vpop.f32.mrb[0].mxu0
      %v2811 = vadd.f32 %v2586, %v2810
      %v2812 = vpop.f32.mrb[0].mxu0
      %2813 = vmatprep.mubr.f32.mxu0 0.0
      %2814 = vmatmul.mubr.f32.gmra.mrb[0].mxu0 %v1390
      %v2815 = vpop.f32.mrb[0].mxu0
      %v2816 = vadd.f32 %v2591, %v2815
      %v2817 = vpop.f32.mrb[0].mxu0
      %2818 = vmatprep.mubr.f32.mxu0 0.0
      %2819 = vmatmul.mubr.f32.gmra.mrb[0].mxu0 %v1391
      %v2820 = vpop.f32.mrb[0].mxu0
      %v2821 = vadd.f32 %v2596, %v2820
      %v2822 = vpop.f32.mrb[0].mxu0
      %2823 = vmatprep.mubr.f32.mxu0 0.0
      %2824 = vmatmul.mubr.f32.gmra.mrb[0].mxu0 %v1392
      %v2825 = vpop.f32.mrb[0].mxu0
      %v2826 = vadd.f32 %v2601, %v2825
      %v2827 = vpop.f32.mrb[0].mxu0
      %2828 = vmatprep.mubr.f32.mxu0 0.0
      %2829 = vmatmul.mubr.f32.gmra.mrb[0].mxu0 %v1393
      %v2830 = vpop.f32.mrb[0].mxu0
      %v2831 = vadd.f32 %v2606, %v2830
      %v2832 = vpop.f32.mrb[0].mxu0
      %2833 = vmatprep.mubr.f32.mxu0 0.0
      %2834 = vmatmul.mubr.f32.gmra.mrb[0].mxu0 %v1394
      %v2835 = vpop.f32.mrb[0].mxu0
      %v2836 = vadd.f32 %v2611, %v2835
      %v2837 = vpop.f32.mrb[0].mxu0
      %2838 = vmatprep.mubr.f32.mxu0 0.0
      %2839 = vmatmul.mubr.f32.gmra.mrb[0].mxu0 %v1395
      %v2840 = vpop.f32.mrb[0].mxu0
      %v2841 = vadd.f32 %v2616, %v2840
      %v2842 = vpop.f32.mrb[0].mxu0
      %2843 = vmatprep.mubr.f32.mxu0 0.0
      %2844 = vmatmul.mubr.f32.gmra.mrb[0].mxu0 %v1396
      %v2845 = vpop.f32.mrb[0].mxu0
      %v2846 = vadd.f32 %v2621, %v2845
      %v2847 = vpop.f32.mrb[0].mxu0
      %2848 = vmatprep.mubr.f32.mxu0 0.0
      %2849 = vmatmul.mubr.f32.gmra.mrb[0].mxu0 %v1397
      %v2850 = vpop.f32.mrb[0].mxu0
      %v2851 = vadd.f32 %v2626, %v2850
      %v2852 = vpop.f32.mrb[0].mxu0
      %2853 = vmatprep.mubr.f32.mxu0 0.0
      %2854 = vmatmul.mubr.f32.gmra.mrb[0].mxu0 %v1398
      %v2855 = vpop.f32.mrb[0].mxu0
      %v2856 = vadd.f32 %v2631, %v2855
      %v2857 = vpop.f32.mrb[0].mxu0
      %2858 = vmatprep.mubr.f32.mxu0 0.0
      %2859 = vmatmul.mubr.f32.gmra.mrb[0].mxu0 %v1399
      %v2860 = vpop.f32.mrb[0].mxu0
      %v2861 = vadd.f32 %v2636, %v2860
      %v2862 = vpop.f32.mrb[0].mxu0
      %2863 = vmatprep.mubr.f32.mxu0 0.0
      %2864 = vmatmul.mubr.f32.gmra.mrb[0].mxu0 %v1400
      %v2865 = vpop.f32.mrb[0].mxu0
      %v2866 = vadd.f32 %v2641, %v2865
      %v2867 = vpop.f32.mrb[0].mxu0
      %2868 = vmatprep.mubr.f32.mxu0 0.0
      %2869 = vmatmul.mubr.f32.gmra.mrb[0].mxu0 %v1401
      %v2870 = vpop.f32.mrb[0].mxu0
      %v2871 = vadd.f32 %v2646, %v2870
      %v2872 = vpop.f32.mrb[0].mxu0
      %2873 = vmatprep.mubr.f32.mxu0 0.0
      %2874 = vmatmul.mubr.f32.gmra.mrb[0].mxu0 %v1402
      %v2875 = vpop.f32.mrb[0].mxu0
      %v2876 = vadd.f32 %v2651, %v2875
      %v2877 = vpop.f32.mrb[0].mxu0
      %2878 = vmatprep.mubr.f32.mxu0 0.0
      %2879 = vmatmul.mubr.f32.gmra.mrb[0].mxu0 %v1403
      %v2880 = vpop.f32.mrb[0].mxu0
      %v2881 = vadd.f32 %v2656, %v2880
      %v2882 = vpop.f32.mrb[0].mxu0
      %2883 = vmatprep.mubr.f32.mxu0 0.0
      %2884 = vmatmul.mubr.f32.gmra.mrb[0].mxu0 %v1404
      %v2885 = vpop.f32.mrb[0].mxu0
      %v2886 = vadd.f32 %v2661, %v2885
      %v2887 = vpop.f32.mrb[0].mxu0
      %2888 = vmatprep.mubr.f32.mxu0 0.0
      %2889 = vmatmul.mubr.f32.gmra.mrb[0].mxu0 %v1405
      %v2890 = vpop.f32.mrb[0].mxu0
      %v2891 = vadd.f32 %v2666, %v2890
      %v2892 = vpop.f32.mrb[0].mxu0
      %2893 = vmatprep.mubr.f32.mxu0 0.0
      %2894 = vmatmul.mubr.f32.gmra.mrb[0].mxu0 %v1406
      %v2895 = vpop.f32.mrb[0].mxu0
      %v2896 = vadd.f32 %v2671, %v2895
      %v2897 = vpop.f32.mrb[0].mxu0
      %2898 = vmatprep.mubr.f32.mxu0 0.0
      %2899 = vmatmul.mubr.f32.gmra.mrb[0].mxu0 %v1407
      %v2900 = vpop.f32.mrb[0].mxu0
      %v2901 = vadd.f32 %v2676, %v2900
      %v2902 = vpop.f32.mrb[0].mxu0
      %2903 = vdwg.mxu0
      %v2904 = vadd.f32 %v2247, %v2746
      %v2905 = vadd.f32 %v2252, %v2751
      %v2906 = vadd.f32 %v2257, %v2756
      %v2907 = vadd.f32 %v2262, %v2761
      %v2908 = vadd.f32 %v2267, %v2766
      %v2909 = vadd.f32 %v2272, %v2771
      %v2910 = vadd.f32 %v2277, %v2776
      %v2911 = vadd.f32 %v2282, %v2781
      %v2912 = vadd.f32 %v2287, %v2786
      %v2913 = vadd.f32 %v2292, %v2791
      %v2914 = vadd.f32 %v2297, %v2796
      %v2915 = vadd.f32 %v2302, %v2801
      %v2916 = vadd.f32 %v2307, %v2806
      %v2917 = vadd.f32 %v2312, %v2811
      %v2918 = vadd.f32 %v2317, %v2816
      %v2919 = vadd.f32 %v2322, %v2821
      %v2920 = vadd.f32 %v2327, %v2826
      %v2921 = vadd.f32 %v2332, %v2831
      %v2922 = vadd.f32 %v2337, %v2836
      %v2923 = vadd.f32 %v2342, %v2841
      %v2924 = vadd.f32 %v2347, %v2846
      %v2925 = vadd.f32 %v2352, %v2851
      %v2926 = vadd.f32 %v2357, %v2856
      %v2927 = vadd.f32 %v2362, %v2861
      %v2928 = vadd.f32 %v2367, %v2866
      %v2929 = vadd.f32 %v2372, %v2871
      %v2930 = vadd.f32 %v2377, %v2876
      %v2931 = vadd.f32 %v2382, %v2881
      %v2932 = vadd.f32 %v2387, %v2886
      %v2933 = vadd.f32 %v2392, %v2891
      %v2934 = vadd.f32 %v2397, %v2896
      %v2935 = vadd.f32 %v2402, %v2901
      %v2936 = vmax.f32 %v2904, 0.0
      %v2937 = vmax.f32 %v2905, 0.0
      %v2938 = vmax.f32 %v2906, 0.0
      %v2939 = vmax.f32 %v2907, 0.0
      %v2940 = vmax.f32 %v2908, 0.0
      %v2941 = vmax.f32 %v2909, 0.0
      %v2942 = vmax.f32 %v2910, 0.0
      %v2943 = vmax.f32 %v2911, 0.0
      %v2944 = vmax.f32 %v2912, 0.0
      %v2945 = vmax.f32 %v2913, 0.0
      %v2946 = vmax.f32 %v2914, 0.0
      %v2947 = vmax.f32 %v2915, 0.0
      %v2948 = vmax.f32 %v2916, 0.0
      %v2949 = vmax.f32 %v2917, 0.0
      %v2950 = vmax.f32 %v2918, 0.0
      %v2951 = vmax.f32 %v2919, 0.0
      %v2952 = vmax.f32 %v2920, 0.0
      %v2953 = vmax.f32 %v2921, 0.0
      %v2954 = vmax.f32 %v2922, 0.0
      %v2955 = vmax.f32 %v2923, 0.0
      %v2956 = vmax.f32 %v2924, 0.0
      %v2957 = vmax.f32 %v2925, 0.0
      %v2958 = vmax.f32 %v2926, 0.0
      %v2959 = vmax.f32 %v2927, 0.0
      %v2960 = vmax.f32 %v2928, 0.0
      %v2961 = vmax.f32 %v2929, 0.0
      %v2962 = vmax.f32 %v2930, 0.0
      %v2963 = vmax.f32 %v2931, 0.0
      %v2964 = vmax.f32 %v2932, 0.0
      %v2965 = vmax.f32 %v2933, 0.0
      %v2966 = vmax.f32 %v2934, 0.0
      %v2967 = vmax.f32 %v2935, 0.0
      %v2968 = vadd.f32 %v2936, %v2937
      %v2969 = vadd.f32 %v2968, %v2938
      %v2970 = vadd.f32 %v2969, %v2939
      %v2971 = vadd.f32 %v2970, %v2940
      %v2972 = vadd.f32 %v2971, %v2941
      %v2973 = vadd.f32 %v2972, %v2942
      %v2974 = vadd.f32 %v2973, %v2943
      %v2975 = vadd.f32 %v2974, %v2944
      %v2976 = vadd.f32 %v2975, %v2945
      %v2977 = vadd.f32 %v2976, %v2946
      %v2978 = vadd.f32 %v2977, %v2947
      %v2979 = vadd.f32 %v2978, %v2948
      %v2980 = vadd.f32 %v2979, %v2949
      %v2981 = vadd.f32 %v2980, %v2950
      %v2982 = vadd.f32 %v2981, %v2951
      %v2983 = vadd.f32 %v2982, %v2952
      %v2984 = vadd.f32 %v2983, %v2953
      %v2985 = vadd.f32 %v2984, %v2954
      %v2986 = vadd.f32 %v2985, %v2955
      %v2987 = vadd.f32 %v2986, %v2956
      %v2988 = vadd.f32 %v2987, %v2957
      %v2989 = vadd.f32 %v2988, %v2958
      %v2990 = vadd.f32 %v2989, %v2959
      %v2991 = vadd.f32 %v2990, %v2960
      %v2992 = vadd.f32 %v2991, %v2961
      %v2993 = vadd.f32 %v2992, %v2962
      %v2994 = vadd.f32 %v2993, %v2963
      %v2995 = vadd.f32 %v2994, %v2964
      %v2996 = vadd.f32 %v2995, %v2965
      %v2997 = vadd.f32 %v2996, %v2966
      %v2998 = vadd.f32 %v2997, %v2967
      %v2999 = vrot.slane %v2998, 4
      %v3000 = vadd.f32 %v2998, %v2999
      %v3001 = vrot.slane %v3000, 2
      %v3002 = vadd.f32 %v3000, %v3001
      %v3003 = vrot.slane %v3002, 1
      %v3004 = vadd.f32 %v3002, %v3003
      %vm3005 = vcmask 188416
      %3006 = vst.msk [vmem:[%s235] sm:$0x1] %vm3005, %v3004
      %v3007 = vmul.f32 %v2936, %v2936
      %v3008 = vmul.f32 %v2937, %v2937
      %v3009 = vmul.f32 %v2938, %v2938
      %v3010 = vmul.f32 %v2939, %v2939
      %v3011 = vmul.f32 %v2940, %v2940
      %v3012 = vmul.f32 %v2941, %v2941
      %v3013 = vmul.f32 %v2942, %v2942
      %v3014 = vmul.f32 %v2943, %v2943
      %v3015 = vmul.f32 %v2944, %v2944
      %v3016 = vmul.f32 %v2945, %v2945
      %v3017 = vmul.f32 %v2946, %v2946
      %v3018 = vmul.f32 %v2947, %v2947
      %v3019 = vmul.f32 %v2948, %v2948
      %v3020 = vmul.f32 %v2949, %v2949
      %v3021 = vmul.f32 %v2950, %v2950
      %v3022 = vmul.f32 %v2951, %v2951
      %v3023 = vmul.f32 %v2952, %v2952
      %v3024 = vmul.f32 %v2953, %v2953
      %v3025 = vmul.f32 %v2954, %v2954
      %v3026 = vmul.f32 %v2955, %v2955
      %v3027 = vmul.f32 %v2956, %v2956
      %v3028 = vmul.f32 %v2957, %v2957
      %v3029 = vmul.f32 %v2958, %v2958
      %v3030 = vmul.f32 %v2959, %v2959
      %v3031 = vmul.f32 %v2960, %v2960
      %v3032 = vmul.f32 %v2961, %v2961
      %v3033 = vmul.f32 %v2962, %v2962
      %v3034 = vmul.f32 %v2963, %v2963
      %v3035 = vmul.f32 %v2964, %v2964
      %v3036 = vmul.f32 %v2965, %v2965
      %v3037 = vmul.f32 %v2966, %v2966
      %v3038 = vmul.f32 %v2967, %v2967
      %v3039 = vadd.f32 %v3007, %v3008
      %v3040 = vadd.f32 %v3039, %v3009
      %v3041 = vadd.f32 %v3040, %v3010
      %v3042 = vadd.f32 %v3041, %v3011
      %v3043 = vadd.f32 %v3042, %v3012
      %v3044 = vadd.f32 %v3043, %v3013
      %v3045 = vadd.f32 %v3044, %v3014
      %v3046 = vadd.f32 %v3045, %v3015
      %v3047 = vadd.f32 %v3046, %v3016
      %v3048 = vadd.f32 %v3047, %v3017
      %v3049 = vadd.f32 %v3048, %v3018
      %v3050 = vadd.f32 %v3049, %v3019
      %v3051 = vadd.f32 %v3050, %v3020
      %v3052 = vadd.f32 %v3051, %v3021
      %v3053 = vadd.f32 %v3052, %v3022
      %v3054 = vadd.f32 %v3053, %v3023
      %v3055 = vadd.f32 %v3054, %v3024
      %v3056 = vadd.f32 %v3055, %v3025
      %v3057 = vadd.f32 %v3056, %v3026
      %v3058 = vadd.f32 %v3057, %v3027
      %v3059 = vadd.f32 %v3058, %v3028
      %v3060 = vadd.f32 %v3059, %v3029
      %v3061 = vadd.f32 %v3060, %v3030
      %v3062 = vadd.f32 %v3061, %v3031
      %v3063 = vadd.f32 %v3062, %v3032
      %v3064 = vadd.f32 %v3063, %v3033
      %v3065 = vadd.f32 %v3064, %v3034
      %v3066 = vadd.f32 %v3065, %v3035
      %v3067 = vadd.f32 %v3066, %v3036
      %v3068 = vadd.f32 %v3067, %v3037
      %v3069 = vadd.f32 %v3068, %v3038
      %v3070 = vrot.slane %v3069, 4
      %v3071 = vadd.f32 %v3069, %v3070
      %v3072 = vrot.slane %v3071, 2
      %v3073 = vadd.f32 %v3071, %v3072
      %v3074 = vrot.slane %v3073, 1
      %v3075 = vadd.f32 %v3073, %v3074
      %3076 = vst.msk [vmem:[%s235 + $0x1] sm:$0x1] %vm3005, %v3075
      %3077 = vxpose.xlu0.b32.start [1/16] %v2936, 128
      %3078 = vxpose.xlu0.b32.cont [2/16] %v2937, 128
      %3079 = vxpose.xlu0.b32.cont [3/16] %v2938, 128
      %3080 = vxpose.xlu0.b32.cont [4/16] %v2939, 128
      %3081 = vxpose.xlu0.b32.cont [5/16] %v2940, 128
      %3082 = vxpose.xlu0.b32.cont [6/16] %v2941, 128
      %3083 = vxpose.xlu0.b32.cont [7/16] %v2942, 128
      %3084 = vxpose.xlu0.b32.cont [8/16] %v2943, 128
      %3085 = vxpose.xlu0.b32.cont [9/16] %v2944, 128
      %3086 = vxpose.xlu0.b32.cont [10/16] %v2945, 128
      %3087 = vxpose.xlu0.b32.cont [11/16] %v2946, 128
      %3088 = vxpose.xlu0.b32.cont [12/16] %v2947, 128
      %3089 = vxpose.xlu0.b32.cont [13/16] %v2948, 128
      %3090 = vxpose.xlu0.b32.cont [14/16] %v2949, 128
      %3091 = vxpose.xlu0.b32.cont [15/16] %v2950, 128
      %3092 = vxpose.xlu0.b32.end [16/16] %v2951, 128
      %v3093 = vpop.trf.xlu0
      %v3094 = vpop.trf.xlu0
      %v3095 = vpop.trf.xlu0
      %v3096 = vpop.trf.xlu0
      %v3097 = vpop.trf.xlu0
      %v3098 = vpop.trf.xlu0
      %v3099 = vpop.trf.xlu0
      %v3100 = vpop.trf.xlu0
      %v3101 = vpop.trf.xlu0
      %v3102 = vpop.trf.xlu0
      %v3103 = vpop.trf.xlu0
      %v3104 = vpop.trf.xlu0
      %v3105 = vpop.trf.xlu0
      %v3106 = vpop.trf.xlu0
      %v3107 = vpop.trf.xlu0
      %v3108 = vpop.trf.xlu0
      %3109 = vxpose.xlu0.b32.start [1/16] %v2952, 128
      %3110 = vxpose.xlu0.b32.cont [2/16] %v2953, 128
      %3111 = vxpose.xlu0.b32.cont [3/16] %v2954, 128
      %3112 = vxpose.xlu0.b32.cont [4/16] %v2955, 128
      %3113 = vxpose.xlu0.b32.cont [5/16] %v2956, 128
      %3114 = vxpose.xlu0.b32.cont [6/16] %v2957, 128
      %3115 = vxpose.xlu0.b32.cont [7/16] %v2958, 128
      %3116 = vxpose.xlu0.b32.cont [8/16] %v2959, 128
      %3117 = vxpose.xlu0.b32.cont [9/16] %v2960, 128
      %3118 = vxpose.xlu0.b32.cont [10/16] %v2961, 128
      %3119 = vxpose.xlu0.b32.cont [11/16] %v2962, 128
      %3120 = vxpose.xlu0.b32.cont [12/16] %v2963, 128
      %3121 = vxpose.xlu0.b32.cont [13/16] %v2964, 128
      %3122 = vxpose.xlu0.b32.cont [14/16] %v2965, 128
      %3123 = vxpose.xlu0.b32.cont [15/16] %v2966, 128
      %3124 = vxpose.xlu0.b32.end [16/16] %v2967, 128
      %v3125 = vpop.trf.xlu0
      %v3126 = vpop.trf.xlu0
      %v3127 = vpop.trf.xlu0
      %v3128 = vpop.trf.xlu0
      %v3129 = vpop.trf.xlu0
      %v3130 = vpop.trf.xlu0
      %v3131 = vpop.trf.xlu0
      %v3132 = vpop.trf.xlu0
      %v3133 = vpop.trf.xlu0
      %v3134 = vpop.trf.xlu0
      %v3135 = vpop.trf.xlu0
      %v3136 = vpop.trf.xlu0
      %v3137 = vpop.trf.xlu0
      %v3138 = vpop.trf.xlu0
      %v3139 = vpop.trf.xlu0
      %v3140 = vpop.trf.xlu0
      %3141 = vst [vmem:[%s231] sm:$0xff] %v3093
      %3142 = vst [vmem:[%s231 + $0x8] sm:$0xff] %v3125
      %3143 = vst [vmem:[%s231 + $0x10] sm:$0xff] %v3094
      %3144 = vst [vmem:[%s231 + $0x18] sm:$0xff] %v3126
      %3145 = vst [vmem:[%s231 + $0x20] sm:$0xff] %v3095
      %3146 = vst [vmem:[%s231 + $0x28] sm:$0xff] %v3127
      %p3147 = scmp.lt.s32.totalorder %s17, 1
      %s3148 = scalar_select %p3147, %s17, 1
      %s3149 = smul.addr %s3148, 6
      %s3150 = smul.addr %s3149, 8
      %s3151 = scalar_lea.vmem %s4, %s3150
      %p3152 = scmp.lt.s32.totalorder %s17, 1
      %s3153 = scalar_select %p3152, %s17, 1
      %s3154 = smul.addr %s3153, 2
      %s3155 = scalar_lea.vmem %s5, %s3154
      // Predicated region
      $region37: #{bottleneck_block.4} parent=35 // pred_check
        %p3156 = pneg %p124
      $region38: #{bottleneck_block.4} parent=35 // pred_check_branch
        %3158 = sbr.rel (%p3156) target = $region40
      $region39: #{bottleneck_block.4} parent=35 // pred_region
        _
      $region40: #{bottleneck_block.4} parent=35 // pred_fallthru
        _
      // Predicated region
      $region41: #{bottleneck_block.4} parent=35 // pred_check
        %p3159 = pneg %p150
      $region42: #{bottleneck_block.4} parent=35 // pred_check_branch
        %3161 = sbr.rel (%p3159) target = $region44
      $region43: #{bottleneck_block.4} parent=35 // pred_region
        _
      $region44: #{bottleneck_block.4} parent=35 // pred_fallthru
        _
    $region36: #{bottleneck_block.4} parent=5 // pred_fallthru
      _
    %p3162 = scmp.le.s32.totalorder 2, %s12
    // Predicated region
    $region45: #{bottleneck_block.4} parent=5 // pred_check
      %p3163 = pneg %p3162
    $region46: #{bottleneck_block.4} parent=5 // pred_check_branch
      %3165 = sbr.rel (%p3163) target = $region48
    $region47: #{bottleneck_block.4} parent=5 // pred_region
      %s3166 = ssub.s32 %s12, 2
      // Predicated region
      $region49: #{bottleneck_block.4} parent=47 // pred_check
        %p3167 = pneg %p130
      $region50: #{bottleneck_block.4} parent=47 // pred_check_branch
        %3169 = sbr.rel (%p3167) target = $region52
      $region51: #{bottleneck_block.4} parent=47 // pred_region
        %p3170 = scmp.lt.s32.totalorder %s18, 1
        %s3171 = scalar_select %p3170, %s18, 1
        %s3172 = smul.addr %s3171, 6
        %s3173 = smul.addr %s3172, 8
        %s3174 = scalar_lea.vmem %s4, %s3173
      $region52: #{bottleneck_block.4} parent=47 // pred_fallthru
        _
      // Predicated region
      $region53: #{bottleneck_block.4} parent=47 // pred_check
        %p3175 = pneg %p156
      $region54: #{bottleneck_block.4} parent=47 // pred_check_branch
        %3177 = sbr.rel (%p3175) target = $region56
      $region55: #{bottleneck_block.4} parent=47 // pred_region
        %p3178 = scmp.lt.s32.totalorder %s18, 1
        %s3179 = scalar_select %p3178, %s18, 1
        %s3180 = smul.addr %s3179, 2
        %s3181 = scalar_lea.vmem %s5, %s3180
      $region56: #{bottleneck_block.4} parent=47 // pred_fallthru
        _
    $region48: #{bottleneck_block.4} parent=5 // pred_fallthru
      _
  $region6: #{bottleneck_block.4} parent=0 // loop_footer
    %s16 = sadd.s32 1, %s12
  $region7: #{bottleneck_block.4} parent=0 // loop_footer_branch
    %11 = sbr.rel target = $region3
  $region8: #{bottleneck_block.4} parent=0 // loop_exit
    _

</llo_original>
